<compile_context>
chip_gen: v7x
topology: tpu7x:2x2x1
jax: 0.10.0
libtpu: 0.0.40
codegen_flags: <defaults>
</compile_context>

<pallas_src>
import functools

import jax
import jax.numpy as jnp
from jax import lax
from jax.experimental import pallas as pl
from jax.experimental.pallas import tpu as pltpu


def _round_up(x, m):
    return (x + m - 1) // m * m


# ---------------------------------------------------------------------------
# Fused encoder kernel: grid=(num_layers,), weights + activations resident in VMEM
# ---------------------------------------------------------------------------

def _encoder_kernel(src_ref, pos_ref, bias_ref,
                    wqk_ref, bqk_ref, wv_ref, bv_ref, wo_ref, bo_ref,
                    g1_ref, be1_ref, w1_ref, b1_ref, w2_ref, b2_ref, g2_ref, be2_ref,
                    cw_ref, cwd_ref, cb_ref, gf_ref, bef_ref,
                    o_ref, x_state, attn_scr,
                    *, n_heads, d_head, d_head_pad, d_model, with_cdp, final_norm):
    pid = pl.program_id(0)
    n_layers = pl.num_programs(0)
    e_pad = x_state.shape[1]
    hdp = n_heads * d_head_pad
    ln_eps = 1e-5

    # Layer 0 consumes src; later layers consume the VMEM-resident running state.
    @pl.when(pid == 0)
    def _():
        x_state[...] = src_ref[...]

    x = x_state[...]                 # (BS, Ep), padded lanes are always zero
    prev = x                         # CDP "fea_pred" = this layer's input
    pos = pos_ref[...]

    # lane-validity mask over the real d_model channels (pads are zero-valued anyway)
    lane_ids = lax.broadcasted_iota(jnp.int32, (1, e_pad), 1)
    lane_mask = (lane_ids < d_model).astype(jnp.float32)
    inv_e = 1.0 / float(d_model)

    def masked_layernorm(t, gamma, beta):
        mean = jnp.sum(t, axis=-1, keepdims=True) * inv_e        # pads are zero
        cen = (t - mean) * lane_mask
        var = jnp.sum(cen * cen, axis=-1, keepdims=True) * inv_e
        return cen * lax.rsqrt(var + ln_eps) * gamma + beta

    # ---- multi-head self-attention (q/k carry pos embedding, v does not) ----
    qk_in = (x + pos).astype(jnp.bfloat16)
    qk = jnp.dot(qk_in, wqk_ref[...], preferred_element_type=jnp.float32) + bqk_ref[...]
    q = qk[:, :hdp]
    k = qk[:, hdp:]
    v = jnp.dot(x.astype(jnp.bfloat16), wv_ref[...],
                preferred_element_type=jnp.float32) + bv_ref[...]

    scale = 1.0 / float(d_head) ** 0.5
    attn_bias = bias_ref[...]        # (BS, BS): 0 same-batch, -1e30 cross-batch

    for h in range(n_heads):         # unrolled; all inside one kernel (no per-head grid)
        c0 = h * d_head_pad
        qh = q[:, c0:c0 + d_head_pad].astype(jnp.bfloat16)
        kh = k[:, c0:c0 + d_head_pad].astype(jnp.bfloat16)
        vh = v[:, c0:c0 + d_head_pad].astype(jnp.bfloat16)
        s = lax.dot_general(qh, kh, (((1,), (1,)), ((), ())),
                            preferred_element_type=jnp.float32)   # q @ k^T, no transpose op
        s = s * scale + attn_bias
        s = s - jnp.max(s, axis=-1, keepdims=True)
        p = jnp.exp(s)
        p = p * pl.reciprocal(jnp.sum(p, axis=-1, keepdims=True), approx=True)
        attn_scr[:, c0:c0 + d_head_pad] = jnp.dot(
            p.astype(jnp.bfloat16), vh, preferred_element_type=jnp.float32)

    attn = jnp.dot(attn_scr[...].astype(jnp.bfloat16), wo_ref[...],
                   preferred_element_type=jnp.float32) + bo_ref[...]

    x = masked_layernorm(x + attn, g1_ref[...], be1_ref[...])

    # ---- feed-forward (ReLU) ----
    h1 = jnp.dot(x.astype(jnp.bfloat16), w1_ref[...],
                 preferred_element_type=jnp.float32) + b1_ref[...]
    h1 = jnp.maximum(h1, 0.0)
    h2 = jnp.dot(h1.astype(jnp.bfloat16), w2_ref[...],
                 preferred_element_type=jnp.float32) + b2_ref[...]
    x = masked_layernorm(x + h2, g2_ref[...], be2_ref[...])

    # ---- CDP cosine-distance gating ----
    if with_cdp:
        nrm_eps2 = 1e-24             # F.normalize eps (1e-12), squared
        pn = prev * lax.rsqrt(jnp.maximum(jnp.sum(prev * prev, -1, keepdims=True), nrm_eps2))
        xn = x * lax.rsqrt(jnp.maximum(jnp.sum(x * x, -1, keepdims=True), nrm_eps2))
        dis = 1.0 - jnp.sum(pn * xn, axis=-1, keepdims=True)       # (BS, 1) cosine distance
        z = (jnp.dot(x.astype(jnp.bfloat16), cw_ref[...],
                     preferred_element_type=jnp.float32)
             + dis * cwd_ref[...] + cb_ref[...])                   # == cat([x, dis]) @ W + b
        gate = 1.0 / (1.0 + jnp.exp(-z))
        x = x * gate + x

    x_state[...] = x                 # running state for the next layer

    @pl.when(pid == n_layers - 1)
    def _():
        y = masked_layernorm(x, gf_ref[...], bef_ref[...]) if final_norm else x
        o_ref[...] = y.astype(o_ref.dtype)


# ---------------------------------------------------------------------------
# Wrapper (jitted): pads inputs once, builds specs, one pallas_call per forward
# ---------------------------------------------------------------------------

@functools.partial(jax.jit, static_argnames=("nhead", "num_layers", "with_cdp", "final_norm"))
def transformer_encoder_forward(src, pos, params, *, nhead, num_layers,
                                with_cdp=True, final_norm=True):
    """src / pos: (S, B, E), seq-first like nn.Transformer."""
    # TODO(synk): attn_mask / src_key_padding_mask not supported (None path only).
    S, B, E = src.shape
    if pos is None:
        pos = jnp.zeros_like(src)
    e_pad = params["w_v"].shape[0]
    hdp = params["w_v"].shape[1]
    d_head_pad = hdp // nhead
    d_head = E // nhead
    bs = S * B

    def pad_rows(t):
        return jnp.zeros((bs, e_pad), jnp.float32).at[:, :E].set(
            t.reshape(bs, E).astype(jnp.float32))

    src_p, pos_p = pad_rows(src), pad_rows(pos)

    # block-diagonal "same batch" additive mask for rows flattened as (seq, batch)
    bids = jnp.arange(bs, dtype=jnp.int32) % B
    attn_bias = jnp.where(bids[:, None] == bids[None, :], 0.0, -1e30).astype(jnp.float32)

    order = ("w_qk", "b_qk", "w_v", "b_v", "w_o", "b_o",
             "norm1_g", "norm1_b", "w1", "b1", "w2", "b2", "norm2_g", "norm2_b",
             "cdp_w", "cdp_wd", "cdp_b", "normf_g", "normf_b")
    weights = [params[k] for k in order]

    def full_spec(arr):
        zeros = (0,) * arr.ndim
        return pl.BlockSpec(arr.shape, lambda l, _z=zeros: _z)   # resident: index never changes

    kern = functools.partial(
        _encoder_kernel, n_heads=nhead, d_head=d_head, d_head_pad=d_head_pad,
        d_model=E, with_cdp=with_cdp, final_norm=final_norm)

    out = pl.pallas_call(
        kern,
        out_shape=jax.ShapeDtypeStruct((bs, e_pad), jnp.float32),
        grid=(num_layers,),
        in_specs=[full_spec(src_p), full_spec(pos_p), full_spec(attn_bias)]
                 + [full_spec(w) for w in weights],
        out_specs=pl.BlockSpec((bs, e_pad), lambda l: (0, 0)),
        scratch_shapes=[pltpu.VMEM((bs, e_pad), jnp.float32),   # running activation
                        pltpu.VMEM((bs, hdp), jnp.float32)],    # per-head attention output
        compiler_params=pltpu.CompilerParams(dimension_semantics=("arbitrary",)),
    )(src_p, pos_p, attn_bias, *weights)

    return out[:, :E].reshape(S, B, E)


# ---------------------------------------------------------------------------
# Parameters: raw (PyTorch-like) construction + one-time packing / padding
# ---------------------------------------------------------------------------

def make_params(key, d_model, nhead, dim_ff):
    """Raw parameters.  _get_clones deepcopies the layer, so all layers share this init."""
    ks = jax.random.split(key, 24)
    s = 0.02
    E = d_model

    def w(k, din, dout):
        return jax.random.normal(k, (din, dout), jnp.float32) * s

    def b(k, n):
        return jax.random.normal(k, (n,), jnp.float32) * s

    def g(k, n):
        return 1.0 + jax.random.normal(k, (n,), jnp.float32) * s

    layer = {
        "attn": {
            "wq": w(ks[0], E, E), "bq": b(ks[1], E),
            "wk": w(ks[2], E, E), "bk": b(ks[3], E),
            "wv": w(ks[4], E, E), "bv": b(ks[5], E),
            "wo": w(ks[6], E, E), "bo": b(ks[7], E),
        },
        "norm1_g": g(ks[8], E), "norm1_b": b(ks[9], E),
        "w1": w(ks[10], E, dim_ff), "b1": b(ks[11], dim_ff),
        "w2": w(ks[12], dim_ff, E), "b2": b(ks[13], E),
        "norm2_g": g(ks[14], E), "norm2_b": b(ks[15], E),
    }
    return {
        "layer": layer,
        "cdp_w": w(ks[16], E + 1, E), "cdp_b": b(ks[17], E),
        "norm_g": g(ks[18], E), "norm_b": b(ks[19], E),
    }


def pack_params(raw, *, d_model, nhead, dim_ff):
    """One-time packing: pad E->mult of 128, head_dim->mult of 8, pack Q/K into one
    matmul, split the CDP (E+1, E) weight, pre-shape biases, cast matmul weights to bf16.
    (For per-layer distinct weights, add a leading layer axis and index it with `l`.)"""
    E, H, F = d_model, nhead, dim_ff
    Dh = E // H
    Ep = _round_up(E, 128)
    Dp = _round_up(Dh, 8)
    Fp = _round_up(F, 128)
    HDp = H * Dp
    bf = jnp.bfloat16

    def pad2(wm, rows, cols):
        return jnp.zeros((rows, cols), jnp.float32).at[:wm.shape[0], :wm.shape[1]].set(wm)

    def pad_row(bv, cols):
        return jnp.zeros((1, cols), jnp.float32).at[0, :bv.shape[0]].set(bv)

    def head_cols(wm):     # (E, H*Dh) -> (Ep, H*Dp)
        t = jnp.zeros((Ep, H, Dp), jnp.float32).at[:E, :, :Dh].set(wm.reshape(E, H, Dh))
        return t.reshape(Ep, HDp)

    def head_bias(bv):     # (H*Dh,) -> (1, H*Dp)
        t = jnp.zeros((H, Dp), jnp.float32).at[:, :Dh].set(bv.reshape(H, Dh))
        return t.reshape(1, HDp)

    def head_rows(wm):     # (H*Dh, E) -> (H*Dp, Ep)
        t = jnp.zeros((H, Dp, Ep), jnp.float32).at[:, :Dh, :E].set(wm.reshape(H, Dh, E))
        return t.reshape(HDp, Ep)

    lp, at = raw["layer"], raw["layer"]["attn"]
    return {
        "w_qk": jnp.concatenate([head_cols(at["wq"]), head_cols(at["wk"])], 1).astype(bf),
        "b_qk": jnp.concatenate([head_bias(at["bq"]), head_bias(at["bk"])], 1),
        "w_v": head_cols(at["wv"]).astype(bf), "b_v": head_bias(at["bv"]),
        "w_o": head_rows(at["wo"]).astype(bf), "b_o": pad_row(at["bo"], Ep),
        "norm1_g": pad_row(lp["norm1_g"], Ep), "norm1_b": pad_row(lp["norm1_b"], Ep),
        "w1": pad2(lp["w1"], Ep, Fp).astype(bf), "b1": pad_row(lp["b1"], Fp),
        "w2": pad2(lp["w2"], Fp, Ep).astype(bf), "b2": pad_row(lp["b2"], Ep),
        "norm2_g": pad_row(lp["norm2_g"], Ep), "norm2_b": pad_row(lp["norm2_b"], Ep),
        "cdp_w": pad2(raw["cdp_w"][:E, :], Ep, Ep).astype(bf),
        "cdp_wd": pad_row(raw["cdp_w"][E, :], Ep),
        "cdp_b": pad_row(raw["cdp_b"], Ep),
        "normf_g": pad_row(raw["norm_g"], Ep), "normf_b": pad_row(raw["norm_b"], Ep),
    }


# ---------------------------------------------------------------------------
# Pure-JAX f32 reference (for a loose numerical self-check)
# ---------------------------------------------------------------------------

def reference_forward(src, pos, raw, *, nhead, num_layers, with_cdp, final_norm):
    S, B, E = src.shape
    Dh = E // nhead
    lp, a = raw["layer"], raw["layer"]["attn"]

    def ln(x, g, b, eps=1e-5):
        m = x.mean(-1, keepdims=True)
        v = ((x - m) ** 2).mean(-1, keepdims=True)
        return (x - m) / jnp.sqrt(v + eps) * g + b

    out = src
    for _ in range(num_layers):
        prev = out
        qk_in = out + pos
        q = qk_in @ a["wq"] + a["bq"]
        k = qk_in @ a["wk"] + a["bk"]
        v = out @ a["wv"] + a["bv"]

        def split(t):   # (S,B,E) -> (B,H,S,Dh)
            return t.reshape(S, B, nhead, Dh).transpose(1, 2, 0, 3)

        s = jnp.einsum("bhqd,bhkd->bhqk", split(q), split(k)) / (Dh ** 0.5)
        p = jax.nn.softmax(s, axis=-1)
        o = jnp.einsum("bhqk,bhkd->bhqd", p, split(v))
        o = o.transpose(2, 0, 1, 3).reshape(S, B, E) @ a["wo"] + a["bo"]
        x = ln(out + o, lp["norm1_g"], lp["norm1_b"])
        f = jnp.maximum(x @ lp["w1"] + lp["b1"], 0.0) @ lp["w2"] + lp["b2"]
        x = ln(x + f, lp["norm2_g"], lp["norm2_b"])
        if with_cdp:
            pn = prev / jnp.maximum(jnp.linalg.norm(prev, axis=-1, keepdims=True), 1e-12)
            xn = x / jnp.maximum(jnp.linalg.norm(x, axis=-1, keepdims=True), 1e-12)
            dis = 1.0 - jnp.sum(pn * xn, -1, keepdims=True)
            z = jnp.concatenate([x, dis], -1) @ raw["cdp_w"] + raw["cdp_b"]
            x = x * jax.nn.sigmoid(z) + x
        out = x
    if final_norm:
        out = ln(out, raw["norm_g"], raw["norm_b"])
    return out


# ---------------------------------------------------------------------------
# Example run
# ---------------------------------------------------------------------------

if __name__ == "__main__":
    S, B = 16, 2
    d_model = 224          # fixed by CDP's nn.Linear(224 + 1, 224)
    nhead = 8              # head_dim = 28 (padded to 32 lanes in-kernel)
    dim_ff = 256
    num_layers = 2

    key = jax.random.PRNGKey(0)
    k_src, k_pos, k_par = jax.random.split(key, 3)
    src = jax.random.normal(k_src, (S, B, d_model), jnp.float32)
    pos = jax.random.normal(k_pos, (S, B, d_model), jnp.float32)

    raw = make_params(k_par, d_model, nhead, dim_ff)
    params = pack_params(raw, d_model=d_model, nhead=nhead, dim_ff=dim_ff)

    out = transformer_encoder_forward(src, pos, params, nhead=nhead,
                                      num_layers=num_layers,
                                      with_cdp=True, final_norm=True)
    out = jax.block_until_ready(out)
    assert out.shape == (S, B, d_model) and out.dtype == jnp.float32

    # loose self-check vs an f32 reference (kernel matmuls run in bf16 on the MXU)
    ref = reference_forward(src, pos, raw, nhead=nhead, num_layers=num_layers,
                            with_cdp=True, final_norm=True)
    err = float(jnp.max(jnp.abs(out - ref)))
    assert err < 0.25, f"max abs err vs reference too large: {err}"
    print("KERNEL_OK")
</pallas_src>

<mosaic_0001>
module attributes {stable_mosaic.version = 11 : i64} {
  func.func @_encoder_kernel(%arg0: i32, %arg1: memref<32x256xf32, #tpu.memory_space<vmem>>, %arg2: memref<32x256xf32, #tpu.memory_space<vmem>>, %arg3: memref<32x32xf32, #tpu.memory_space<vmem>>, %arg4: memref<256x512xbf16, #tpu.memory_space<vmem>>, %arg5: memref<1x512xf32, #tpu.memory_space<vmem>>, %arg6: memref<256x256xbf16, #tpu.memory_space<vmem>>, %arg7: memref<1x256xf32, #tpu.memory_space<vmem>>, %arg8: memref<256x256xbf16, #tpu.memory_space<vmem>>, %arg9: memref<1x256xf32, #tpu.memory_space<vmem>>, %arg10: memref<1x256xf32, #tpu.memory_space<vmem>>, %arg11: memref<1x256xf32, #tpu.memory_space<vmem>>, %arg12: memref<256x256xbf16, #tpu.memory_space<vmem>>, %arg13: memref<1x256xf32, #tpu.memory_space<vmem>>, %arg14: memref<256x256xbf16, #tpu.memory_space<vmem>>, %arg15: memref<1x256xf32, #tpu.memory_space<vmem>>, %arg16: memref<1x256xf32, #tpu.memory_space<vmem>>, %arg17: memref<1x256xf32, #tpu.memory_space<vmem>>, %arg18: memref<256x256xbf16, #tpu.memory_space<vmem>>, %arg19: memref<1x256xf32, #tpu.memory_space<vmem>>, %arg20: memref<1x256xf32, #tpu.memory_space<vmem>>, %arg21: memref<1x256xf32, #tpu.memory_space<vmem>>, %arg22: memref<1x256xf32, #tpu.memory_space<vmem>>, %arg23: memref<32x256xf32, #tpu.memory_space<vmem>>, %arg24: memref<32x256xf32, #tpu.memory_space<vmem>>, %arg25: memref<32x256xf32, #tpu.memory_space<vmem>>) attributes {dimension_semantics = [#tpu.dimension_semantics<arbitrary>], iteration_bounds = array<i64: 2>, scalar_prefetch = 0 : i64, scratch_operands = 2 : i64, tpu.core_type = #tpu.core_type<tc>, window_params = [{pipeline_mode = #tpu.pipeline_mode<synchronous>, transform_indices = @transform_0, window_bounds = array<i64: 32, 256>}, {pipeline_mode = #tpu.pipeline_mode<synchronous>, transform_indices = @transform_1, window_bounds = array<i64: 32, 256>}, {pipeline_mode = #tpu.pipeline_mode<synchronous>, transform_indices = @transform_2, window_bounds = array<i64: 32, 32>}, {pipeline_mode = #tpu.pipeline_mode<synchronous>, transform_indices = @transform_3, window_bounds = array<i64: 256, 512>}, {pipeline_mode = #tpu.pipeline_mode<synchronous>, transform_indices = @transform_4, window_bounds = array<i64: 1, 512>}, {pipeline_mode = #tpu.pipeline_mode<synchronous>, transform_indices = @transform_5, window_bounds = array<i64: 256, 256>}, {pipeline_mode = #tpu.pipeline_mode<synchronous>, transform_indices = @transform_6, window_bounds = array<i64: 1, 256>}, {pipeline_mode = #tpu.pipeline_mode<synchronous>, transform_indices = @transform_7, window_bounds = array<i64: 256, 256>}, {pipeline_mode = #tpu.pipeline_mode<synchronous>, transform_indices = @transform_8, window_bounds = array<i64: 1, 256>}, {pipeline_mode = #tpu.pipeline_mode<synchronous>, transform_indices = @transform_9, window_bounds = array<i64: 1, 256>}, {pipeline_mode = #tpu.pipeline_mode<synchronous>, transform_indices = @transform_10, window_bounds = array<i64: 1, 256>}, {pipeline_mode = #tpu.pipeline_mode<synchronous>, transform_indices = @transform_11, window_bounds = array<i64: 256, 256>}, {pipeline_mode = #tpu.pipeline_mode<synchronous>, transform_indices = @transform_12, window_bounds = array<i64: 1, 256>}, {pipeline_mode = #tpu.pipeline_mode<synchronous>, transform_indices = @transform_13, window_bounds = array<i64: 256, 256>}, {pipeline_mode = #tpu.pipeline_mode<synchronous>, transform_indices = @transform_14, window_bounds = array<i64: 1, 256>}, {pipeline_mode = #tpu.pipeline_mode<synchronous>, transform_indices = @transform_15, window_bounds = array<i64: 1, 256>}, {pipeline_mode = #tpu.pipeline_mode<synchronous>, transform_indices = @transform_16, window_bounds = array<i64: 1, 256>}, {pipeline_mode = #tpu.pipeline_mode<synchronous>, transform_indices = @transform_17, window_bounds = array<i64: 256, 256>}, {pipeline_mode = #tpu.pipeline_mode<synchronous>, transform_indices = @transform_18, window_bounds = array<i64: 1, 256>}, {pipeline_mode = #tpu.pipeline_mode<synchronous>, transform_indices = @transform_19, window_bounds = array<i64: 1, 256>}, {pipeline_mode = #tpu.pipeline_mode<synchronous>, transform_indices = @transform_20, window_bounds = array<i64: 1, 256>}, {pipeline_mode = #tpu.pipeline_mode<synchronous>, transform_indices = @transform_21, window_bounds = array<i64: 1, 256>}, {pipeline_mode = #tpu.pipeline_mode<synchronous>, transform_indices = @transform_22, window_bounds = array<i64: 32, 256>}]} {
    %c0_i32 = arith.constant 0 : i32
    %0 = arith.cmpi eq, %arg0, %c0_i32 : i32
    %1 = arith.extui %0 : i1 to i32
    %c0_i32_0 = arith.constant 0 : i32
    %2 = arith.cmpi ne, %1, %c0_i32_0 : i32
    scf.if %2 {
      %c0_119 = arith.constant 0 : index
      %c0_120 = arith.constant 0 : index
      %326 = vector.load %arg1[%c0_119, %c0_120] : memref<32x256xf32, #tpu.memory_space<vmem>>, vector<32x256xf32>
      %c0_121 = arith.constant 0 : index
      %c0_122 = arith.constant 0 : index
      %327 = vector.load %arg24[%c0_121, %c0_122] : memref<32x256xf32, #tpu.memory_space<vmem>>, vector<32x256xf32>
      tpu.vector_store %arg24[%c0_121, %c0_122], %326 {strides = array<i32>} : memref<32x256xf32, #tpu.memory_space<vmem>>, vector<32x256xf32>,
    } else {
    }
    %c0 = arith.constant 0 : index
    %c0_1 = arith.constant 0 : index
    %3 = vector.load %arg24[%c0, %c0_1] : memref<32x256xf32, #tpu.memory_space<vmem>>, vector<32x256xf32>
    %c0_2 = arith.constant 0 : index
    %c0_3 = arith.constant 0 : index
    %4 = vector.load %arg2[%c0_2, %c0_3] : memref<32x256xf32, #tpu.memory_space<vmem>>, vector<32x256xf32>
    %5 = tpu.iota {dimensions = array<i32: 1>} : vector<1x256xi32>
    %c224_i32 = arith.constant 224 : i32
    %6 = vector.broadcast %c224_i32 : i32 to vector<1x256xi32>
    %7 = arith.cmpi slt, %5, %6 : vector<1x256xi32>
    %8 = arith.extui %7 : vector<1x256xi1> to vector<1x256xi32>
    %9 = arith.sitofp %8 : vector<1x256xi32> to vector<1x256xf32>
    %10 = arith.addf %3, %4 : vector<32x256xf32>
    %11 = arith.truncf %10 : vector<32x256xf32> to vector<32x256xbf16>
    %c0_4 = arith.constant 0 : index
    %c0_5 = arith.constant 0 : index
    %12 = vector.load %arg4[%c0_4, %c0_5] : memref<256x512xbf16, #tpu.memory_space<vmem>>, vector<256x512xbf16>
    %cst = arith.constant dense<0.000000e+00> : vector<32x512xf32>
    %13 = tpu.matmul %11, %12, %cst {dimension_numbers = #tpu.dot_dimension_numbers<[1], [0], [0], [1], [0, 0, 1, 1], [], []>} : vector<32x256xbf16>, vector<256x512xbf16>, vector<32x512xf32> -> vector<32x512xf32>
    %c0_6 = arith.constant 0 : index
    %c0_7 = arith.constant 0 : index
    %14 = vector.load %arg5[%c0_6, %c0_7] : memref<1x512xf32, #tpu.memory_space<vmem>>, vector<1x512xf32>
    %15 = vector.broadcast %14 : vector<1x512xf32> to vector<32x512xf32>
    %16 = arith.addf %13, %15 : vector<32x512xf32>
    %17 = vector.extract_strided_slice %16 {offsets = [0, 0], sizes = [32, 256], strides = [1, 1]} : vector<32x512xf32> to vector<32x256xf32>
    %18 = vector.extract_strided_slice %16 {offsets = [0, 256], sizes = [32, 256], strides = [1, 1]} : vector<32x512xf32> to vector<32x256xf32>
    %19 = arith.truncf %3 : vector<32x256xf32> to vector<32x256xbf16>
    %c0_8 = arith.constant 0 : index
    %c0_9 = arith.constant 0 : index
    %20 = vector.load %arg6[%c0_8, %c0_9] : memref<256x256xbf16, #tpu.memory_space<vmem>>, vector<256x256xbf16>
    %cst_10 = arith.constant dense<0.000000e+00> : vector<32x256xf32>
    %21 = tpu.matmul %19, %20, %cst_10 {dimension_numbers = #tpu.dot_dimension_numbers<[1], [0], [0], [1], [0, 0, 1, 1], [], []>} : vector<32x256xbf16>, vector<256x256xbf16>, vector<32x256xf32> -> vector<32x256xf32>
    %c0_11 = arith.constant 0 : index
    %c0_12 = arith.constant 0 : index
    %22 = vector.load %arg7[%c0_11, %c0_12] : memref<1x256xf32, #tpu.memory_space<vmem>>, vector<1x256xf32>
    %23 = vector.broadcast %22 : vector<1x256xf32> to vector<32x256xf32>
    %24 = arith.addf %21, %23 : vector<32x256xf32>
    %c0_13 = arith.constant 0 : index
    %c0_14 = arith.constant 0 : index
    %25 = vector.load %arg3[%c0_13, %c0_14] : memref<32x32xf32, #tpu.memory_space<vmem>>, vector<32x32xf32>
    %26 = vector.extract_strided_slice %17 {offsets = [0, 0], sizes = [32, 32], strides = [1, 1]} : vector<32x256xf32> to vector<32x32xf32>
    %27 = arith.truncf %26 : vector<32x32xf32> to vector<32x32xbf16>
    %28 = vector.extract_strided_slice %18 {offsets = [0, 0], sizes = [32, 32], strides = [1, 1]} : vector<32x256xf32> to vector<32x32xf32>
    %29 = arith.truncf %28 : vector<32x32xf32> to vector<32x32xbf16>
    %30 = vector.extract_strided_slice %24 {offsets = [0, 0], sizes = [32, 32], strides = [1, 1]} : vector<32x256xf32> to vector<32x32xf32>
    %31 = arith.truncf %30 : vector<32x32xf32> to vector<32x32xbf16>
    %cst_15 = arith.constant dense<0.000000e+00> : vector<32x32xf32>
    %32 = tpu.matmul %27, %29, %cst_15 {dimension_numbers = #tpu.dot_dimension_numbers<[1], [1], [0], [0], [0, 0, 1, 0], [], []>} : vector<32x32xbf16>, vector<32x32xbf16>, vector<32x32xf32> -> vector<32x32xf32>
    %cst_16 = arith.constant 0.188982233 : f32
    %33 = vector.broadcast %cst_16 : f32 to vector<32x32xf32>
    %34 = arith.mulf %32, %33 : vector<32x32xf32>
    %35 = arith.addf %34, %25 : vector<32x32xf32>
    %cst_17 = arith.constant dense<0xFF800000> : vector<32xf32>
    %36 = vector.multi_reduction <maximumf>, %35, %cst_17 [1] : vector<32x32xf32> to vector<32xf32>
    %37 = vector.shape_cast %36 : vector<32xf32> to vector<32x1xf32>
    %38 = vector.broadcast %37 : vector<32x1xf32> to vector<32x32xf32>
    %39 = arith.subf %35, %38 : vector<32x32xf32>
    %40 = math.exp %39 : vector<32x32xf32>
    %cst_18 = arith.constant dense<0.000000e+00> : vector<32xf32>
    %41 = vector.multi_reduction <add>, %40, %cst_18 [1] : vector<32x32xf32> to vector<32xf32>
    %42 = vector.shape_cast %41 : vector<32xf32> to vector<32x1xf32>
    %43 = tpu.reciprocal %42 {approx = true} : vector<32x1xf32> -> vector<32x1xf32>
    %44 = vector.broadcast %43 : vector<32x1xf32> to vector<32x32xf32>
    %45 = arith.mulf %40, %44 : vector<32x32xf32>
    %46 = arith.truncf %45 : vector<32x32xf32> to vector<32x32xbf16>
    %cst_19 = arith.constant dense<0.000000e+00> : vector<32x32xf32>
    %47 = tpu.matmul %46, %31, %cst_19 {dimension_numbers = #tpu.dot_dimension_numbers<[1], [0], [0], [1], [0, 0, 1, 1], [], []>} : vector<32x32xbf16>, vector<32x32xbf16>, vector<32x32xf32> -> vector<32x32xf32>
    %c0_20 = arith.constant 0 : index
    %c0_21 = arith.constant 0 : index
    %48 = vector.load %arg25[%c0_20, %c0_21] : memref<32x256xf32, #tpu.memory_space<vmem>>, vector<32x32xf32>
    tpu.vector_store %arg25[%c0_20, %c0_21], %47 {strides = array<i32>} : memref<32x256xf32, #tpu.memory_space<vmem>>, vector<32x32xf32>,
    %49 = vector.extract_strided_slice %17 {offsets = [0, 32], sizes = [32, 32], strides = [1, 1]} : vector<32x256xf32> to vector<32x32xf32>
    %50 = arith.truncf %49 : vector<32x32xf32> to vector<32x32xbf16>
    %51 = vector.extract_strided_slice %18 {offsets = [0, 32], sizes = [32, 32], strides = [1, 1]} : vector<32x256xf32> to vector<32x32xf32>
    %52 = arith.truncf %51 : vector<32x32xf32> to vector<32x32xbf16>
    %53 = vector.extract_strided_slice %24 {offsets = [0, 32], sizes = [32, 32], strides = [1, 1]} : vector<32x256xf32> to vector<32x32xf32>
    %54 = arith.truncf %53 : vector<32x32xf32> to vector<32x32xbf16>
    %cst_22 = arith.constant dense<0.000000e+00> : vector<32x32xf32>
    %55 = tpu.matmul %50, %52, %cst_22 {dimension_numbers = #tpu.dot_dimension_numbers<[1], [1], [0], [0], [0, 0, 1, 0], [], []>} : vector<32x32xbf16>, vector<32x32xbf16>, vector<32x32xf32> -> vector<32x32xf32>
    %cst_23 = arith.constant 0.188982233 : f32
    %56 = vector.broadcast %cst_23 : f32 to vector<32x32xf32>
    %57 = arith.mulf %55, %56 : vector<32x32xf32>
    %58 = arith.addf %57, %25 : vector<32x32xf32>
    %cst_24 = arith.constant dense<0xFF800000> : vector<32xf32>
    %59 = vector.multi_reduction <maximumf>, %58, %cst_24 [1] : vector<32x32xf32> to vector<32xf32>
    %60 = vector.shape_cast %59 : vector<32xf32> to vector<32x1xf32>
    %61 = vector.broadcast %60 : vector<32x1xf32> to vector<32x32xf32>
    %62 = arith.subf %58, %61 : vector<32x32xf32>
    %63 = math.exp %62 : vector<32x32xf32>
    %cst_25 = arith.constant dense<0.000000e+00> : vector<32xf32>
    %64 = vector.multi_reduction <add>, %63, %cst_25 [1] : vector<32x32xf32> to vector<32xf32>
    %65 = vector.shape_cast %64 : vector<32xf32> to vector<32x1xf32>
    %66 = tpu.reciprocal %65 {approx = true} : vector<32x1xf32> -> vector<32x1xf32>
    %67 = vector.broadcast %66 : vector<32x1xf32> to vector<32x32xf32>
    %68 = arith.mulf %63, %67 : vector<32x32xf32>
    %69 = arith.truncf %68 : vector<32x32xf32> to vector<32x32xbf16>
    %cst_26 = arith.constant dense<0.000000e+00> : vector<32x32xf32>
    %70 = tpu.matmul %69, %54, %cst_26 {dimension_numbers = #tpu.dot_dimension_numbers<[1], [0], [0], [1], [0, 0, 1, 1], [], []>} : vector<32x32xbf16>, vector<32x32xbf16>, vector<32x32xf32> -> vector<32x32xf32>
    %c0_27 = arith.constant 0 : index
    %c32 = arith.constant 32 : index
    %71 = vector.load %arg25[%c0_27, %c32] : memref<32x256xf32, #tpu.memory_space<vmem>>, vector<32x32xf32>
    tpu.vector_store %arg25[%c0_27, %c32], %70 {strides = array<i32>} : memref<32x256xf32, #tpu.memory_space<vmem>>, vector<32x32xf32>,
    %72 = vector.extract_strided_slice %17 {offsets = [0, 64], sizes = [32, 32], strides = [1, 1]} : vector<32x256xf32> to vector<32x32xf32>
    %73 = arith.truncf %72 : vector<32x32xf32> to vector<32x32xbf16>
    %74 = vector.extract_strided_slice %18 {offsets = [0, 64], sizes = [32, 32], strides = [1, 1]} : vector<32x256xf32> to vector<32x32xf32>
    %75 = arith.truncf %74 : vector<32x32xf32> to vector<32x32xbf16>
    %76 = vector.extract_strided_slice %24 {offsets = [0, 64], sizes = [32, 32], strides = [1, 1]} : vector<32x256xf32> to vector<32x32xf32>
    %77 = arith.truncf %76 : vector<32x32xf32> to vector<32x32xbf16>
    %cst_28 = arith.constant dense<0.000000e+00> : vector<32x32xf32>
    %78 = tpu.matmul %73, %75, %cst_28 {dimension_numbers = #tpu.dot_dimension_numbers<[1], [1], [0], [0], [0, 0, 1, 0], [], []>} : vector<32x32xbf16>, vector<32x32xbf16>, vector<32x32xf32> -> vector<32x32xf32>
    %cst_29 = arith.constant 0.188982233 : f32
    %79 = vector.broadcast %cst_29 : f32 to vector<32x32xf32>
    %80 = arith.mulf %78, %79 : vector<32x32xf32>
    %81 = arith.addf %80, %25 : vector<32x32xf32>
    %cst_30 = arith.constant dense<0xFF800000> : vector<32xf32>
    %82 = vector.multi_reduction <maximumf>, %81, %cst_30 [1] : vector<32x32xf32> to vector<32xf32>
    %83 = vector.shape_cast %82 : vector<32xf32> to vector<32x1xf32>
    %84 = vector.broadcast %83 : vector<32x1xf32> to vector<32x32xf32>
    %85 = arith.subf %81, %84 : vector<32x32xf32>
    %86 = math.exp %85 : vector<32x32xf32>
    %cst_31 = arith.constant dense<0.000000e+00> : vector<32xf32>
    %87 = vector.multi_reduction <add>, %86, %cst_31 [1] : vector<32x32xf32> to vector<32xf32>
    %88 = vector.shape_cast %87 : vector<32xf32> to vector<32x1xf32>
    %89 = tpu.reciprocal %88 {approx = true} : vector<32x1xf32> -> vector<32x1xf32>
    %90 = vector.broadcast %89 : vector<32x1xf32> to vector<32x32xf32>
    %91 = arith.mulf %86, %90 : vector<32x32xf32>
    %92 = arith.truncf %91 : vector<32x32xf32> to vector<32x32xbf16>
    %cst_32 = arith.constant dense<0.000000e+00> : vector<32x32xf32>
    %93 = tpu.matmul %92, %77, %cst_32 {dimension_numbers = #tpu.dot_dimension_numbers<[1], [0], [0], [1], [0, 0, 1, 1], [], []>} : vector<32x32xbf16>, vector<32x32xbf16>, vector<32x32xf32> -> vector<32x32xf32>
    %c0_33 = arith.constant 0 : index
    %c64 = arith.constant 64 : index
    %94 = vector.load %arg25[%c0_33, %c64] : memref<32x256xf32, #tpu.memory_space<vmem>>, vector<32x32xf32>
    tpu.vector_store %arg25[%c0_33, %c64], %93 {strides = array<i32>} : memref<32x256xf32, #tpu.memory_space<vmem>>, vector<32x32xf32>,
    %95 = vector.extract_strided_slice %17 {offsets = [0, 96], sizes = [32, 32], strides = [1, 1]} : vector<32x256xf32> to vector<32x32xf32>
    %96 = arith.truncf %95 : vector<32x32xf32> to vector<32x32xbf16>
    %97 = vector.extract_strided_slice %18 {offsets = [0, 96], sizes = [32, 32], strides = [1, 1]} : vector<32x256xf32> to vector<32x32xf32>
    %98 = arith.truncf %97 : vector<32x32xf32> to vector<32x32xbf16>
    %99 = vector.extract_strided_slice %24 {offsets = [0, 96], sizes = [32, 32], strides = [1, 1]} : vector<32x256xf32> to vector<32x32xf32>
    %100 = arith.truncf %99 : vector<32x32xf32> to vector<32x32xbf16>
    %cst_34 = arith.constant dense<0.000000e+00> : vector<32x32xf32>
    %101 = tpu.matmul %96, %98, %cst_34 {dimension_numbers = #tpu.dot_dimension_numbers<[1], [1], [0], [0], [0, 0, 1, 0], [], []>} : vector<32x32xbf16>, vector<32x32xbf16>, vector<32x32xf32> -> vector<32x32xf32>
    %cst_35 = arith.constant 0.188982233 : f32
    %102 = vector.broadcast %cst_35 : f32 to vector<32x32xf32>
    %103 = arith.mulf %101, %102 : vector<32x32xf32>
    %104 = arith.addf %103, %25 : vector<32x32xf32>
    %cst_36 = arith.constant dense<0xFF800000> : vector<32xf32>
    %105 = vector.multi_reduction <maximumf>, %104, %cst_36 [1] : vector<32x32xf32> to vector<32xf32>
    %106 = vector.shape_cast %105 : vector<32xf32> to vector<32x1xf32>
    %107 = vector.broadcast %106 : vector<32x1xf32> to vector<32x32xf32>
    %108 = arith.subf %104, %107 : vector<32x32xf32>
    %109 = math.exp %108 : vector<32x32xf32>
    %cst_37 = arith.constant dense<0.000000e+00> : vector<32xf32>
    %110 = vector.multi_reduction <add>, %109, %cst_37 [1] : vector<32x32xf32> to vector<32xf32>
    %111 = vector.shape_cast %110 : vector<32xf32> to vector<32x1xf32>
    %112 = tpu.reciprocal %111 {approx = true} : vector<32x1xf32> -> vector<32x1xf32>
    %113 = vector.broadcast %112 : vector<32x1xf32> to vector<32x32xf32>
    %114 = arith.mulf %109, %113 : vector<32x32xf32>
    %115 = arith.truncf %114 : vector<32x32xf32> to vector<32x32xbf16>
    %cst_38 = arith.constant dense<0.000000e+00> : vector<32x32xf32>
    %116 = tpu.matmul %115, %100, %cst_38 {dimension_numbers = #tpu.dot_dimension_numbers<[1], [0], [0], [1], [0, 0, 1, 1], [], []>} : vector<32x32xbf16>, vector<32x32xbf16>, vector<32x32xf32> -> vector<32x32xf32>
    %c0_39 = arith.constant 0 : index
    %c96 = arith.constant 96 : index
    %117 = vector.load %arg25[%c0_39, %c96] : memref<32x256xf32, #tpu.memory_space<vmem>>, vector<32x32xf32>
    tpu.vector_store %arg25[%c0_39, %c96], %116 {strides = array<i32>} : memref<32x256xf32, #tpu.memory_space<vmem>>, vector<32x32xf32>,
    %118 = vector.extract_strided_slice %17 {offsets = [0, 128], sizes = [32, 32], strides = [1, 1]} : vector<32x256xf32> to vector<32x32xf32>
    %119 = arith.truncf %118 : vector<32x32xf32> to vector<32x32xbf16>
    %120 = vector.extract_strided_slice %18 {offsets = [0, 128], sizes = [32, 32], strides = [1, 1]} : vector<32x256xf32> to vector<32x32xf32>
    %121 = arith.truncf %120 : vector<32x32xf32> to vector<32x32xbf16>
    %122 = vector.extract_strided_slice %24 {offsets = [0, 128], sizes = [32, 32], strides = [1, 1]} : vector<32x256xf32> to vector<32x32xf32>
    %123 = arith.truncf %122 : vector<32x32xf32> to vector<32x32xbf16>
    %cst_40 = arith.constant dense<0.000000e+00> : vector<32x32xf32>
    %124 = tpu.matmul %119, %121, %cst_40 {dimension_numbers = #tpu.dot_dimension_numbers<[1], [1], [0], [0], [0, 0, 1, 0], [], []>} : vector<32x32xbf16>, vector<32x32xbf16>, vector<32x32xf32> -> vector<32x32xf32>
    %cst_41 = arith.constant 0.188982233 : f32
    %125 = vector.broadcast %cst_41 : f32 to vector<32x32xf32>
    %126 = arith.mulf %124, %125 : vector<32x32xf32>
    %127 = arith.addf %126, %25 : vector<32x32xf32>
    %cst_42 = arith.constant dense<0xFF800000> : vector<32xf32>
    %128 = vector.multi_reduction <maximumf>, %127, %cst_42 [1] : vector<32x32xf32> to vector<32xf32>
    %129 = vector.shape_cast %128 : vector<32xf32> to vector<32x1xf32>
    %130 = vector.broadcast %129 : vector<32x1xf32> to vector<32x32xf32>
    %131 = arith.subf %127, %130 : vector<32x32xf32>
    %132 = math.exp %131 : vector<32x32xf32>
    %cst_43 = arith.constant dense<0.000000e+00> : vector<32xf32>
    %133 = vector.multi_reduction <add>, %132, %cst_43 [1] : vector<32x32xf32> to vector<32xf32>
    %134 = vector.shape_cast %133 : vector<32xf32> to vector<32x1xf32>
    %135 = tpu.reciprocal %134 {approx = true} : vector<32x1xf32> -> vector<32x1xf32>
    %136 = vector.broadcast %135 : vector<32x1xf32> to vector<32x32xf32>
    %137 = arith.mulf %132, %136 : vector<32x32xf32>
    %138 = arith.truncf %137 : vector<32x32xf32> to vector<32x32xbf16>
    %cst_44 = arith.constant dense<0.000000e+00> : vector<32x32xf32>
    %139 = tpu.matmul %138, %123, %cst_44 {dimension_numbers = #tpu.dot_dimension_numbers<[1], [0], [0], [1], [0, 0, 1, 1], [], []>} : vector<32x32xbf16>, vector<32x32xbf16>, vector<32x32xf32> -> vector<32x32xf32>
    %c0_45 = arith.constant 0 : index
    %c128 = arith.constant 128 : index
    %140 = vector.load %arg25[%c0_45, %c128] : memref<32x256xf32, #tpu.memory_space<vmem>>, vector<32x32xf32>
    tpu.vector_store %arg25[%c0_45, %c128], %139 {strides = array<i32>} : memref<32x256xf32, #tpu.memory_space<vmem>>, vector<32x32xf32>,
    %141 = vector.extract_strided_slice %17 {offsets = [0, 160], sizes = [32, 32], strides = [1, 1]} : vector<32x256xf32> to vector<32x32xf32>
    %142 = arith.truncf %141 : vector<32x32xf32> to vector<32x32xbf16>
    %143 = vector.extract_strided_slice %18 {offsets = [0, 160], sizes = [32, 32], strides = [1, 1]} : vector<32x256xf32> to vector<32x32xf32>
    %144 = arith.truncf %143 : vector<32x32xf32> to vector<32x32xbf16>
    %145 = vector.extract_strided_slice %24 {offsets = [0, 160], sizes = [32, 32], strides = [1, 1]} : vector<32x256xf32> to vector<32x32xf32>
    %146 = arith.truncf %145 : vector<32x32xf32> to vector<32x32xbf16>
    %cst_46 = arith.constant dense<0.000000e+00> : vector<32x32xf32>
    %147 = tpu.matmul %142, %144, %cst_46 {dimension_numbers = #tpu.dot_dimension_numbers<[1], [1], [0], [0], [0, 0, 1, 0], [], []>} : vector<32x32xbf16>, vector<32x32xbf16>, vector<32x32xf32> -> vector<32x32xf32>
    %cst_47 = arith.constant 0.188982233 : f32
    %148 = vector.broadcast %cst_47 : f32 to vector<32x32xf32>
    %149 = arith.mulf %147, %148 : vector<32x32xf32>
    %150 = arith.addf %149, %25 : vector<32x32xf32>
    %cst_48 = arith.constant dense<0xFF800000> : vector<32xf32>
    %151 = vector.multi_reduction <maximumf>, %150, %cst_48 [1] : vector<32x32xf32> to vector<32xf32>
    %152 = vector.shape_cast %151 : vector<32xf32> to vector<32x1xf32>
    %153 = vector.broadcast %152 : vector<32x1xf32> to vector<32x32xf32>
    %154 = arith.subf %150, %153 : vector<32x32xf32>
    %155 = math.exp %154 : vector<32x32xf32>
    %cst_49 = arith.constant dense<0.000000e+00> : vector<32xf32>
    %156 = vector.multi_reduction <add>, %155, %cst_49 [1] : vector<32x32xf32> to vector<32xf32>
    %157 = vector.shape_cast %156 : vector<32xf32> to vector<32x1xf32>
    %158 = tpu.reciprocal %157 {approx = true} : vector<32x1xf32> -> vector<32x1xf32>
    %159 = vector.broadcast %158 : vector<32x1xf32> to vector<32x32xf32>
    %160 = arith.mulf %155, %159 : vector<32x32xf32>
    %161 = arith.truncf %160 : vector<32x32xf32> to vector<32x32xbf16>
    %cst_50 = arith.constant dense<0.000000e+00> : vector<32x32xf32>
    %162 = tpu.matmul %161, %146, %cst_50 {dimension_numbers = #tpu.dot_dimension_numbers<[1], [0], [0], [1], [0, 0, 1, 1], [], []>} : vector<32x32xbf16>, vector<32x32xbf16>, vector<32x32xf32> -> vector<32x32xf32>
    %c0_51 = arith.constant 0 : index
    %c160 = arith.constant 160 : index
    %163 = vector.load %arg25[%c0_51, %c160] : memref<32x256xf32, #tpu.memory_space<vmem>>, vector<32x32xf32>
    tpu.vector_store %arg25[%c0_51, %c160], %162 {strides = array<i32>} : memref<32x256xf32, #tpu.memory_space<vmem>>, vector<32x32xf32>,
    %164 = vector.extract_strided_slice %17 {offsets = [0, 192], sizes = [32, 32], strides = [1, 1]} : vector<32x256xf32> to vector<32x32xf32>
    %165 = arith.truncf %164 : vector<32x32xf32> to vector<32x32xbf16>
    %166 = vector.extract_strided_slice %18 {offsets = [0, 192], sizes = [32, 32], strides = [1, 1]} : vector<32x256xf32> to vector<32x32xf32>
    %167 = arith.truncf %166 : vector<32x32xf32> to vector<32x32xbf16>
    %168 = vector.extract_strided_slice %24 {offsets = [0, 192], sizes = [32, 32], strides = [1, 1]} : vector<32x256xf32> to vector<32x32xf32>
    %169 = arith.truncf %168 : vector<32x32xf32> to vector<32x32xbf16>
    %cst_52 = arith.constant dense<0.000000e+00> : vector<32x32xf32>
    %170 = tpu.matmul %165, %167, %cst_52 {dimension_numbers = #tpu.dot_dimension_numbers<[1], [1], [0], [0], [0, 0, 1, 0], [], []>} : vector<32x32xbf16>, vector<32x32xbf16>, vector<32x32xf32> -> vector<32x32xf32>
    %cst_53 = arith.constant 0.188982233 : f32
    %171 = vector.broadcast %cst_53 : f32 to vector<32x32xf32>
    %172 = arith.mulf %170, %171 : vector<32x32xf32>
    %173 = arith.addf %172, %25 : vector<32x32xf32>
    %cst_54 = arith.constant dense<0xFF800000> : vector<32xf32>
    %174 = vector.multi_reduction <maximumf>, %173, %cst_54 [1] : vector<32x32xf32> to vector<32xf32>
    %175 = vector.shape_cast %174 : vector<32xf32> to vector<32x1xf32>
    %176 = vector.broadcast %175 : vector<32x1xf32> to vector<32x32xf32>
    %177 = arith.subf %173, %176 : vector<32x32xf32>
    %178 = math.exp %177 : vector<32x32xf32>
    %cst_55 = arith.constant dense<0.000000e+00> : vector<32xf32>
    %179 = vector.multi_reduction <add>, %178, %cst_55 [1] : vector<32x32xf32> to vector<32xf32>
    %180 = vector.shape_cast %179 : vector<32xf32> to vector<32x1xf32>
    %181 = tpu.reciprocal %180 {approx = true} : vector<32x1xf32> -> vector<32x1xf32>
    %182 = vector.broadcast %181 : vector<32x1xf32> to vector<32x32xf32>
    %183 = arith.mulf %178, %182 : vector<32x32xf32>
    %184 = arith.truncf %183 : vector<32x32xf32> to vector<32x32xbf16>
    %cst_56 = arith.constant dense<0.000000e+00> : vector<32x32xf32>
    %185 = tpu.matmul %184, %169, %cst_56 {dimension_numbers = #tpu.dot_dimension_numbers<[1], [0], [0], [1], [0, 0, 1, 1], [], []>} : vector<32x32xbf16>, vector<32x32xbf16>, vector<32x32xf32> -> vector<32x32xf32>
    %c0_57 = arith.constant 0 : index
    %c192 = arith.constant 192 : index
    %186 = vector.load %arg25[%c0_57, %c192] : memref<32x256xf32, #tpu.memory_space<vmem>>, vector<32x32xf32>
    tpu.vector_store %arg25[%c0_57, %c192], %185 {strides = array<i32>} : memref<32x256xf32, #tpu.memory_space<vmem>>, vector<32x32xf32>,
    %187 = vector.extract_strided_slice %17 {offsets = [0, 224], sizes = [32, 32], strides = [1, 1]} : vector<32x256xf32> to vector<32x32xf32>
    %188 = arith.truncf %187 : vector<32x32xf32> to vector<32x32xbf16>
    %189 = vector.extract_strided_slice %18 {offsets = [0, 224], sizes = [32, 32], strides = [1, 1]} : vector<32x256xf32> to vector<32x32xf32>
    %190 = arith.truncf %189 : vector<32x32xf32> to vector<32x32xbf16>
    %191 = vector.extract_strided_slice %24 {offsets = [0, 224], sizes = [32, 32], strides = [1, 1]} : vector<32x256xf32> to vector<32x32xf32>
    %192 = arith.truncf %191 : vector<32x32xf32> to vector<32x32xbf16>
    %cst_58 = arith.constant dense<0.000000e+00> : vector<32x32xf32>
    %193 = tpu.matmul %188, %190, %cst_58 {dimension_numbers = #tpu.dot_dimension_numbers<[1], [1], [0], [0], [0, 0, 1, 0], [], []>} : vector<32x32xbf16>, vector<32x32xbf16>, vector<32x32xf32> -> vector<32x32xf32>
    %cst_59 = arith.constant 0.188982233 : f32
    %194 = vector.broadcast %cst_59 : f32 to vector<32x32xf32>
    %195 = arith.mulf %193, %194 : vector<32x32xf32>
    %196 = arith.addf %195, %25 : vector<32x32xf32>
    %cst_60 = arith.constant dense<0xFF800000> : vector<32xf32>
    %197 = vector.multi_reduction <maximumf>, %196, %cst_60 [1] : vector<32x32xf32> to vector<32xf32>
    %198 = vector.shape_cast %197 : vector<32xf32> to vector<32x1xf32>
    %199 = vector.broadcast %198 : vector<32x1xf32> to vector<32x32xf32>
    %200 = arith.subf %196, %199 : vector<32x32xf32>
    %201 = math.exp %200 : vector<32x32xf32>
    %cst_61 = arith.constant dense<0.000000e+00> : vector<32xf32>
    %202 = vector.multi_reduction <add>, %201, %cst_61 [1] : vector<32x32xf32> to vector<32xf32>
    %203 = vector.shape_cast %202 : vector<32xf32> to vector<32x1xf32>
    %204 = tpu.reciprocal %203 {approx = true} : vector<32x1xf32> -> vector<32x1xf32>
    %205 = vector.broadcast %204 : vector<32x1xf32> to vector<32x32xf32>
    %206 = arith.mulf %201, %205 : vector<32x32xf32>
    %207 = arith.truncf %206 : vector<32x32xf32> to vector<32x32xbf16>
    %cst_62 = arith.constant dense<0.000000e+00> : vector<32x32xf32>
    %208 = tpu.matmul %207, %192, %cst_62 {dimension_numbers = #tpu.dot_dimension_numbers<[1], [0], [0], [1], [0, 0, 1, 1], [], []>} : vector<32x32xbf16>, vector<32x32xbf16>, vector<32x32xf32> -> vector<32x32xf32>
    %c0_63 = arith.constant 0 : index
    %c224 = arith.constant 224 : index
    %209 = vector.load %arg25[%c0_63, %c224] : memref<32x256xf32, #tpu.memory_space<vmem>>, vector<32x32xf32>
    tpu.vector_store %arg25[%c0_63, %c224], %208 {strides = array<i32>} : memref<32x256xf32, #tpu.memory_space<vmem>>, vector<32x32xf32>,
    %c0_64 = arith.constant 0 : index
    %c0_65 = arith.constant 0 : index
    %210 = vector.load %arg25[%c0_64, %c0_65] : memref<32x256xf32, #tpu.memory_space<vmem>>, vector<32x256xf32>
    %211 = arith.truncf %210 : vector<32x256xf32> to vector<32x256xbf16>
    %c0_66 = arith.constant 0 : index
    %c0_67 = arith.constant 0 : index
    %212 = vector.load %arg8[%c0_66, %c0_67] : memref<256x256xbf16, #tpu.memory_space<vmem>>, vector<256x256xbf16>
    %cst_68 = arith.constant dense<0.000000e+00> : vector<32x256xf32>
    %213 = tpu.matmul %211, %212, %cst_68 {dimension_numbers = #tpu.dot_dimension_numbers<[1], [0], [0], [1], [0, 0, 1, 1], [], []>} : vector<32x256xbf16>, vector<256x256xbf16>, vector<32x256xf32> -> vector<32x256xf32>
    %c0_69 = arith.constant 0 : index
    %c0_70 = arith.constant 0 : index
    %214 = vector.load %arg9[%c0_69, %c0_70] : memref<1x256xf32, #tpu.memory_space<vmem>>, vector<1x256xf32>
    %215 = vector.broadcast %214 : vector<1x256xf32> to vector<32x256xf32>
    %216 = arith.addf %213, %215 : vector<32x256xf32>
    %217 = arith.addf %3, %216 : vector<32x256xf32>
    %c0_71 = arith.constant 0 : index
    %c0_72 = arith.constant 0 : index
    %218 = vector.load %arg10[%c0_71, %c0_72] : memref<1x256xf32, #tpu.memory_space<vmem>>, vector<1x256xf32>
    %c0_73 = arith.constant 0 : index
    %c0_74 = arith.constant 0 : index
    %219 = vector.load %arg11[%c0_73, %c0_74] : memref<1x256xf32, #tpu.memory_space<vmem>>, vector<1x256xf32>
    %cst_75 = arith.constant dense<0.000000e+00> : vector<32xf32>
    %220 = vector.multi_reduction <add>, %217, %cst_75 [1] : vector<32x256xf32> to vector<32xf32>
    %221 = vector.shape_cast %220 : vector<32xf32> to vector<32x1xf32>
    %cst_76 = arith.constant 0.00446428591 : f32
    %222 = vector.broadcast %cst_76 : f32 to vector<32x1xf32>
    %223 = arith.mulf %221, %222 : vector<32x1xf32>
    %224 = vector.broadcast %223 : vector<32x1xf32> to vector<32x256xf32>
    %225 = arith.subf %217, %224 : vector<32x256xf32>
    %226 = vector.broadcast %9 : vector<1x256xf32> to vector<32x256xf32>
    %227 = arith.mulf %225, %226 : vector<32x256xf32>
    %228 = arith.mulf %227, %227 : vector<32x256xf32>
    %cst_77 = arith.constant dense<0.000000e+00> : vector<32xf32>
    %229 = vector.multi_reduction <add>, %228, %cst_77 [1] : vector<32x256xf32> to vector<32xf32>
    %230 = vector.shape_cast %229 : vector<32xf32> to vector<32x1xf32>
    %cst_78 = arith.constant 0.00446428591 : f32
    %231 = vector.broadcast %cst_78 : f32 to vector<32x1xf32>
    %232 = arith.mulf %230, %231 : vector<32x1xf32>
    %cst_79 = arith.constant 9.99999974E-6 : f32
    %233 = vector.broadcast %cst_79 : f32 to vector<32x1xf32>
    %234 = arith.addf %232, %233 : vector<32x1xf32>
    %235 = math.rsqrt %234 : vector<32x1xf32>
    %236 = vector.broadcast %235 : vector<32x1xf32> to vector<32x256xf32>
    %237 = arith.mulf %227, %236 : vector<32x256xf32>
    %238 = vector.broadcast %218 : vector<1x256xf32> to vector<32x256xf32>
    %239 = arith.mulf %237, %238 : vector<32x256xf32>
    %240 = vector.broadcast %219 : vector<1x256xf32> to vector<32x256xf32>
    %241 = arith.addf %239, %240 : vector<32x256xf32>
    %242 = arith.truncf %241 : vector<32x256xf32> to vector<32x256xbf16>
    %c0_80 = arith.constant 0 : index
    %c0_81 = arith.constant 0 : index
    %243 = vector.load %arg12[%c0_80, %c0_81] : memref<256x256xbf16, #tpu.memory_space<vmem>>, vector<256x256xbf16>
    %cst_82 = arith.constant dense<0.000000e+00> : vector<32x256xf32>
    %244 = tpu.matmul %242, %243, %cst_82 {dimension_numbers = #tpu.dot_dimension_numbers<[1], [0], [0], [1], [0, 0, 1, 1], [], []>} : vector<32x256xbf16>, vector<256x256xbf16>, vector<32x256xf32> -> vector<32x256xf32>
    %c0_83 = arith.constant 0 : index
    %c0_84 = arith.constant 0 : index
    %245 = vector.load %arg13[%c0_83, %c0_84] : memref<1x256xf32, #tpu.memory_space<vmem>>, vector<1x256xf32>
    %246 = vector.broadcast %245 : vector<1x256xf32> to vector<32x256xf32>
    %247 = arith.addf %244, %246 : vector<32x256xf32>
    %cst_85 = arith.constant 0.000000e+00 : f32
    %248 = vector.broadcast %cst_85 : f32 to vector<32x256xf32>
    %249 = arith.maximumf %247, %248 : vector<32x256xf32>
    %250 = arith.truncf %249 : vector<32x256xf32> to vector<32x256xbf16>
    %c0_86 = arith.constant 0 : index
    %c0_87 = arith.constant 0 : index
    %251 = vector.load %arg14[%c0_86, %c0_87] : memref<256x256xbf16, #tpu.memory_space<vmem>>, vector<256x256xbf16>
    %cst_88 = arith.constant dense<0.000000e+00> : vector<32x256xf32>
    %252 = tpu.matmul %250, %251, %cst_88 {dimension_numbers = #tpu.dot_dimension_numbers<[1], [0], [0], [1], [0, 0, 1, 1], [], []>} : vector<32x256xbf16>, vector<256x256xbf16>, vector<32x256xf32> -> vector<32x256xf32>
    %c0_89 = arith.constant 0 : index
    %c0_90 = arith.constant 0 : index
    %253 = vector.load %arg15[%c0_89, %c0_90] : memref<1x256xf32, #tpu.memory_space<vmem>>, vector<1x256xf32>
    %254 = vector.broadcast %253 : vector<1x256xf32> to vector<32x256xf32>
    %255 = arith.addf %252, %254 : vector<32x256xf32>
    %256 = arith.addf %241, %255 : vector<32x256xf32>
    %c0_91 = arith.constant 0 : index
    %c0_92 = arith.constant 0 : index
    %257 = vector.load %arg16[%c0_91, %c0_92] : memref<1x256xf32, #tpu.memory_space<vmem>>, vector<1x256xf32>
    %c0_93 = arith.constant 0 : index
    %c0_94 = arith.constant 0 : index
    %258 = vector.load %arg17[%c0_93, %c0_94] : memref<1x256xf32, #tpu.memory_space<vmem>>, vector<1x256xf32>
    %cst_95 = arith.constant dense<0.000000e+00> : vector<32xf32>
    %259 = vector.multi_reduction <add>, %256, %cst_95 [1] : vector<32x256xf32> to vector<32xf32>
    %260 = vector.shape_cast %259 : vector<32xf32> to vector<32x1xf32>
    %cst_96 = arith.constant 0.00446428591 : f32
    %261 = vector.broadcast %cst_96 : f32 to vector<32x1xf32>
    %262 = arith.mulf %260, %261 : vector<32x1xf32>
    %263 = vector.broadcast %262 : vector<32x1xf32> to vector<32x256xf32>
    %264 = arith.subf %256, %263 : vector<32x256xf32>
    %265 = vector.broadcast %9 : vector<1x256xf32> to vector<32x256xf32>
    %266 = arith.mulf %264, %265 : vector<32x256xf32>
    %267 = arith.mulf %266, %266 : vector<32x256xf32>
    %cst_97 = arith.constant dense<0.000000e+00> : vector<32xf32>
    %268 = vector.multi_reduction <add>, %267, %cst_97 [1] : vector<32x256xf32> to vector<32xf32>
    %269 = vector.shape_cast %268 : vector<32xf32> to vector<32x1xf32>
    %cst_98 = arith.constant 0.00446428591 : f32
    %270 = vector.broadcast %cst_98 : f32 to vector<32x1xf32>
    %271 = arith.mulf %269, %270 : vector<32x1xf32>
    %cst_99 = arith.constant 9.99999974E-6 : f32
    %272 = vector.broadcast %cst_99 : f32 to vector<32x1xf32>
    %273 = arith.addf %271, %272 : vector<32x1xf32>
    %274 = math.rsqrt %273 : vector<32x1xf32>
    %275 = vector.broadcast %274 : vector<32x1xf32> to vector<32x256xf32>
    %276 = arith.mulf %266, %275 : vector<32x256xf32>
    %277 = vector.broadcast %257 : vector<1x256xf32> to vector<32x256xf32>
    %278 = arith.mulf %276, %277 : vector<32x256xf32>
    %279 = vector.broadcast %258 : vector<1x256xf32> to vector<32x256xf32>
    %280 = arith.addf %278, %279 : vector<32x256xf32>
    %281 = arith.mulf %3, %3 : vector<32x256xf32>
    %cst_100 = arith.constant dense<0.000000e+00> : vector<32xf32>
    %282 = vector.multi_reduction <add>, %281, %cst_100 [1] : vector<32x256xf32> to vector<32xf32>
    %283 = vector.shape_cast %282 : vector<32xf32> to vector<32x1xf32>
    %cst_101 = arith.constant 1.000000e-24 : f32
    %284 = vector.broadcast %cst_101 : f32 to vector<32x1xf32>
    %285 = arith.maximumf %283, %284 : vector<32x1xf32>
    %286 = math.rsqrt %285 : vector<32x1xf32>
    %287 = vector.broadcast %286 : vector<32x1xf32> to vector<32x256xf32>
    %288 = arith.mulf %3, %287 : vector<32x256xf32>
    %289 = arith.mulf %280, %280 : vector<32x256xf32>
    %cst_102 = arith.constant dense<0.000000e+00> : vector<32xf32>
    %290 = vector.multi_reduction <add>, %289, %cst_102 [1] : vector<32x256xf32> to vector<32xf32>
    %291 = vector.shape_cast %290 : vector<32xf32> to vector<32x1xf32>
    %cst_103 = arith.constant 1.000000e-24 : f32
    %292 = vector.broadcast %cst_103 : f32 to vector<32x1xf32>
    %293 = arith.maximumf %291, %292 : vector<32x1xf32>
    %294 = math.rsqrt %293 : vector<32x1xf32>
    %295 = vector.broadcast %294 : vector<32x1xf32> to vector<32x256xf32>
    %296 = arith.mulf %280, %295 : vector<32x256xf32>
    %297 = arith.mulf %288, %296 : vector<32x256xf32>
    %cst_104 = arith.constant dense<0.000000e+00> : vector<32xf32>
    %298 = vector.multi_reduction <add>, %297, %cst_104 [1] : vector<32x256xf32> to vector<32xf32>
    %299 = vector.shape_cast %298 : vector<32xf32> to vector<32x1xf32>
    %cst_105 = arith.constant 1.000000e+00 : f32
    %300 = vector.broadcast %cst_105 : f32 to vector<32x1xf32>
    %301 = arith.subf %300, %299 : vector<32x1xf32>
    %302 = arith.truncf %280 : vector<32x256xf32> to vector<32x256xbf16>
    %c0_106 = arith.constant 0 : index
    %c0_107 = arith.constant 0 : index
    %303 = vector.load %arg18[%c0_106, %c0_107] : memref<256x256xbf16, #tpu.memory_space<vmem>>, vector<256x256xbf16>
    %cst_108 = arith.constant dense<0.000000e+00> : vector<32x256xf32>
    %304 = tpu.matmul %302, %303, %cst_108 {dimension_numbers = #tpu.dot_dimension_numbers<[1], [0], [0], [1], [0, 0, 1, 1], [], []>} : vector<32x256xbf16>, vector<256x256xbf16>, vector<32x256xf32> -> vector<32x256xf32>
    %c0_109 = arith.constant 0 : index
    %c0_110 = arith.constant 0 : index
    %305 = vector.load %arg19[%c0_109, %c0_110] : memref<1x256xf32, #tpu.memory_space<vmem>>, vector<1x256xf32>
    %306 = vector.broadcast %301 : vector<32x1xf32> to vector<32x256xf32>
    %307 = vector.broadcast %305 : vector<1x256xf32> to vector<32x256xf32>
    %308 = arith.mulf %306, %307 : vector<32x256xf32>
    %309 = arith.addf %304, %308 : vector<32x256xf32>
    %c0_111 = arith.constant 0 : index
    %c0_112 = arith.constant 0 : index
    %310 = vector.load %arg20[%c0_111, %c0_112] : memref<1x256xf32, #tpu.memory_space<vmem>>, vector<1x256xf32>
    %311 = vector.broadcast %310 : vector<1x256xf32> to vector<32x256xf32>
    %312 = arith.addf %309, %311 : vector<32x256xf32>
    %cst_113 = arith.constant 0.000000e+00 : f32
    %313 = vector.broadcast %cst_113 : f32 to vector<32x256xf32>
    %314 = arith.subf %313, %312 : vector<32x256xf32>
    %315 = math.exp %314 : vector<32x256xf32>
    %cst_114 = arith.constant 1.000000e+00 : f32
    %316 = vector.broadcast %cst_114 : f32 to vector<32x256xf32>
    %317 = arith.addf %316, %315 : vector<32x256xf32>
    %cst_115 = arith.constant 1.000000e+00 : f32
    %318 = vector.broadcast %cst_115 : f32 to vector<32x256xf32>
    %319 = arith.divf %318, %317 : vector<32x256xf32>
    %320 = arith.mulf %280, %319 : vector<32x256xf32>
    %321 = arith.addf %320, %280 : vector<32x256xf32>
    %c0_116 = arith.constant 0 : index
    %c0_117 = arith.constant 0 : index
    %322 = vector.load %arg24[%c0_116, %c0_117] : memref<32x256xf32, #tpu.memory_space<vmem>>, vector<32x256xf32>
    tpu.vector_store %arg24[%c0_116, %c0_117], %321 {strides = array<i32>} : memref<32x256xf32, #tpu.memory_space<vmem>>, vector<32x256xf32>,
    %c1_i32 = arith.constant 1 : i32
    %323 = arith.cmpi eq, %arg0, %c1_i32 : i32
    %324 = arith.extui %323 : i1 to i32
    %c0_i32_118 = arith.constant 0 : i32
    %325 = arith.cmpi ne, %324, %c0_i32_118 : i32
    scf.if %325 {
      %c0_119 = arith.constant 0 : index
      %c0_120 = arith.constant 0 : index
      %326 = vector.load %arg21[%c0_119, %c0_120] : memref<1x256xf32, #tpu.memory_space<vmem>>, vector<1x256xf32>
      %c0_121 = arith.constant 0 : index
      %c0_122 = arith.constant 0 : index
      %327 = vector.load %arg22[%c0_121, %c0_122] : memref<1x256xf32, #tpu.memory_space<vmem>>, vector<1x256xf32>
      %cst_123 = arith.constant dense<0.000000e+00> : vector<32xf32>
      %328 = vector.multi_reduction <add>, %321, %cst_123 [1] : vector<32x256xf32> to vector<32xf32>
      %329 = vector.shape_cast %328 : vector<32xf32> to vector<32x1xf32>
      %cst_124 = arith.constant 0.00446428591 : f32
      %330 = vector.broadcast %cst_124 : f32 to vector<32x1xf32>
      %331 = arith.mulf %329, %330 : vector<32x1xf32>
      %332 = vector.broadcast %331 : vector<32x1xf32> to vector<32x256xf32>
      %333 = arith.subf %321, %332 : vector<32x256xf32>
      %334 = vector.broadcast %9 : vector<1x256xf32> to vector<32x256xf32>
      %335 = arith.mulf %333, %334 : vector<32x256xf32>
      %336 = arith.mulf %335, %335 : vector<32x256xf32>
      %cst_125 = arith.constant dense<0.000000e+00> : vector<32xf32>
      %337 = vector.multi_reduction <add>, %336, %cst_125 [1] : vector<32x256xf32> to vector<32xf32>
      %338 = vector.shape_cast %337 : vector<32xf32> to vector<32x1xf32>
      %cst_126 = arith.constant 0.00446428591 : f32
      %339 = vector.broadcast %cst_126 : f32 to vector<32x1xf32>
      %340 = arith.mulf %338, %339 : vector<32x1xf32>
      %cst_127 = arith.constant 9.99999974E-6 : f32
      %341 = vector.broadcast %cst_127 : f32 to vector<32x1xf32>
      %342 = arith.addf %340, %341 : vector<32x1xf32>
      %343 = math.rsqrt %342 : vector<32x1xf32>
      %344 = vector.broadcast %343 : vector<32x1xf32> to vector<32x256xf32>
      %345 = arith.mulf %335, %344 : vector<32x256xf32>
      %346 = vector.broadcast %326 : vector<1x256xf32> to vector<32x256xf32>
      %347 = arith.mulf %345, %346 : vector<32x256xf32>
      %348 = vector.broadcast %327 : vector<1x256xf32> to vector<32x256xf32>
      %349 = arith.addf %347, %348 : vector<32x256xf32>
      %c0_128 = arith.constant 0 : index
      %c0_129 = arith.constant 0 : index
      %350 = vector.load %arg23[%c0_128, %c0_129] : memref<32x256xf32, #tpu.memory_space<vmem>>, vector<32x256xf32>
      tpu.vector_store %arg23[%c0_128, %c0_129], %349 {strides = array<i32>} : memref<32x256xf32, #tpu.memory_space<vmem>>, vector<32x256xf32>,
    } else {
    }
    return
  }
  func.func @transform_0(%arg0: i32) -> (i32, i32) {
    %c0_i32 = arith.constant 0 : i32
    %c0_i32_0 = arith.constant 0 : i32
    %c0_i32_1 = arith.constant 0 : i32
    return %c0_i32, %c0_i32_0 : i32, i32
  }
  func.func @transform_1(%arg0: i32) -> (i32, i32) {
    %c0_i32 = arith.constant 0 : i32
    %c0_i32_0 = arith.constant 0 : i32
    %c0_i32_1 = arith.constant 0 : i32
    return %c0_i32, %c0_i32_0 : i32, i32
  }
  func.func @transform_2(%arg0: i32) -> (i32, i32) {
    %c0_i32 = arith.constant 0 : i32
    %c0_i32_0 = arith.constant 0 : i32
    %c0_i32_1 = arith.constant 0 : i32
    return %c0_i32, %c0_i32_0 : i32, i32
  }
  func.func @transform_3(%arg0: i32) -> (i32, i32) {
    %c0_i32 = arith.constant 0 : i32
    %c0_i32_0 = arith.constant 0 : i32
    %c0_i32_1 = arith.constant 0 : i32
    return %c0_i32, %c0_i32_0 : i32, i32
  }
  func.func @transform_4(%arg0: i32) -> (i32, i32) {
    %c0_i32 = arith.constant 0 : i32
    %c0_i32_0 = arith.constant 0 : i32
    %c0_i32_1 = arith.constant 0 : i32
    return %c0_i32, %c0_i32_0 : i32, i32
  }
  func.func @transform_5(%arg0: i32) -> (i32, i32) {
    %c0_i32 = arith.constant 0 : i32
    %c0_i32_0 = arith.constant 0 : i32
    %c0_i32_1 = arith.constant 0 : i32
    return %c0_i32, %c0_i32_0 : i32, i32
  }
  func.func @transform_6(%arg0: i32) -> (i32, i32) {
    %c0_i32 = arith.constant 0 : i32
    %c0_i32_0 = arith.constant 0 : i32
    %c0_i32_1 = arith.constant 0 : i32
    return %c0_i32, %c0_i32_0 : i32, i32
  }
  func.func @transform_7(%arg0: i32) -> (i32, i32) {
    %c0_i32 = arith.constant 0 : i32
    %c0_i32_0 = arith.constant 0 : i32
    %c0_i32_1 = arith.constant 0 : i32
    return %c0_i32, %c0_i32_0 : i32, i32
  }
  func.func @transform_8(%arg0: i32) -> (i32, i32) {
    %c0_i32 = arith.constant 0 : i32
    %c0_i32_0 = arith.constant 0 : i32
    %c0_i32_1 = arith.constant 0 : i32
    return %c0_i32, %c0_i32_0 : i32, i32
  }
  func.func @transform_9(%arg0: i32) -> (i32, i32) {
    %c0_i32 = arith.constant 0 : i32
    %c0_i32_0 = arith.constant 0 : i32
    %c0_i32_1 = arith.constant 0 : i32
    return %c0_i32, %c0_i32_0 : i32, i32
  }
  func.func @transform_10(%arg0: i32) -> (i32, i32) {
    %c0_i32 = arith.constant 0 : i32
    %c0_i32_0 = arith.constant 0 : i32
    %c0_i32_1 = arith.constant 0 : i32
    return %c0_i32, %c0_i32_0 : i32, i32
  }
  func.func @transform_11(%arg0: i32) -> (i32, i32) {
    %c0_i32 = arith.constant 0 : i32
    %c0_i32_0 = arith.constant 0 : i32
    %c0_i32_1 = arith.constant 0 : i32
    return %c0_i32, %c0_i32_0 : i32, i32
  }
  func.func @transform_12(%arg0: i32) -> (i32, i32) {
    %c0_i32 = arith.constant 0 : i32
    %c0_i32_0 = arith.constant 0 : i32
    %c0_i32_1 = arith.constant 0 : i32
    return %c0_i32, %c0_i32_0 : i32, i32
  }
  func.func @transform_13(%arg0: i32) -> (i32, i32) {
    %c0_i32 = arith.constant 0 : i32
    %c0_i32_0 = arith.constant 0 : i32
    %c0_i32_1 = arith.constant 0 : i32
    return %c0_i32, %c0_i32_0 : i32, i32
  }
  func.func @transform_14(%arg0: i32) -> (i32, i32) {
    %c0_i32 = arith.constant 0 : i32
    %c0_i32_0 = arith.constant 0 : i32
    %c0_i32_1 = arith.constant 0 : i32
    return %c0_i32, %c0_i32_0 : i32, i32
  }
  func.func @transform_15(%arg0: i32) -> (i32, i32) {
    %c0_i32 = arith.constant 0 : i32
    %c0_i32_0 = arith.constant 0 : i32
    %c0_i32_1 = arith.constant 0 : i32
    return %c0_i32, %c0_i32_0 : i32, i32
  }
  func.func @transform_16(%arg0: i32) -> (i32, i32) {
    %c0_i32 = arith.constant 0 : i32
    %c0_i32_0 = arith.constant 0 : i32
    %c0_i32_1 = arith.constant 0 : i32
    return %c0_i32, %c0_i32_0 : i32, i32
  }
  func.func @transform_17(%arg0: i32) -> (i32, i32) {
    %c0_i32 = arith.constant 0 : i32
    %c0_i32_0 = arith.constant 0 : i32
    %c0_i32_1 = arith.constant 0 : i32
    return %c0_i32, %c0_i32_0 : i32, i32
  }
  func.func @transform_18(%arg0: i32) -> (i32, i32) {
    %c0_i32 = arith.constant 0 : i32
    %c0_i32_0 = arith.constant 0 : i32
    %c0_i32_1 = arith.constant 0 : i32
    return %c0_i32, %c0_i32_0 : i32, i32
  }
  func.func @transform_19(%arg0: i32) -> (i32, i32) {
    %c0_i32 = arith.constant 0 : i32
    %c0_i32_0 = arith.constant 0 : i32
    %c0_i32_1 = arith.constant 0 : i32
    return %c0_i32, %c0_i32_0 : i32, i32
  }
  func.func @transform_20(%arg0: i32) -> (i32, i32) {
    %c0_i32 = arith.constant 0 : i32
    %c0_i32_0 = arith.constant 0 : i32
    %c0_i32_1 = arith.constant 0 : i32
    return %c0_i32, %c0_i32_0 : i32, i32
  }
  func.func @transform_21(%arg0: i32) -> (i32, i32) {
    %c0_i32 = arith.constant 0 : i32
    %c0_i32_0 = arith.constant 0 : i32
    %c0_i32_1 = arith.constant 0 : i32
    return %c0_i32, %c0_i32_0 : i32, i32
  }
  func.func @transform_22(%arg0: i32) -> (i32, i32) {
    %c0_i32 = arith.constant 0 : i32
    %c0_i32_0 = arith.constant 0 : i32
    %c0_i32_1 = arith.constant 0 : i32
    return %c0_i32, %c0_i32_0 : i32, i32
  }
}

</mosaic_0001>

<llo_original>
// kernel: transformer_encoder_forward.1
$region0: #{transformer_encoder_forward.1}
  #allocation0 [shape = 'u32[]', space=smem, size = 0x4, offset = 0x4, fixed_abs, tag = 'smem constant byte address 0x4 - core index']
  #allocation1 [shape = 'u32[144,128]{1,0:T(1,128)}', space=vmem, size = 0x12000, scoped, tag = 'internal scratch']
  #allocation2 [shape = 'f32[32,256]{1,0:T(8,128)}', space=vmem, size = 0x8000, scoped, tag = 'scratch operand']
  #allocation3 [shape = 'f32[32,256]{1,0:T(8,128)}', space=vmem, size = 0x8000, scoped, tag = 'scratch operand']
  %s0 = inlined_call_operand.vmem [shape: f32[32,256], index: 0, kind: input, shape index: {}]
  %s1 = inlined_call_operand.vmem [shape: f32[32,256], index: 1, kind: input, shape index: {}]
  %s2 = inlined_call_operand.vmem [shape: f32[32,32], index: 2, kind: input, shape index: {}]
  %s3 = inlined_call_operand.vmem [shape: bf16[256,512], index: 3, kind: input, shape index: {}]
  %s4 = inlined_call_operand.vmem [shape: f32[1,512], index: 4, kind: input, shape index: {}]
  %s5 = inlined_call_operand.vmem [shape: bf16[256,256], index: 5, kind: input, shape index: {}]
  %s6 = inlined_call_operand.vmem [shape: f32[1,256], index: 6, kind: input, shape index: {}]
  %s7 = inlined_call_operand.hbm [shape: bf16[256,256], index: 7, kind: input, shape index: {}]
  %s8 = inlined_call_operand.vmem [shape: f32[1,256], index: 8, kind: input, shape index: {}]
  %s9 = inlined_call_operand.vmem [shape: f32[1,256], index: 9, kind: input, shape index: {}]
  %s10 = inlined_call_operand.vmem [shape: f32[1,256], index: 10, kind: input, shape index: {}]
  %s11 = inlined_call_operand.hbm [shape: bf16[256,256], index: 11, kind: input, shape index: {}]
  %s12 = inlined_call_operand.vmem [shape: f32[1,256], index: 12, kind: input, shape index: {}]
  %s13 = inlined_call_operand.hbm [shape: bf16[256,256], index: 13, kind: input, shape index: {}]
  %s14 = inlined_call_operand.vmem [shape: f32[1,256], index: 14, kind: input, shape index: {}]
  %s15 = inlined_call_operand.vmem [shape: f32[1,256], index: 15, kind: input, shape index: {}]
  %s16 = inlined_call_operand.vmem [shape: f32[1,256], index: 16, kind: input, shape index: {}]
  %s17 = inlined_call_operand.hbm [shape: bf16[256,256], index: 17, kind: input, shape index: {}]
  %s18 = inlined_call_operand.vmem [shape: f32[1,256], index: 18, kind: input, shape index: {}]
  %s19 = inlined_call_operand.vmem [shape: f32[1,256], index: 19, kind: input, shape index: {}]
  %s20 = inlined_call_operand.vmem [shape: f32[1,256], index: 20, kind: input, shape index: {}]
  %s21 = inlined_call_operand.vmem [shape: f32[1,256], index: 21, kind: input, shape index: {}]
  %s22 = inlined_call_operand.vmem [shape: f32[32,256], index: 22, kind: output, shape index: {}]
  %s23 = sld [smem:[#allocation0]]
  $region145: #{transformer_encoder_forward.1} parent=0
    _
  %s25 = ssub.s32 1, %s23
  %s26 = scalar_select 0, %s25, %s23
  $region1: #{transformer_encoder_forward.1} parent=0
    #allocation4 [shape = 'u8[131072]{0}', space=vmem, size = 0x20000, scoped, tag = 'input window, operand 7, single buffered']
    #allocation5 [shape = 's32[2]{0}', space=sflag, size = 0x8, scoped, tag = 'scoped memory for transformer_encoder_forward.1']
    #allocation6 [shape = 'u8[131072]{0}', space=vmem, size = 0x20000, scoped, tag = 'input window, operand 11, single buffered']
    #allocation7 [shape = 's32[1]{0}', space=sflag, size = 0x4, scoped, tag = 'scoped memory for transformer_encoder_forward.1']
    #allocation8 [shape = 'u8[131072]{0}', space=vmem, size = 0x20000, scoped, tag = 'input window, operand 13, single buffered']
    #allocation9 [shape = 'u8[131072]{0}', space=vmem, size = 0x20000, scoped, tag = 'input window, operand 17, single buffered']
    #allocation10 [shape = 's32[1]{0}', space=sflag, size = 0x4, scoped, tag = 'scoped memory for transformer_encoder_forward.1']
    %27 = vsyncpa [#allocation5], 0
    %28 = vsyncpa [#allocation7], 0
    %29 = vsyncpa [#allocation10], 0
    loop: start=0, step=1, limit=4
    $region2: #{transformer_encoder_forward.1} parent=1 // loop_pre_header
      _
    $region3: #{transformer_encoder_forward.1} parent=1 // loop_header
      %s31 = sphi 0, %s35
      %p32 = scmp.ge.s32.totalorder %s31, 4
      %s39 = sphi 0, %s39
      %s41 = sphi 0, %s39
      %s42 = sphi 0, %s41
      %s56 = sphi 0, %s42
      %s60 = sphi 0, %s60
      %s62 = sphi 0, %s60
      %s63 = sphi 0, %s62
      %s77 = sphi 0, %s63
      %s81 = sphi 0, %s81
      %s83 = sphi 0, %s81
      %s84 = sphi 0, %s83
      %s98 = sphi 0, %s84
      %s102 = sphi 0, %s102
      %s104 = sphi 0, %s102
      %s105 = sphi 0, %s104
      %s119 = sphi 0, %s105
      %s123 = sphi 0, %s123
      %s125 = sphi 0, %s123
      %s126 = sphi 0, %s125
      %s140 = sphi 0, %s126
      %s144 = sphi 0, %s144
      %s146 = sphi 0, %s144
      %s147 = sphi 0, %s146
      %s161 = sphi 0, %s147
      %s165 = sphi 0, %s165
      %s167 = sphi 0, %s165
      %s168 = sphi 0, %s167
      %s182 = sphi 0, %s168
      %s186 = sphi 0, %s186
      %s188 = sphi 0, %s186
      %s189 = sphi 0, %s188
      %s203 = sphi 0, %s189
      %s207 = sphi 0, %s207
      %s209 = sphi 0, %s207
      %s210 = sphi 0, %s209
      %s224 = sphi 0, %s210
      %s228 = sphi 0, %s228
      %s230 = sphi 0, %s228
      %s231 = sphi 0, %s230
      %s245 = sphi 0, %s231
      %s249 = sphi 0, %s249
      %s251 = sphi 0, %s249
      %s252 = sphi 0, %s251
      %s266 = sphi 0, %s252
      %s270 = sphi 0, %s270
      %s272 = sphi 0, %s270
      %s273 = sphi 0, %s272
      %s287 = sphi 0, %s273
      %s291 = sphi 0, %s291
      %s293 = sphi 0, %s291
      %s294 = sphi 0, %s293
      %s308 = sphi 0, %s294
      %s312 = sphi 0, %s312
      %s314 = sphi 0, %s312
      %s315 = sphi 0, %s314
      %s329 = sphi 0, %s315
      %s333 = sphi 0, %s333
      %s335 = sphi 0, %s333
      %s336 = sphi 0, %s335
      %s350 = sphi 0, %s336
      %s354 = sphi 0, %s354
      %s356 = sphi 0, %s354
      %s357 = sphi 0, %s356
      %s371 = sphi 0, %s357
      %s375 = sphi 0, %s375
      %s377 = sphi 0, %s375
      %s378 = sphi 0, %s377
      %s392 = sphi 0, %s378
      %s396 = sphi 0, %s396
      %s398 = sphi 0, %s396
      %s399 = sphi 0, %s398
      %s413 = sphi 0, %s399
      %s417 = sphi 0, %s417
      %s419 = sphi 0, %s417
      %s420 = sphi 0, %s419
      %s434 = sphi 0, %s420
      %s438 = sphi 0, %s438
      %s440 = sphi 0, %s438
      %s441 = sphi 0, %s440
      %s455 = sphi 0, %s441
      %s459 = sphi 0, %s459
      %s461 = sphi 0, %s459
      %s462 = sphi 0, %s461
      %s476 = sphi 0, %s462
      %s480 = sphi 0, %s480
      %s482 = sphi 0, %s480
      %s483 = sphi 0, %s482
      %s497 = sphi 0, %s483
      %s501 = sphi 0, %s501
      %s503 = sphi 0, %s501
      %s504 = sphi 0, %s503
      %s518 = sphi 0, %s504
    $region4: #{transformer_encoder_forward.1} parent=1 // loop_header_branch
      %34 = sbr.rel (%p32) target = $region8
    $region5: #{transformer_encoder_forward.1} parent=1 // loop_body
      %s36 = ssub.s32 %s31, 1
      %s37 = ssub.s32 %s31, 2
      %s38 = sadd.s32 %s31, 1
      %s40 = sadd.s32 %s39, 1
      %p43 = scmp.eq.s32.totalorder %s31, 1
      %p44 = scmp.ne.s32.totalorder %s39, %s41
      %p45 = scmp.eq.s32.totalorder %s31, 0
      %p46 = por %p44, %p45
      %p47 = scmp.ne.s32.totalorder %s39, %s41
      %p48 = scmp.eq.s32.totalorder %s36, 1
      %p49 = por %p47, %p48
      %p50 = scmp.ne.s32.totalorder %s41, %s42
      %p51 = scmp.eq.s32.totalorder %s36, 0
      %p52 = por %p50, %p51
      %p53 = scmp.ne.s32.totalorder %s41, %s42
      %p54 = scmp.eq.s32.totalorder %s37, 1
      %p55 = por %p53, %p54
      %p57 = scmp.ne.s32.totalorder %s42, %s56
      %p58 = scmp.eq.s32.totalorder %s37, 0
      %p59 = por %p57, %p58
      %s61 = sadd.s32 %s60, 1
      %p64 = scmp.eq.s32.totalorder %s31, 1
      %p65 = scmp.ne.s32.totalorder %s60, %s62
      %p66 = scmp.eq.s32.totalorder %s31, 0
      %p67 = por %p65, %p66
      %p68 = scmp.ne.s32.totalorder %s60, %s62
      %p69 = scmp.eq.s32.totalorder %s36, 1
      %p70 = por %p68, %p69
      %p71 = scmp.ne.s32.totalorder %s62, %s63
      %p72 = scmp.eq.s32.totalorder %s36, 0
      %p73 = por %p71, %p72
      %p74 = scmp.ne.s32.totalorder %s62, %s63
      %p75 = scmp.eq.s32.totalorder %s37, 1
      %p76 = por %p74, %p75
      %p78 = scmp.ne.s32.totalorder %s63, %s77
      %p79 = scmp.eq.s32.totalorder %s37, 0
      %p80 = por %p78, %p79
      %s82 = sadd.s32 %s81, 1
      %p85 = scmp.eq.s32.totalorder %s31, 1
      %p86 = scmp.ne.s32.totalorder %s81, %s83
      %p87 = scmp.eq.s32.totalorder %s31, 0
      %p88 = por %p86, %p87
      %p89 = scmp.ne.s32.totalorder %s81, %s83
      %p90 = scmp.eq.s32.totalorder %s36, 1
      %p91 = por %p89, %p90
      %p92 = scmp.ne.s32.totalorder %s83, %s84
      %p93 = scmp.eq.s32.totalorder %s36, 0
      %p94 = por %p92, %p93
      %p95 = scmp.ne.s32.totalorder %s83, %s84
      %p96 = scmp.eq.s32.totalorder %s37, 1
      %p97 = por %p95, %p96
      %p99 = scmp.ne.s32.totalorder %s84, %s98
      %p100 = scmp.eq.s32.totalorder %s37, 0
      %p101 = por %p99, %p100
      %s103 = sadd.s32 %s102, 1
      %p106 = scmp.eq.s32.totalorder %s31, 1
      %p107 = scmp.ne.s32.totalorder %s102, %s104
      %p108 = scmp.eq.s32.totalorder %s31, 0
      %p109 = por %p107, %p108
      %p110 = scmp.ne.s32.totalorder %s102, %s104
      %p111 = scmp.eq.s32.totalorder %s36, 1
      %p112 = por %p110, %p111
      %p113 = scmp.ne.s32.totalorder %s104, %s105
      %p114 = scmp.eq.s32.totalorder %s36, 0
      %p115 = por %p113, %p114
      %p116 = scmp.ne.s32.totalorder %s104, %s105
      %p117 = scmp.eq.s32.totalorder %s37, 1
      %p118 = por %p116, %p117
      %p120 = scmp.ne.s32.totalorder %s105, %s119
      %p121 = scmp.eq.s32.totalorder %s37, 0
      %p122 = por %p120, %p121
      %s124 = sadd.s32 %s123, 1
      %p127 = scmp.eq.s32.totalorder %s31, 1
      %p128 = scmp.ne.s32.totalorder %s123, %s125
      %p129 = scmp.eq.s32.totalorder %s31, 0
      %p130 = por %p128, %p129
      %p131 = scmp.ne.s32.totalorder %s123, %s125
      %p132 = scmp.eq.s32.totalorder %s36, 1
      %p133 = por %p131, %p132
      %p134 = scmp.ne.s32.totalorder %s125, %s126
      %p135 = scmp.eq.s32.totalorder %s36, 0
      %p136 = por %p134, %p135
      %p137 = scmp.ne.s32.totalorder %s125, %s126
      %p138 = scmp.eq.s32.totalorder %s37, 1
      %p139 = por %p137, %p138
      %p141 = scmp.ne.s32.totalorder %s126, %s140
      %p142 = scmp.eq.s32.totalorder %s37, 0
      %p143 = por %p141, %p142
      %s145 = sadd.s32 %s144, 1
      %p148 = scmp.eq.s32.totalorder %s31, 1
      %p149 = scmp.ne.s32.totalorder %s144, %s146
      %p150 = scmp.eq.s32.totalorder %s31, 0
      %p151 = por %p149, %p150
      %p152 = scmp.ne.s32.totalorder %s144, %s146
      %p153 = scmp.eq.s32.totalorder %s36, 1
      %p154 = por %p152, %p153
      %p155 = scmp.ne.s32.totalorder %s146, %s147
      %p156 = scmp.eq.s32.totalorder %s36, 0
      %p157 = por %p155, %p156
      %p158 = scmp.ne.s32.totalorder %s146, %s147
      %p159 = scmp.eq.s32.totalorder %s37, 1
      %p160 = por %p158, %p159
      %p162 = scmp.ne.s32.totalorder %s147, %s161
      %p163 = scmp.eq.s32.totalorder %s37, 0
      %p164 = por %p162, %p163
      %s166 = sadd.s32 %s165, 1
      %p169 = scmp.eq.s32.totalorder %s31, 1
      %p170 = scmp.ne.s32.totalorder %s165, %s167
      %p171 = scmp.eq.s32.totalorder %s31, 0
      %p172 = por %p170, %p171
      %p173 = scmp.ne.s32.totalorder %s165, %s167
      %p174 = scmp.eq.s32.totalorder %s36, 1
      %p175 = por %p173, %p174
      %p176 = scmp.ne.s32.totalorder %s167, %s168
      %p177 = scmp.eq.s32.totalorder %s36, 0
      %p178 = por %p176, %p177
      %p179 = scmp.ne.s32.totalorder %s167, %s168
      %p180 = scmp.eq.s32.totalorder %s37, 1
      %p181 = por %p179, %p180
      %p183 = scmp.ne.s32.totalorder %s168, %s182
      %p184 = scmp.eq.s32.totalorder %s37, 0
      %p185 = por %p183, %p184
      %s187 = sadd.s32 %s186, 1
      %p190 = scmp.eq.s32.totalorder %s31, 1
      %p191 = scmp.ne.s32.totalorder %s186, %s188
      %p192 = scmp.eq.s32.totalorder %s31, 0
      %p193 = por %p191, %p192
      %p194 = scmp.ne.s32.totalorder %s186, %s188
      %p195 = scmp.eq.s32.totalorder %s36, 1
      %p196 = por %p194, %p195
      %p197 = scmp.ne.s32.totalorder %s188, %s189
      %p198 = scmp.eq.s32.totalorder %s36, 0
      %p199 = por %p197, %p198
      %p200 = scmp.ne.s32.totalorder %s188, %s189
      %p201 = scmp.eq.s32.totalorder %s37, 1
      %p202 = por %p200, %p201
      %p204 = scmp.ne.s32.totalorder %s189, %s203
      %p205 = scmp.eq.s32.totalorder %s37, 0
      %p206 = por %p204, %p205
      %s208 = sadd.s32 %s207, 1
      %p211 = scmp.eq.s32.totalorder %s31, 1
      %p212 = scmp.ne.s32.totalorder %s207, %s209
      %p213 = scmp.eq.s32.totalorder %s31, 0
      %p214 = por %p212, %p213
      %p215 = scmp.ne.s32.totalorder %s207, %s209
      %p216 = scmp.eq.s32.totalorder %s36, 1
      %p217 = por %p215, %p216
      %p218 = scmp.ne.s32.totalorder %s209, %s210
      %p219 = scmp.eq.s32.totalorder %s36, 0
      %p220 = por %p218, %p219
      %p221 = scmp.ne.s32.totalorder %s209, %s210
      %p222 = scmp.eq.s32.totalorder %s37, 1
      %p223 = por %p221, %p222
      %p225 = scmp.ne.s32.totalorder %s210, %s224
      %p226 = scmp.eq.s32.totalorder %s37, 0
      %p227 = por %p225, %p226
      %s229 = sadd.s32 %s228, 1
      %p232 = scmp.eq.s32.totalorder %s31, 1
      %p233 = scmp.ne.s32.totalorder %s228, %s230
      %p234 = scmp.eq.s32.totalorder %s31, 0
      %p235 = por %p233, %p234
      %p236 = scmp.ne.s32.totalorder %s228, %s230
      %p237 = scmp.eq.s32.totalorder %s36, 1
      %p238 = por %p236, %p237
      %p239 = scmp.ne.s32.totalorder %s230, %s231
      %p240 = scmp.eq.s32.totalorder %s36, 0
      %p241 = por %p239, %p240
      %p242 = scmp.ne.s32.totalorder %s230, %s231
      %p243 = scmp.eq.s32.totalorder %s37, 1
      %p244 = por %p242, %p243
      %p246 = scmp.ne.s32.totalorder %s231, %s245
      %p247 = scmp.eq.s32.totalorder %s37, 0
      %p248 = por %p246, %p247
      %s250 = sadd.s32 %s249, 1
      %p253 = scmp.eq.s32.totalorder %s31, 1
      %p254 = scmp.ne.s32.totalorder %s249, %s251
      %p255 = scmp.eq.s32.totalorder %s31, 0
      %p256 = por %p254, %p255
      %p257 = scmp.ne.s32.totalorder %s249, %s251
      %p258 = scmp.eq.s32.totalorder %s36, 1
      %p259 = por %p257, %p258
      %p260 = scmp.ne.s32.totalorder %s251, %s252
      %p261 = scmp.eq.s32.totalorder %s36, 0
      %p262 = por %p260, %p261
      %p263 = scmp.ne.s32.totalorder %s251, %s252
      %p264 = scmp.eq.s32.totalorder %s37, 1
      %p265 = por %p263, %p264
      %p267 = scmp.ne.s32.totalorder %s252, %s266
      %p268 = scmp.eq.s32.totalorder %s37, 0
      %p269 = por %p267, %p268
      %s271 = sadd.s32 %s270, 1
      %p274 = scmp.eq.s32.totalorder %s31, 1
      %p275 = scmp.ne.s32.totalorder %s270, %s272
      %p276 = scmp.eq.s32.totalorder %s31, 0
      %p277 = por %p275, %p276
      %p278 = scmp.ne.s32.totalorder %s270, %s272
      %p279 = scmp.eq.s32.totalorder %s36, 1
      %p280 = por %p278, %p279
      %p281 = scmp.ne.s32.totalorder %s272, %s273
      %p282 = scmp.eq.s32.totalorder %s36, 0
      %p283 = por %p281, %p282
      %p284 = scmp.ne.s32.totalorder %s272, %s273
      %p285 = scmp.eq.s32.totalorder %s37, 1
      %p286 = por %p284, %p285
      %p288 = scmp.ne.s32.totalorder %s273, %s287
      %p289 = scmp.eq.s32.totalorder %s37, 0
      %p290 = por %p288, %p289
      %s292 = sadd.s32 %s291, 1
      %p295 = scmp.eq.s32.totalorder %s31, 1
      %p296 = scmp.ne.s32.totalorder %s291, %s293
      %p297 = scmp.eq.s32.totalorder %s31, 0
      %p298 = por %p296, %p297
      %p299 = scmp.ne.s32.totalorder %s291, %s293
      %p300 = scmp.eq.s32.totalorder %s36, 1
      %p301 = por %p299, %p300
      %p302 = scmp.ne.s32.totalorder %s293, %s294
      %p303 = scmp.eq.s32.totalorder %s36, 0
      %p304 = por %p302, %p303
      %p305 = scmp.ne.s32.totalorder %s293, %s294
      %p306 = scmp.eq.s32.totalorder %s37, 1
      %p307 = por %p305, %p306
      %p309 = scmp.ne.s32.totalorder %s294, %s308
      %p310 = scmp.eq.s32.totalorder %s37, 0
      %p311 = por %p309, %p310
      %s313 = sadd.s32 %s312, 1
      %p316 = scmp.eq.s32.totalorder %s31, 1
      %p317 = scmp.ne.s32.totalorder %s312, %s314
      %p318 = scmp.eq.s32.totalorder %s31, 0
      %p319 = por %p317, %p318
      %p320 = scmp.ne.s32.totalorder %s312, %s314
      %p321 = scmp.eq.s32.totalorder %s36, 1
      %p322 = por %p320, %p321
      %p323 = scmp.ne.s32.totalorder %s314, %s315
      %p324 = scmp.eq.s32.totalorder %s36, 0
      %p325 = por %p323, %p324
      %p326 = scmp.ne.s32.totalorder %s314, %s315
      %p327 = scmp.eq.s32.totalorder %s37, 1
      %p328 = por %p326, %p327
      %p330 = scmp.ne.s32.totalorder %s315, %s329
      %p331 = scmp.eq.s32.totalorder %s37, 0
      %p332 = por %p330, %p331
      %s334 = sadd.s32 %s333, 1
      %p337 = scmp.eq.s32.totalorder %s31, 1
      %p338 = scmp.ne.s32.totalorder %s333, %s335
      %p339 = scmp.eq.s32.totalorder %s31, 0
      %p340 = por %p338, %p339
      %p341 = scmp.ne.s32.totalorder %s333, %s335
      %p342 = scmp.eq.s32.totalorder %s36, 1
      %p343 = por %p341, %p342
      %p344 = scmp.ne.s32.totalorder %s335, %s336
      %p345 = scmp.eq.s32.totalorder %s36, 0
      %p346 = por %p344, %p345
      %p347 = scmp.ne.s32.totalorder %s335, %s336
      %p348 = scmp.eq.s32.totalorder %s37, 1
      %p349 = por %p347, %p348
      %p351 = scmp.ne.s32.totalorder %s336, %s350
      %p352 = scmp.eq.s32.totalorder %s37, 0
      %p353 = por %p351, %p352
      %s355 = sadd.s32 %s354, 1
      %p358 = scmp.eq.s32.totalorder %s31, 1
      %p359 = scmp.ne.s32.totalorder %s354, %s356
      %p360 = scmp.eq.s32.totalorder %s31, 0
      %p361 = por %p359, %p360
      %p362 = scmp.ne.s32.totalorder %s354, %s356
      %p363 = scmp.eq.s32.totalorder %s36, 1
      %p364 = por %p362, %p363
      %p365 = scmp.ne.s32.totalorder %s356, %s357
      %p366 = scmp.eq.s32.totalorder %s36, 0
      %p367 = por %p365, %p366
      %p368 = scmp.ne.s32.totalorder %s356, %s357
      %p369 = scmp.eq.s32.totalorder %s37, 1
      %p370 = por %p368, %p369
      %p372 = scmp.ne.s32.totalorder %s357, %s371
      %p373 = scmp.eq.s32.totalorder %s37, 0
      %p374 = por %p372, %p373
      %s376 = sadd.s32 %s375, 1
      %p379 = scmp.eq.s32.totalorder %s31, 1
      %p380 = scmp.ne.s32.totalorder %s375, %s377
      %p381 = scmp.eq.s32.totalorder %s31, 0
      %p382 = por %p380, %p381
      %p383 = scmp.ne.s32.totalorder %s375, %s377
      %p384 = scmp.eq.s32.totalorder %s36, 1
      %p385 = por %p383, %p384
      %p386 = scmp.ne.s32.totalorder %s377, %s378
      %p387 = scmp.eq.s32.totalorder %s36, 0
      %p388 = por %p386, %p387
      %p389 = scmp.ne.s32.totalorder %s377, %s378
      %p390 = scmp.eq.s32.totalorder %s37, 1
      %p391 = por %p389, %p390
      %p393 = scmp.ne.s32.totalorder %s378, %s392
      %p394 = scmp.eq.s32.totalorder %s37, 0
      %p395 = por %p393, %p394
      %s397 = sadd.s32 %s396, 1
      %p400 = scmp.eq.s32.totalorder %s31, 1
      %p401 = scmp.ne.s32.totalorder %s396, %s398
      %p402 = scmp.eq.s32.totalorder %s31, 0
      %p403 = por %p401, %p402
      %p404 = scmp.ne.s32.totalorder %s396, %s398
      %p405 = scmp.eq.s32.totalorder %s36, 1
      %p406 = por %p404, %p405
      %p407 = scmp.ne.s32.totalorder %s398, %s399
      %p408 = scmp.eq.s32.totalorder %s36, 0
      %p409 = por %p407, %p408
      %p410 = scmp.ne.s32.totalorder %s398, %s399
      %p411 = scmp.eq.s32.totalorder %s37, 1
      %p412 = por %p410, %p411
      %p414 = scmp.ne.s32.totalorder %s399, %s413
      %p415 = scmp.eq.s32.totalorder %s37, 0
      %p416 = por %p414, %p415
      %s418 = sadd.s32 %s417, 1
      %p421 = scmp.eq.s32.totalorder %s31, 1
      %p422 = scmp.ne.s32.totalorder %s417, %s419
      %p423 = scmp.eq.s32.totalorder %s31, 0
      %p424 = por %p422, %p423
      %p425 = scmp.ne.s32.totalorder %s417, %s419
      %p426 = scmp.eq.s32.totalorder %s36, 1
      %p427 = por %p425, %p426
      %p428 = scmp.ne.s32.totalorder %s419, %s420
      %p429 = scmp.eq.s32.totalorder %s36, 0
      %p430 = por %p428, %p429
      %p431 = scmp.ne.s32.totalorder %s419, %s420
      %p432 = scmp.eq.s32.totalorder %s37, 1
      %p433 = por %p431, %p432
      %p435 = scmp.ne.s32.totalorder %s420, %s434
      %p436 = scmp.eq.s32.totalorder %s37, 0
      %p437 = por %p435, %p436
      %s439 = sadd.s32 %s438, 1
      %p442 = scmp.eq.s32.totalorder %s31, 1
      %p443 = scmp.ne.s32.totalorder %s438, %s440
      %p444 = scmp.eq.s32.totalorder %s31, 0
      %p445 = por %p443, %p444
      %p446 = scmp.ne.s32.totalorder %s438, %s440
      %p447 = scmp.eq.s32.totalorder %s36, 1
      %p448 = por %p446, %p447
      %p449 = scmp.ne.s32.totalorder %s440, %s441
      %p450 = scmp.eq.s32.totalorder %s36, 0
      %p451 = por %p449, %p450
      %p452 = scmp.ne.s32.totalorder %s440, %s441
      %p453 = scmp.eq.s32.totalorder %s37, 1
      %p454 = por %p452, %p453
      %p456 = scmp.ne.s32.totalorder %s441, %s455
      %p457 = scmp.eq.s32.totalorder %s37, 0
      %p458 = por %p456, %p457
      %s460 = sadd.s32 %s459, 1
      %p463 = scmp.eq.s32.totalorder %s31, 1
      %p464 = scmp.ne.s32.totalorder %s459, %s461
      %p465 = scmp.eq.s32.totalorder %s31, 0
      %p466 = por %p464, %p465
      %p467 = scmp.ne.s32.totalorder %s459, %s461
      %p468 = scmp.eq.s32.totalorder %s36, 1
      %p469 = por %p467, %p468
      %p470 = scmp.ne.s32.totalorder %s461, %s462
      %p471 = scmp.eq.s32.totalorder %s36, 0
      %p472 = por %p470, %p471
      %p473 = scmp.ne.s32.totalorder %s461, %s462
      %p474 = scmp.eq.s32.totalorder %s37, 1
      %p475 = por %p473, %p474
      %p477 = scmp.ne.s32.totalorder %s462, %s476
      %p478 = scmp.eq.s32.totalorder %s37, 0
      %p479 = por %p477, %p478
      %s481 = sadd.s32 %s480, 1
      %p484 = scmp.eq.s32.totalorder %s31, 1
      %p485 = scmp.ne.s32.totalorder %s480, %s482
      %p486 = scmp.eq.s32.totalorder %s31, 0
      %p487 = por %p485, %p486
      %p488 = scmp.ne.s32.totalorder %s480, %s482
      %p489 = scmp.eq.s32.totalorder %s36, 1
      %p490 = por %p488, %p489
      %p491 = scmp.ne.s32.totalorder %s482, %s483
      %p492 = scmp.eq.s32.totalorder %s36, 0
      %p493 = por %p491, %p492
      %p494 = scmp.ne.s32.totalorder %s482, %s483
      %p495 = scmp.eq.s32.totalorder %s37, 1
      %p496 = por %p494, %p495
      %p498 = scmp.ne.s32.totalorder %s483, %s497
      %p499 = scmp.eq.s32.totalorder %s37, 0
      %p500 = por %p498, %p499
      %s502 = sadd.s32 %s501, 1
      %p505 = scmp.eq.s32.totalorder %s31, 1
      %p506 = scmp.ne.s32.totalorder %s501, %s503
      %p507 = scmp.eq.s32.totalorder %s31, 0
      %p508 = por %p506, %p507
      %p509 = scmp.ne.s32.totalorder %s501, %s503
      %p510 = scmp.eq.s32.totalorder %s36, 1
      %p511 = por %p509, %p510
      %p512 = scmp.ne.s32.totalorder %s503, %s504
      %p513 = scmp.eq.s32.totalorder %s36, 0
      %p514 = por %p512, %p513
      %p515 = scmp.ne.s32.totalorder %s503, %s504
      %p516 = scmp.eq.s32.totalorder %s37, 1
      %p517 = por %p515, %p516
      %p519 = scmp.ne.s32.totalorder %s504, %s518
      %p520 = scmp.eq.s32.totalorder %s37, 0
      %p521 = por %p519, %p520
      %p522 = scmp.le.s32.totalorder 1, %s31
      %p523 = scmp.lt.s32.totalorder %s31, 3
      %p524 = pnand %p522, %p523
      %p525 = pneg %p524
      // Predicated region
      $region9: #{transformer_encoder_forward.1} parent=5 // pred_check
        _
      $region10: #{transformer_encoder_forward.1} parent=5 // pred_check_branch
        %527 = sbr.rel (%p524) target = $region12
      $region11: #{transformer_encoder_forward.1} parent=5 // pred_region
        %s528 = ssub.s32 %s31, 1
        // Predicated region
        $region13: #{transformer_encoder_forward.1} parent=11 // pred_check
          %p529 = pneg %p52
        $region14: #{transformer_encoder_forward.1} parent=11 // pred_check_branch
          %531 = sbr.rel (%p529) target = $region16
        $region15: #{transformer_encoder_forward.1} parent=11 // pred_region
          _
        $region16: #{transformer_encoder_forward.1} parent=11 // pred_fallthru
          _
        // Predicated region
        $region17: #{transformer_encoder_forward.1} parent=11 // pred_check
          %p532 = pneg %p73
        $region18: #{transformer_encoder_forward.1} parent=11 // pred_check_branch
          %534 = sbr.rel (%p532) target = $region20
        $region19: #{transformer_encoder_forward.1} parent=11 // pred_region
          _
        $region20: #{transformer_encoder_forward.1} parent=11 // pred_fallthru
          _
        // Predicated region
        $region21: #{transformer_encoder_forward.1} parent=11 // pred_check
          %p535 = pneg %p94
        $region22: #{transformer_encoder_forward.1} parent=11 // pred_check_branch
          %537 = sbr.rel (%p535) target = $region24
        $region23: #{transformer_encoder_forward.1} parent=11 // pred_region
          _
        $region24: #{transformer_encoder_forward.1} parent=11 // pred_fallthru
          _
        // Predicated region
        $region25: #{transformer_encoder_forward.1} parent=11 // pred_check
          %p538 = pneg %p115
        $region26: #{transformer_encoder_forward.1} parent=11 // pred_check_branch
          %540 = sbr.rel (%p538) target = $region28
        $region27: #{transformer_encoder_forward.1} parent=11 // pred_region
          _
        $region28: #{transformer_encoder_forward.1} parent=11 // pred_fallthru
          _
        // Predicated region
        $region29: #{transformer_encoder_forward.1} parent=11 // pred_check
          %p541 = pneg %p136
        $region30: #{transformer_encoder_forward.1} parent=11 // pred_check_branch
          %543 = sbr.rel (%p541) target = $region32
        $region31: #{transformer_encoder_forward.1} parent=11 // pred_region
          _
        $region32: #{transformer_encoder_forward.1} parent=11 // pred_fallthru
          _
        // Predicated region
        $region33: #{transformer_encoder_forward.1} parent=11 // pred_check
          %p544 = pneg %p157
        $region34: #{transformer_encoder_forward.1} parent=11 // pred_check_branch
          %546 = sbr.rel (%p544) target = $region36
        $region35: #{transformer_encoder_forward.1} parent=11 // pred_region
          _
        $region36: #{transformer_encoder_forward.1} parent=11 // pred_fallthru
          _
        // Predicated region
        $region37: #{transformer_encoder_forward.1} parent=11 // pred_check
          %p547 = pneg %p178
        $region38: #{transformer_encoder_forward.1} parent=11 // pred_check_branch
          %549 = sbr.rel (%p547) target = $region40
        $region39: #{transformer_encoder_forward.1} parent=11 // pred_region
          _
        $region40: #{transformer_encoder_forward.1} parent=11 // pred_fallthru
          _
        // Predicated region
        $region41: #{transformer_encoder_forward.1} parent=11 // pred_check
          %p550 = pneg %p199
        $region42: #{transformer_encoder_forward.1} parent=11 // pred_check_branch
          %552 = sbr.rel (%p550) target = $region44
        $region43: #{transformer_encoder_forward.1} parent=11 // pred_region
          %s554 = ssub.s32 4096, 4096
          %555 = vsyncadd [#allocation5], %s554
          %s556 = sshll.u32 [#allocation4], 4
          %s557 = int_to_ptr.vmem [resolvable:$true] %s556
          %562 = dma.hbm_to_vmem [thread:$0]  %s7, 4096, %s557, [#allocation5], 128, 128, 8
        $region44: #{transformer_encoder_forward.1} parent=11 // pred_fallthru
          _
        // Predicated region
        $region45: #{transformer_encoder_forward.1} parent=11 // pred_check
          %p563 = pneg %p220
        $region46: #{transformer_encoder_forward.1} parent=11 // pred_check_branch
          %565 = sbr.rel (%p563) target = $region48
        $region47: #{transformer_encoder_forward.1} parent=11 // pred_region
          _
        $region48: #{transformer_encoder_forward.1} parent=11 // pred_fallthru
          _
        // Predicated region
        $region49: #{transformer_encoder_forward.1} parent=11 // pred_check
          %p566 = pneg %p241
        $region50: #{transformer_encoder_forward.1} parent=11 // pred_check_branch
          %568 = sbr.rel (%p566) target = $region52
        $region51: #{transformer_encoder_forward.1} parent=11 // pred_region
          _
        $region52: #{transformer_encoder_forward.1} parent=11 // pred_fallthru
          _
        // Predicated region
        $region53: #{transformer_encoder_forward.1} parent=11 // pred_check
          %p569 = pneg %p262
        $region54: #{transformer_encoder_forward.1} parent=11 // pred_check_branch
          %571 = sbr.rel (%p569) target = $region56
        $region55: #{transformer_encoder_forward.1} parent=11 // pred_region
          _
        $region56: #{transformer_encoder_forward.1} parent=11 // pred_fallthru
          _
        // Predicated region
        $region57: #{transformer_encoder_forward.1} parent=11 // pred_check
          %p572 = pneg %p283
        $region58: #{transformer_encoder_forward.1} parent=11 // pred_check_branch
          %574 = sbr.rel (%p572) target = $region60
        $region59: #{transformer_encoder_forward.1} parent=11 // pred_region
          %s576 = ssub.s32 4096, 4096
          %577 = vsyncadd [#allocation7], %s576
          %s578 = sshll.u32 [#allocation6], 4
          %s579 = int_to_ptr.vmem [resolvable:$true] %s578
          %584 = dma.hbm_to_vmem [thread:$0]  %s11, 4096, %s579, [#allocation7], 128, 128, 8
        $region60: #{transformer_encoder_forward.1} parent=11 // pred_fallthru
          _
        // Predicated region
        $region61: #{transformer_encoder_forward.1} parent=11 // pred_check
          %p585 = pneg %p304
        $region62: #{transformer_encoder_forward.1} parent=11 // pred_check_branch
          %587 = sbr.rel (%p585) target = $region64
        $region63: #{transformer_encoder_forward.1} parent=11 // pred_region
          _
        $region64: #{transformer_encoder_forward.1} parent=11 // pred_fallthru
          _
        // Predicated region
        $region65: #{transformer_encoder_forward.1} parent=11 // pred_check
          %p588 = pneg %p325
        $region66: #{transformer_encoder_forward.1} parent=11 // pred_check_branch
          %590 = sbr.rel (%p588) target = $region68
        $region67: #{transformer_encoder_forward.1} parent=11 // pred_region
          %s592 = ssub.s32 4096, 4096
          %593 = vsyncadd [#allocation7], %s592
          %s594 = sshll.u32 [#allocation8], 4
          %s595 = int_to_ptr.vmem [resolvable:$true] %s594
          %600 = dma.hbm_to_vmem [thread:$0]  %s13, 4096, %s595, [#allocation7], 128, 128, 8
        $region68: #{transformer_encoder_forward.1} parent=11 // pred_fallthru
          _
        // Predicated region
        $region69: #{transformer_encoder_forward.1} parent=11 // pred_check
          %p601 = pneg %p346
        $region70: #{transformer_encoder_forward.1} parent=11 // pred_check_branch
          %603 = sbr.rel (%p601) target = $region72
        $region71: #{transformer_encoder_forward.1} parent=11 // pred_region
          _
        $region72: #{transformer_encoder_forward.1} parent=11 // pred_fallthru
          _
        // Predicated region
        $region73: #{transformer_encoder_forward.1} parent=11 // pred_check
          %p604 = pneg %p367
        $region74: #{transformer_encoder_forward.1} parent=11 // pred_check_branch
          %606 = sbr.rel (%p604) target = $region76
        $region75: #{transformer_encoder_forward.1} parent=11 // pred_region
          _
        $region76: #{transformer_encoder_forward.1} parent=11 // pred_fallthru
          _
        // Predicated region
        $region77: #{transformer_encoder_forward.1} parent=11 // pred_check
          %p607 = pneg %p388
        $region78: #{transformer_encoder_forward.1} parent=11 // pred_check_branch
          %609 = sbr.rel (%p607) target = $region80
        $region79: #{transformer_encoder_forward.1} parent=11 // pred_region
          _
        $region80: #{transformer_encoder_forward.1} parent=11 // pred_fallthru
          _
        // Predicated region
        $region81: #{transformer_encoder_forward.1} parent=11 // pred_check
          %p610 = pneg %p409
        $region82: #{transformer_encoder_forward.1} parent=11 // pred_check_branch
          %612 = sbr.rel (%p610) target = $region84
        $region83: #{transformer_encoder_forward.1} parent=11 // pred_region
          %s614 = ssub.s32 4096, 4096
          %615 = vsyncadd [#allocation10], %s614
          %s616 = sshll.u32 [#allocation9], 4
          %s617 = int_to_ptr.vmem [resolvable:$true] %s616
          %622 = dma.hbm_to_vmem [thread:$0]  %s17, 4096, %s617, [#allocation10], 128, 128, 8
        $region84: #{transformer_encoder_forward.1} parent=11 // pred_fallthru
          _
        // Predicated region
        $region85: #{transformer_encoder_forward.1} parent=11 // pred_check
          %p623 = pneg %p430
        $region86: #{transformer_encoder_forward.1} parent=11 // pred_check_branch
          %625 = sbr.rel (%p623) target = $region88
        $region87: #{transformer_encoder_forward.1} parent=11 // pred_region
          _
        $region88: #{transformer_encoder_forward.1} parent=11 // pred_fallthru
          _
        // Predicated region
        $region89: #{transformer_encoder_forward.1} parent=11 // pred_check
          %p626 = pneg %p451
        $region90: #{transformer_encoder_forward.1} parent=11 // pred_check_branch
          %628 = sbr.rel (%p626) target = $region92
        $region91: #{transformer_encoder_forward.1} parent=11 // pred_region
          _
        $region92: #{transformer_encoder_forward.1} parent=11 // pred_fallthru
          _
        // Predicated region
        $region93: #{transformer_encoder_forward.1} parent=11 // pred_check
          %p629 = pneg %p472
        $region94: #{transformer_encoder_forward.1} parent=11 // pred_check_branch
          %631 = sbr.rel (%p629) target = $region96
        $region95: #{transformer_encoder_forward.1} parent=11 // pred_region
          _
        $region96: #{transformer_encoder_forward.1} parent=11 // pred_fallthru
          _
        // Predicated region
        $region97: #{transformer_encoder_forward.1} parent=11 // pred_check
          %p632 = pneg %p493
        $region98: #{transformer_encoder_forward.1} parent=11 // pred_check_branch
          %634 = sbr.rel (%p632) target = $region100
        $region99: #{transformer_encoder_forward.1} parent=11 // pred_region
          _
        $region100: #{transformer_encoder_forward.1} parent=11 // pred_fallthru
          _
      $region12: #{transformer_encoder_forward.1} parent=5 // pred_fallthru
        _
      %p635 = scmp.lt.s32.totalorder %s31, 2
      // Predicated region
      $region101: #{transformer_encoder_forward.1} parent=5 // pred_check
        %p636 = pneg %p635
      $region102: #{transformer_encoder_forward.1} parent=5 // pred_check_branch
        %638 = sbr.rel (%p636) target = $region104
      $region103: #{transformer_encoder_forward.1} parent=5 // pred_region
        _
      $region104: #{transformer_encoder_forward.1} parent=5 // pred_fallthru
        _
      %p639 = scmp.le.s32.totalorder 1, %s31
      %p640 = scmp.lt.s32.totalorder %s31, 3
      %p641 = pnand %p639, %p640
      %p642 = pneg %p641
      // Predicated region
      $region105: #{transformer_encoder_forward.1} parent=5 // pred_check
        _
      $region106: #{transformer_encoder_forward.1} parent=5 // pred_check_branch
        %644 = sbr.rel (%p641) target = $region108
      $region107: #{transformer_encoder_forward.1} parent=5 // pred_region
        %s645 = ssub.s32 %s31, 1
        // Predicated region
        $region109: #{transformer_encoder_forward.1} parent=107 // pred_check
          %p646 = pneg %p199
        $region110: #{transformer_encoder_forward.1} parent=107 // pred_check_branch
          %648 = sbr.rel (%p646) target = $region112
        $region111: #{transformer_encoder_forward.1} parent=107 // pred_region
          %649 = dma.done [#allocation5], 4096
        $region112: #{transformer_encoder_forward.1} parent=107 // pred_fallthru
          _
        // Predicated region
        $region113: #{transformer_encoder_forward.1} parent=107 // pred_check
          %p650 = pneg %p283
        $region114: #{transformer_encoder_forward.1} parent=107 // pred_check_branch
          %652 = sbr.rel (%p650) target = $region116
        $region115: #{transformer_encoder_forward.1} parent=107 // pred_region
          %653 = dma.done [#allocation7], 4096
        $region116: #{transformer_encoder_forward.1} parent=107 // pred_fallthru
          _
        // Predicated region
        $region117: #{transformer_encoder_forward.1} parent=107 // pred_check
          %p654 = pneg %p325
        $region118: #{transformer_encoder_forward.1} parent=107 // pred_check_branch
          %656 = sbr.rel (%p654) target = $region120
        $region119: #{transformer_encoder_forward.1} parent=107 // pred_region
          %657 = dma.done [#allocation7], 4096
        $region120: #{transformer_encoder_forward.1} parent=107 // pred_fallthru
          _
        // Predicated region
        $region121: #{transformer_encoder_forward.1} parent=107 // pred_check
          %p658 = pneg %p409
        $region122: #{transformer_encoder_forward.1} parent=107 // pred_check_branch
          %660 = sbr.rel (%p658) target = $region124
        $region123: #{transformer_encoder_forward.1} parent=107 // pred_region
          %661 = dma.done [#allocation10], 4096
        $region124: #{transformer_encoder_forward.1} parent=107 // pred_fallthru
          _
        %p662 = pneg %p52
        %p663 = pneg %p49
        %p664 = pneg %p73
        %p665 = pneg %p70
        %p666 = pneg %p94
        %p667 = pneg %p91
        %p668 = pneg %p115
        %p669 = pneg %p112
        %p670 = pneg %p136
        %p671 = pneg %p133
        %p672 = pneg %p157
        %p673 = pneg %p154
        %p674 = pneg %p178
        %p675 = pneg %p175
        %p676 = pneg %p199
        %p677 = pneg %p196
        %p678 = pneg %p220
        %p679 = pneg %p217
        %p680 = pneg %p241
        %p681 = pneg %p238
        %p682 = pneg %p262
        %p683 = pneg %p259
        %p684 = pneg %p283
        %p685 = pneg %p280
        %p686 = pneg %p304
        %p687 = pneg %p301
        %p688 = pneg %p325
        %p689 = pneg %p322
        %p690 = pneg %p346
        %p691 = pneg %p343
        %p692 = pneg %p367
        %p693 = pneg %p364
        %p694 = pneg %p388
        %p695 = pneg %p385
        %p696 = pneg %p409
        %p697 = pneg %p406
        %p698 = pneg %p430
        %p699 = pneg %p427
        %p700 = pneg %p451
        %p701 = pneg %p448
        %p702 = pneg %p472
        %p703 = pneg %p469
        %p704 = pneg %p493
        %p705 = pneg %p490
        %p706 = pneg %p514
        %p707 = pneg %p511
        %p709 = scmp.eq.s32.totalorder %s36, 0
        // Predicated region
        $region125: #{transformer_encoder_forward.1} parent=107 // pred_check
          %p710 = pneg %p709
        $region126: #{transformer_encoder_forward.1} parent=107 // pred_check_branch
          %712 = sbr.rel (%p710) target = $region128
        $region127: #{transformer_encoder_forward.1} parent=107 // pred_region
          %v713 = vld [vmem:[%s0] sm:$0xff]
          %v714 = vld [vmem:[%s0 + $0x8] sm:$0xff]
          %v715 = vld [vmem:[%s0 + $0x10] sm:$0xff]
          %v716 = vld [vmem:[%s0 + $0x18] sm:$0xff]
          %v717 = vld [vmem:[%s0 + $0x20] sm:$0xff]
          %v718 = vld [vmem:[%s0 + $0x28] sm:$0xff]
          %v719 = vld [vmem:[%s0 + $0x30] sm:$0xff]
          %v720 = vld [vmem:[%s0 + $0x38] sm:$0xff]
          %721 = vst [vmem:[#allocation2] sm:$0xff] %v713
          %722 = vst [vmem:[#allocation2 + $0x8] sm:$0xff] %v714
          %723 = vst [vmem:[#allocation2 + $0x10] sm:$0xff] %v715
          %724 = vst [vmem:[#allocation2 + $0x18] sm:$0xff] %v716
          %725 = vst [vmem:[#allocation2 + $0x20] sm:$0xff] %v717
          %726 = vst [vmem:[#allocation2 + $0x28] sm:$0xff] %v718
          %727 = vst [vmem:[#allocation2 + $0x30] sm:$0xff] %v719
          %728 = vst [vmem:[#allocation2 + $0x38] sm:$0xff] %v720
        $region128: #{transformer_encoder_forward.1} parent=107 // pred_fallthru
          _
        %v729 = vld [vmem:[#allocation2] sm:$0xff]
        %v730 = vld [vmem:[#allocation2 + $0x8] sm:$0xff]
        %v731 = vld [vmem:[#allocation2 + $0x10] sm:$0xff]
        %v732 = vld [vmem:[#allocation2 + $0x18] sm:$0xff]
        %v733 = vld [vmem:[#allocation2 + $0x20] sm:$0xff]
        %v734 = vld [vmem:[#allocation2 + $0x28] sm:$0xff]
        %v735 = vld [vmem:[#allocation2 + $0x30] sm:$0xff]
        %v736 = vld [vmem:[#allocation2 + $0x38] sm:$0xff]
        %v737 = vld [vmem:[%s1] sm:$0xff]
        %v738 = vld [vmem:[%s1 + $0x8] sm:$0xff]
        %v739 = vld [vmem:[%s1 + $0x10] sm:$0xff]
        %v740 = vld [vmem:[%s1 + $0x18] sm:$0xff]
        %v741 = vld [vmem:[%s1 + $0x20] sm:$0xff]
        %v742 = vld [vmem:[%s1 + $0x28] sm:$0xff]
        %v743 = vld [vmem:[%s1 + $0x30] sm:$0xff]
        %v744 = vld [vmem:[%s1 + $0x38] sm:$0xff]
        %v745 = vlaneseq
        %v746 = vand.u32 %v745, 127
        %v747 = vadd.s32 %v746, 128
        %vm748 = vcmp.lt.s32.totalorder %v746, 224
        %vm749 = vcmp.lt.s32.totalorder %v747, 224
        %v750 = vsel %vm748, 1, 0
        %v751 = vsel %vm749, 1, 0
        %v752 = vcvt.s32.f32 %v750
        %v753 = vcvt.s32.f32 %v751
        %v754 = vadd.f32 %v729, %v737
        %v755 = vadd.f32 %v730, %v738
        %v756 = vadd.f32 %v731, %v739
        %v757 = vadd.f32 %v732, %v740
        %v758 = vadd.f32 %v733, %v741
        %v759 = vadd.f32 %v734, %v742
        %v760 = vadd.f32 %v735, %v743
        %v761 = vadd.f32 %v736, %v744
        %v762 = vpack.c.bf16 %v756, %v754
        %v763 = vpack.c.bf16 %v757, %v755
        %v764 = vpack.c.bf16 %v760, %v758
        %v765 = vpack.c.bf16 %v761, %v759
        %v766 = vld [vmem:[%s3] sm:$0xff]
        %v767 = vld [vmem:[%s3 + $0x8] sm:$0xff]
        %v768 = vld [vmem:[%s3 + $0x10] sm:$0xff]
        %v769 = vld [vmem:[%s3 + $0x18] sm:$0xff]
        %v770 = vld [vmem:[%s3 + $0x20] sm:$0xff]
        %v771 = vld [vmem:[%s3 + $0x28] sm:$0xff]
        %v772 = vld [vmem:[%s3 + $0x30] sm:$0xff]
        %v773 = vld [vmem:[%s3 + $0x38] sm:$0xff]
        %v774 = vld [vmem:[%s3 + $0x40] sm:$0xff]
        %v775 = vld [vmem:[%s3 + $0x48] sm:$0xff]
        %v776 = vld [vmem:[%s3 + $0x50] sm:$0xff]
        %v777 = vld [vmem:[%s3 + $0x58] sm:$0xff]
        %v778 = vld [vmem:[%s3 + $0x60] sm:$0xff]
        %v779 = vld [vmem:[%s3 + $0x68] sm:$0xff]
        %v780 = vld [vmem:[%s3 + $0x70] sm:$0xff]
        %v781 = vld [vmem:[%s3 + $0x78] sm:$0xff]
        %v782 = vld [vmem:[%s3 + $0x80] sm:$0xff]
        %v783 = vld [vmem:[%s3 + $0x88] sm:$0xff]
        %v784 = vld [vmem:[%s3 + $0x90] sm:$0xff]
        %v785 = vld [vmem:[%s3 + $0x98] sm:$0xff]
        %v786 = vld [vmem:[%s3 + $0xa0] sm:$0xff]
        %v787 = vld [vmem:[%s3 + $0xa8] sm:$0xff]
        %v788 = vld [vmem:[%s3 + $0xb0] sm:$0xff]
        %v789 = vld [vmem:[%s3 + $0xb8] sm:$0xff]
        %v790 = vld [vmem:[%s3 + $0xc0] sm:$0xff]
        %v791 = vld [vmem:[%s3 + $0xc8] sm:$0xff]
        %v792 = vld [vmem:[%s3 + $0xd0] sm:$0xff]
        %v793 = vld [vmem:[%s3 + $0xd8] sm:$0xff]
        %v794 = vld [vmem:[%s3 + $0xe0] sm:$0xff]
        %v795 = vld [vmem:[%s3 + $0xe8] sm:$0xff]
        %v796 = vld [vmem:[%s3 + $0xf0] sm:$0xff]
        %v797 = vld [vmem:[%s3 + $0xf8] sm:$0xff]
        %v798 = vld [vmem:[%s3 + $0x100] sm:$0xff]
        %v799 = vld [vmem:[%s3 + $0x108] sm:$0xff]
        %v800 = vld [vmem:[%s3 + $0x110] sm:$0xff]
        %v801 = vld [vmem:[%s3 + $0x118] sm:$0xff]
        %v802 = vld [vmem:[%s3 + $0x120] sm:$0xff]
        %v803 = vld [vmem:[%s3 + $0x128] sm:$0xff]
        %v804 = vld [vmem:[%s3 + $0x130] sm:$0xff]
        %v805 = vld [vmem:[%s3 + $0x138] sm:$0xff]
        %v806 = vld [vmem:[%s3 + $0x140] sm:$0xff]
        %v807 = vld [vmem:[%s3 + $0x148] sm:$0xff]
        %v808 = vld [vmem:[%s3 + $0x150] sm:$0xff]
        %v809 = vld [vmem:[%s3 + $0x158] sm:$0xff]
        %v810 = vld [vmem:[%s3 + $0x160] sm:$0xff]
        %v811 = vld [vmem:[%s3 + $0x168] sm:$0xff]
        %v812 = vld [vmem:[%s3 + $0x170] sm:$0xff]
        %v813 = vld [vmem:[%s3 + $0x178] sm:$0xff]
        %v814 = vld [vmem:[%s3 + $0x180] sm:$0xff]
        %v815 = vld [vmem:[%s3 + $0x188] sm:$0xff]
        %v816 = vld [vmem:[%s3 + $0x190] sm:$0xff]
        %v817 = vld [vmem:[%s3 + $0x198] sm:$0xff]
        %v818 = vld [vmem:[%s3 + $0x1a0] sm:$0xff]
        %v819 = vld [vmem:[%s3 + $0x1a8] sm:$0xff]
        %v820 = vld [vmem:[%s3 + $0x1b0] sm:$0xff]
        %v821 = vld [vmem:[%s3 + $0x1b8] sm:$0xff]
        %v822 = vld [vmem:[%s3 + $0x1c0] sm:$0xff]
        %v823 = vld [vmem:[%s3 + $0x1c8] sm:$0xff]
        %v824 = vld [vmem:[%s3 + $0x1d0] sm:$0xff]
        %v825 = vld [vmem:[%s3 + $0x1d8] sm:$0xff]
        %v826 = vld [vmem:[%s3 + $0x1e0] sm:$0xff]
        %v827 = vld [vmem:[%s3 + $0x1e8] sm:$0xff]
        %v828 = vld [vmem:[%s3 + $0x1f0] sm:$0xff]
        %v829 = vld [vmem:[%s3 + $0x1f8] sm:$0xff]
        %v830 = vld [vmem:[%s4] sm:$0xf]
        %v832 = vlaneseq
        %v833 = vshrl.u32 %v832, 7
        %v834 = vsub.s32 0, %v833
        %v835 = vrot.slane %v830, %v834
        %v836 = vlaneseq
        %v837 = vshrl.u32 %v836, 7
        %v838 = vsub.s32 1, %v837
        %v839 = vrot.slane %v830, %v838
        %v840 = vlaneseq
        %v841 = vshrl.u32 %v840, 7
        %v842 = vsub.s32 2, %v841
        %v843 = vrot.slane %v830, %v842
        %v844 = vlaneseq
        %v845 = vshrl.u32 %v844, 7
        %v846 = vsub.s32 3, %v845
        %v847 = vrot.slane %v830, %v846
        %v916 = vunpack.c.l.b16 %v766
        %v917 = vunpack.c.h.b16 %v766
        %v918 = vunpack.c.l.b16 %v767
        %v919 = vunpack.c.h.b16 %v767
        %v920 = vunpack.c.l.b16 %v768
        %v921 = vunpack.c.h.b16 %v768
        %v922 = vunpack.c.l.b16 %v769
        %v923 = vunpack.c.h.b16 %v769
        %v924 = vunpack.c.l.b16 %v770
        %v925 = vunpack.c.h.b16 %v770
        %v926 = vunpack.c.l.b16 %v771
        %v927 = vunpack.c.h.b16 %v771
        %v928 = vunpack.c.l.b16 %v772
        %v929 = vunpack.c.h.b16 %v772
        %v930 = vunpack.c.l.b16 %v773
        %v931 = vunpack.c.h.b16 %v773
        %v932 = vunpack.c.l.b16 %v774
        %v933 = vunpack.c.h.b16 %v774
        %v934 = vunpack.c.l.b16 %v775
        %v935 = vunpack.c.h.b16 %v775
        %v936 = vunpack.c.l.b16 %v776
        %v937 = vunpack.c.h.b16 %v776
        %v938 = vunpack.c.l.b16 %v777
        %v939 = vunpack.c.h.b16 %v777
        %v940 = vunpack.c.l.b16 %v778
        %v941 = vunpack.c.h.b16 %v778
        %v942 = vunpack.c.l.b16 %v779
        %v943 = vunpack.c.h.b16 %v779
        %v944 = vunpack.c.l.b16 %v780
        %v945 = vunpack.c.h.b16 %v780
        %v946 = vunpack.c.l.b16 %v781
        %v947 = vunpack.c.h.b16 %v781
        %v948 = vunpack.c.l.b16 %v782
        %v949 = vunpack.c.h.b16 %v782
        %v950 = vunpack.c.l.b16 %v783
        %v951 = vunpack.c.h.b16 %v783
        %v952 = vunpack.c.l.b16 %v784
        %v953 = vunpack.c.h.b16 %v784
        %v954 = vunpack.c.l.b16 %v785
        %v955 = vunpack.c.h.b16 %v785
        %v956 = vunpack.c.l.b16 %v786
        %v957 = vunpack.c.h.b16 %v786
        %v958 = vunpack.c.l.b16 %v787
        %v959 = vunpack.c.h.b16 %v787
        %v960 = vunpack.c.l.b16 %v788
        %v961 = vunpack.c.h.b16 %v788
        %v962 = vunpack.c.l.b16 %v789
        %v963 = vunpack.c.h.b16 %v789
        %v964 = vunpack.c.l.b16 %v790
        %v965 = vunpack.c.h.b16 %v790
        %v966 = vunpack.c.l.b16 %v791
        %v967 = vunpack.c.h.b16 %v791
        %v968 = vunpack.c.l.b16 %v792
        %v969 = vunpack.c.h.b16 %v792
        %v970 = vunpack.c.l.b16 %v793
        %v971 = vunpack.c.h.b16 %v793
        %v972 = vunpack.c.l.b16 %v794
        %v973 = vunpack.c.h.b16 %v794
        %v974 = vunpack.c.l.b16 %v795
        %v975 = vunpack.c.h.b16 %v795
        %v976 = vunpack.c.l.b16 %v796
        %v977 = vunpack.c.h.b16 %v796
        %v978 = vunpack.c.l.b16 %v797
        %v979 = vunpack.c.h.b16 %v797
        %v980 = vunpack.c.l.b16 %v798
        %v981 = vunpack.c.h.b16 %v798
        %v982 = vunpack.c.l.b16 %v799
        %v983 = vunpack.c.h.b16 %v799
        %v984 = vunpack.c.l.b16 %v800
        %v985 = vunpack.c.h.b16 %v800
        %v986 = vunpack.c.l.b16 %v801
        %v987 = vunpack.c.h.b16 %v801
        %v988 = vunpack.c.l.b16 %v802
        %v989 = vunpack.c.h.b16 %v802
        %v990 = vunpack.c.l.b16 %v803
        %v991 = vunpack.c.h.b16 %v803
        %v992 = vunpack.c.l.b16 %v804
        %v993 = vunpack.c.h.b16 %v804
        %v994 = vunpack.c.l.b16 %v805
        %v995 = vunpack.c.h.b16 %v805
        %v996 = vunpack.c.l.b16 %v806
        %v997 = vunpack.c.h.b16 %v806
        %v998 = vunpack.c.l.b16 %v807
        %v999 = vunpack.c.h.b16 %v807
        %v1000 = vunpack.c.l.b16 %v808
        %v1001 = vunpack.c.h.b16 %v808
        %v1002 = vunpack.c.l.b16 %v809
        %v1003 = vunpack.c.h.b16 %v809
        %v1004 = vunpack.c.l.b16 %v810
        %v1005 = vunpack.c.h.b16 %v810
        %v1006 = vunpack.c.l.b16 %v811
        %v1007 = vunpack.c.h.b16 %v811
        %v1008 = vunpack.c.l.b16 %v812
        %v1009 = vunpack.c.h.b16 %v812
        %v1010 = vunpack.c.l.b16 %v813
        %v1011 = vunpack.c.h.b16 %v813
        %v1012 = vunpack.c.l.b16 %v814
        %v1013 = vunpack.c.h.b16 %v814
        %v1014 = vunpack.c.l.b16 %v815
        %v1015 = vunpack.c.h.b16 %v815
        %v1016 = vunpack.c.l.b16 %v816
        %v1017 = vunpack.c.h.b16 %v816
        %v1018 = vunpack.c.l.b16 %v817
        %v1019 = vunpack.c.h.b16 %v817
        %v1020 = vunpack.c.l.b16 %v818
        %v1021 = vunpack.c.h.b16 %v818
        %v1022 = vunpack.c.l.b16 %v819
        %v1023 = vunpack.c.h.b16 %v819
        %v1024 = vunpack.c.l.b16 %v820
        %v1025 = vunpack.c.h.b16 %v820
        %v1026 = vunpack.c.l.b16 %v821
        %v1027 = vunpack.c.h.b16 %v821
        %v1028 = vunpack.c.l.b16 %v822
        %v1029 = vunpack.c.h.b16 %v822
        %v1030 = vunpack.c.l.b16 %v823
        %v1031 = vunpack.c.h.b16 %v823
        %v1032 = vunpack.c.l.b16 %v824
        %v1033 = vunpack.c.h.b16 %v824
        %v1034 = vunpack.c.l.b16 %v825
        %v1035 = vunpack.c.h.b16 %v825
        %v1036 = vunpack.c.l.b16 %v826
        %v1037 = vunpack.c.h.b16 %v826
        %v1038 = vunpack.c.l.b16 %v827
        %v1039 = vunpack.c.h.b16 %v827
        %v1040 = vunpack.c.l.b16 %v828
        %v1041 = vunpack.c.h.b16 %v828
        %v1042 = vunpack.c.l.b16 %v829
        %v1043 = vunpack.c.h.b16 %v829
        %v1044 = vpack.c.b16 %v920, %v916
        %v1045 = vpack.c.b16 %v921, %v917
        %v1046 = vpack.c.b16 %v922, %v918
        %v1047 = vpack.c.b16 %v923, %v919
        %v1048 = vpack.c.b16 %v928, %v924
        %v1049 = vpack.c.b16 %v929, %v925
        %v1050 = vpack.c.b16 %v930, %v926
        %v1051 = vpack.c.b16 %v931, %v927
        %v1052 = vpack.c.b16 %v936, %v932
        %v1053 = vpack.c.b16 %v937, %v933
        %v1054 = vpack.c.b16 %v938, %v934
        %v1055 = vpack.c.b16 %v939, %v935
        %v1056 = vpack.c.b16 %v944, %v940
        %v1057 = vpack.c.b16 %v945, %v941
        %v1058 = vpack.c.b16 %v946, %v942
        %v1059 = vpack.c.b16 %v947, %v943
        %v1060 = vpack.c.b16 %v952, %v948
        %v1061 = vpack.c.b16 %v953, %v949
        %v1062 = vpack.c.b16 %v954, %v950
        %v1063 = vpack.c.b16 %v955, %v951
        %v1064 = vpack.c.b16 %v960, %v956
        %v1065 = vpack.c.b16 %v961, %v957
        %v1066 = vpack.c.b16 %v962, %v958
        %v1067 = vpack.c.b16 %v963, %v959
        %v1068 = vpack.c.b16 %v968, %v964
        %v1069 = vpack.c.b16 %v969, %v965
        %v1070 = vpack.c.b16 %v970, %v966
        %v1071 = vpack.c.b16 %v971, %v967
        %v1072 = vpack.c.b16 %v976, %v972
        %v1073 = vpack.c.b16 %v977, %v973
        %v1074 = vpack.c.b16 %v978, %v974
        %v1075 = vpack.c.b16 %v979, %v975
        %v1076 = vpack.c.b16 %v984, %v980
        %v1077 = vpack.c.b16 %v985, %v981
        %v1078 = vpack.c.b16 %v986, %v982
        %v1079 = vpack.c.b16 %v987, %v983
        %v1080 = vpack.c.b16 %v992, %v988
        %v1081 = vpack.c.b16 %v993, %v989
        %v1082 = vpack.c.b16 %v994, %v990
        %v1083 = vpack.c.b16 %v995, %v991
        %v1084 = vpack.c.b16 %v1000, %v996
        %v1085 = vpack.c.b16 %v1001, %v997
        %v1086 = vpack.c.b16 %v1002, %v998
        %v1087 = vpack.c.b16 %v1003, %v999
        %v1088 = vpack.c.b16 %v1008, %v1004
        %v1089 = vpack.c.b16 %v1009, %v1005
        %v1090 = vpack.c.b16 %v1010, %v1006
        %v1091 = vpack.c.b16 %v1011, %v1007
        %v1092 = vpack.c.b16 %v1016, %v1012
        %v1093 = vpack.c.b16 %v1017, %v1013
        %v1094 = vpack.c.b16 %v1018, %v1014
        %v1095 = vpack.c.b16 %v1019, %v1015
        %v1096 = vpack.c.b16 %v1024, %v1020
        %v1097 = vpack.c.b16 %v1025, %v1021
        %v1098 = vpack.c.b16 %v1026, %v1022
        %v1099 = vpack.c.b16 %v1027, %v1023
        %v1100 = vpack.c.b16 %v1032, %v1028
        %v1101 = vpack.c.b16 %v1033, %v1029
        %v1102 = vpack.c.b16 %v1034, %v1030
        %v1103 = vpack.c.b16 %v1035, %v1031
        %v1104 = vpack.c.b16 %v1040, %v1036
        %v1105 = vpack.c.b16 %v1041, %v1037
        %v1106 = vpack.c.b16 %v1042, %v1038
        %v1107 = vpack.c.b16 %v1043, %v1039
        %1172 = vmatprep.subr.bf16.mxu0 %v1045
        %1173 = vmatpush1.bf16.msra.mxu0 %v1044
        %1174 = vmatprep.subr.bf16.mxu0 %v1049
        %1175 = vmatpush1.bf16.msra.mxu0 %v1048
        %1176 = vmatprep.subr.bf16.mxu0 %v1053
        %1177 = vmatpush1.bf16.msra.mxu0 %v1052
        %1178 = vmatprep.subr.bf16.mxu0 %v1057
        %1179 = vmatpush1.bf16.msra.mxu0 %v1056
        %1180 = vmatprep.subr.bf16.mxu0 %v1061
        %1181 = vmatpush1.bf16.msra.mxu0 %v1060
        %1182 = vmatprep.subr.bf16.mxu0 %v1065
        %1183 = vmatpush1.bf16.msra.mxu0 %v1064
        %1184 = vmatprep.subr.bf16.mxu0 %v1069
        %1185 = vmatpush1.bf16.msra.mxu0 %v1068
        %1186 = vmatprep.subr.bf16.mxu0 %v1073
        %1187 = vmatpush1.bf16.msra.mxu0 %v1072
        %1188 = vmatprep.subr.bf16.mxu0 %v1077
        %1189 = vmatpush1.bf16.msra.mxu0 %v1076
        %1190 = vmatprep.subr.bf16.mxu0 %v1081
        %1191 = vmatpush1.bf16.msra.mxu0 %v1080
        %1192 = vmatprep.subr.bf16.mxu0 %v1085
        %1193 = vmatpush1.bf16.msra.mxu0 %v1084
        %1194 = vmatprep.subr.bf16.mxu0 %v1089
        %1195 = vmatpush1.bf16.msra.mxu0 %v1088
        %1196 = vmatprep.subr.bf16.mxu0 %v1093
        %1197 = vmatpush1.bf16.msra.mxu0 %v1092
        %1198 = vmatprep.subr.bf16.mxu0 %v1097
        %1199 = vmatpush1.bf16.msra.mxu0 %v1096
        %1200 = vmatprep.subr.bf16.mxu0 %v1101
        %1201 = vmatpush1.bf16.msra.mxu0 %v1100
        %1202 = vmatprep.subr.bf16.mxu0 %v1105
        %1203 = vmatpush1.bf16.msra.mxu0 %v1104
        %1204 = vmatprep.mubr.bf16.mxu0 %v763
        %1205 = vmatmul.mubr.bf16.gmra.mrb[0].mxu0 %v762
        %v1206 = vpop.f32.mrb[0].mxu0
        %v1207 = vadd.f32 %v835, %v1206
        %v1208 = vpop.f32.mrb[0].mxu0
        %v1209 = vadd.f32 %v839, %v1208
        %v1210 = vpop.f32.mrb[0].mxu0
        %v1211 = vadd.f32 %v835, %v1210
        %v1212 = vpop.f32.mrb[0].mxu0
        %v1213 = vadd.f32 %v839, %v1212
        %1214 = vmatprep.mubr.bf16.mxu0 %v765
        %1215 = vmatmul.mubr.bf16.gmra.mrb[0].mxu0 %v764
        %v1216 = vpop.f32.mrb[0].mxu0
        %v1217 = vadd.f32 %v835, %v1216
        %v1218 = vpop.f32.mrb[0].mxu0
        %v1219 = vadd.f32 %v839, %v1218
        %v1220 = vpop.f32.mrb[0].mxu0
        %v1221 = vadd.f32 %v835, %v1220
        %v1222 = vpop.f32.mrb[0].mxu0
        %v1223 = vadd.f32 %v839, %v1222
        %1224 = vdwg.mxu0
        %1225 = vmatprep.subr.bf16.mxu0 %v1047
        %1226 = vmatpush1.bf16.msra.mxu0 %v1046
        %1227 = vmatprep.subr.bf16.mxu0 %v1051
        %1228 = vmatpush1.bf16.msra.mxu0 %v1050
        %1229 = vmatprep.subr.bf16.mxu0 %v1055
        %1230 = vmatpush1.bf16.msra.mxu0 %v1054
        %1231 = vmatprep.subr.bf16.mxu0 %v1059
        %1232 = vmatpush1.bf16.msra.mxu0 %v1058
        %1233 = vmatprep.subr.bf16.mxu0 %v1063
        %1234 = vmatpush1.bf16.msra.mxu0 %v1062
        %1235 = vmatprep.subr.bf16.mxu0 %v1067
        %1236 = vmatpush1.bf16.msra.mxu0 %v1066
        %1237 = vmatprep.subr.bf16.mxu0 %v1071
        %1238 = vmatpush1.bf16.msra.mxu0 %v1070
        %1239 = vmatprep.subr.bf16.mxu0 %v1075
        %1240 = vmatpush1.bf16.msra.mxu0 %v1074
        %1241 = vmatprep.subr.bf16.mxu0 %v1079
        %1242 = vmatpush1.bf16.msra.mxu0 %v1078
        %1243 = vmatprep.subr.bf16.mxu0 %v1083
        %1244 = vmatpush1.bf16.msra.mxu0 %v1082
        %1245 = vmatprep.subr.bf16.mxu0 %v1087
        %1246 = vmatpush1.bf16.msra.mxu0 %v1086
        %1247 = vmatprep.subr.bf16.mxu0 %v1091
        %1248 = vmatpush1.bf16.msra.mxu0 %v1090
        %1249 = vmatprep.subr.bf16.mxu0 %v1095
        %1250 = vmatpush1.bf16.msra.mxu0 %v1094
        %1251 = vmatprep.subr.bf16.mxu0 %v1099
        %1252 = vmatpush1.bf16.msra.mxu0 %v1098
        %1253 = vmatprep.subr.bf16.mxu0 %v1103
        %1254 = vmatpush1.bf16.msra.mxu0 %v1102
        %1255 = vmatprep.subr.bf16.mxu0 %v1107
        %1256 = vmatpush1.bf16.msra.mxu0 %v1106
        %1257 = vmatprep.mubr.bf16.mxu0 %v763
        %1258 = vmatmul.mubr.bf16.gmra.mrb[0].mxu0 %v762
        %v1259 = vpop.f32.mrb[0].mxu0
        %v1260 = vadd.f32 %v843, %v1259
        %v1261 = vpop.f32.mrb[0].mxu0
        %v1262 = vadd.f32 %v847, %v1261
        %v1263 = vpop.f32.mrb[0].mxu0
        %v1264 = vadd.f32 %v843, %v1263
        %v1265 = vpop.f32.mrb[0].mxu0
        %v1266 = vadd.f32 %v847, %v1265
        %1267 = vmatprep.mubr.bf16.mxu0 %v765
        %1268 = vmatmul.mubr.bf16.gmra.mrb[0].mxu0 %v764
        %v1269 = vpop.f32.mrb[0].mxu0
        %v1270 = vadd.f32 %v843, %v1269
        %v1271 = vpop.f32.mrb[0].mxu0
        %v1272 = vadd.f32 %v847, %v1271
        %v1273 = vpop.f32.mrb[0].mxu0
        %v1274 = vadd.f32 %v843, %v1273
        %v1275 = vpop.f32.mrb[0].mxu0
        %v1276 = vadd.f32 %v847, %v1275
        %1277 = vdwg.mxu0
        %v1278 = vpack.c.bf16 %v731, %v729
        %v1279 = vpack.c.bf16 %v732, %v730
        %v1280 = vpack.c.bf16 %v735, %v733
        %v1281 = vpack.c.bf16 %v736, %v734
        %v1282 = vld [vmem:[%s5] sm:$0xff]
        %v1283 = vld [vmem:[%s5 + $0x8] sm:$0xff]
        %v1284 = vld [vmem:[%s5 + $0x10] sm:$0xff]
        %v1285 = vld [vmem:[%s5 + $0x18] sm:$0xff]
        %v1286 = vld [vmem:[%s5 + $0x20] sm:$0xff]
        %v1287 = vld [vmem:[%s5 + $0x28] sm:$0xff]
        %v1288 = vld [vmem:[%s5 + $0x30] sm:$0xff]
        %v1289 = vld [vmem:[%s5 + $0x38] sm:$0xff]
        %v1290 = vld [vmem:[%s5 + $0x40] sm:$0xff]
        %v1291 = vld [vmem:[%s5 + $0x48] sm:$0xff]
        %v1292 = vld [vmem:[%s5 + $0x50] sm:$0xff]
        %v1293 = vld [vmem:[%s5 + $0x58] sm:$0xff]
        %v1294 = vld [vmem:[%s5 + $0x60] sm:$0xff]
        %v1295 = vld [vmem:[%s5 + $0x68] sm:$0xff]
        %v1296 = vld [vmem:[%s5 + $0x70] sm:$0xff]
        %v1297 = vld [vmem:[%s5 + $0x78] sm:$0xff]
        %v1298 = vld [vmem:[%s5 + $0x80] sm:$0xff]
        %v1299 = vld [vmem:[%s5 + $0x88] sm:$0xff]
        %v1300 = vld [vmem:[%s5 + $0x90] sm:$0xff]
        %v1301 = vld [vmem:[%s5 + $0x98] sm:$0xff]
        %v1302 = vld [vmem:[%s5 + $0xa0] sm:$0xff]
        %v1303 = vld [vmem:[%s5 + $0xa8] sm:$0xff]
        %v1304 = vld [vmem:[%s5 + $0xb0] sm:$0xff]
        %v1305 = vld [vmem:[%s5 + $0xb8] sm:$0xff]
        %v1306 = vld [vmem:[%s5 + $0xc0] sm:$0xff]
        %v1307 = vld [vmem:[%s5 + $0xc8] sm:$0xff]
        %v1308 = vld [vmem:[%s5 + $0xd0] sm:$0xff]
        %v1309 = vld [vmem:[%s5 + $0xd8] sm:$0xff]
        %v1310 = vld [vmem:[%s5 + $0xe0] sm:$0xff]
        %v1311 = vld [vmem:[%s5 + $0xe8] sm:$0xff]
        %v1312 = vld [vmem:[%s5 + $0xf0] sm:$0xff]
        %v1313 = vld [vmem:[%s5 + $0xf8] sm:$0xff]
        %v1314 = vld [vmem:[%s6] sm:$0x3]
        %v1316 = vlaneseq
        %v1317 = vshrl.u32 %v1316, 7
        %v1318 = vsub.s32 0, %v1317
        %v1319 = vrot.slane %v1314, %v1318
        %v1320 = vlaneseq
        %v1321 = vshrl.u32 %v1320, 7
        %v1322 = vsub.s32 1, %v1321
        %v1323 = vrot.slane %v1314, %v1322
        %v1358 = vunpack.c.l.b16 %v1282
        %v1359 = vunpack.c.h.b16 %v1282
        %v1360 = vunpack.c.l.b16 %v1283
        %v1361 = vunpack.c.h.b16 %v1283
        %v1362 = vunpack.c.l.b16 %v1284
        %v1363 = vunpack.c.h.b16 %v1284
        %v1364 = vunpack.c.l.b16 %v1285
        %v1365 = vunpack.c.h.b16 %v1285
        %v1366 = vunpack.c.l.b16 %v1286
        %v1367 = vunpack.c.h.b16 %v1286
        %v1368 = vunpack.c.l.b16 %v1287
        %v1369 = vunpack.c.h.b16 %v1287
        %v1370 = vunpack.c.l.b16 %v1288
        %v1371 = vunpack.c.h.b16 %v1288
        %v1372 = vunpack.c.l.b16 %v1289
        %v1373 = vunpack.c.h.b16 %v1289
        %v1374 = vunpack.c.l.b16 %v1290
        %v1375 = vunpack.c.h.b16 %v1290
        %v1376 = vunpack.c.l.b16 %v1291
        %v1377 = vunpack.c.h.b16 %v1291
        %v1378 = vunpack.c.l.b16 %v1292
        %v1379 = vunpack.c.h.b16 %v1292
        %v1380 = vunpack.c.l.b16 %v1293
        %v1381 = vunpack.c.h.b16 %v1293
        %v1382 = vunpack.c.l.b16 %v1294
        %v1383 = vunpack.c.h.b16 %v1294
        %v1384 = vunpack.c.l.b16 %v1295
        %v1385 = vunpack.c.h.b16 %v1295
        %v1386 = vunpack.c.l.b16 %v1296
        %v1387 = vunpack.c.h.b16 %v1296
        %v1388 = vunpack.c.l.b16 %v1297
        %v1389 = vunpack.c.h.b16 %v1297
        %v1390 = vunpack.c.l.b16 %v1298
        %v1391 = vunpack.c.h.b16 %v1298
        %v1392 = vunpack.c.l.b16 %v1299
        %v1393 = vunpack.c.h.b16 %v1299
        %v1394 = vunpack.c.l.b16 %v1300
        %v1395 = vunpack.c.h.b16 %v1300
        %v1396 = vunpack.c.l.b16 %v1301
        %v1397 = vunpack.c.h.b16 %v1301
        %v1398 = vunpack.c.l.b16 %v1302
        %v1399 = vunpack.c.h.b16 %v1302
        %v1400 = vunpack.c.l.b16 %v1303
        %v1401 = vunpack.c.h.b16 %v1303
        %v1402 = vunpack.c.l.b16 %v1304
        %v1403 = vunpack.c.h.b16 %v1304
        %v1404 = vunpack.c.l.b16 %v1305
        %v1405 = vunpack.c.h.b16 %v1305
        %v1406 = vunpack.c.l.b16 %v1306
        %v1407 = vunpack.c.h.b16 %v1306
        %v1408 = vunpack.c.l.b16 %v1307
        %v1409 = vunpack.c.h.b16 %v1307
        %v1410 = vunpack.c.l.b16 %v1308
        %v1411 = vunpack.c.h.b16 %v1308
        %v1412 = vunpack.c.l.b16 %v1309
        %v1413 = vunpack.c.h.b16 %v1309
        %v1414 = vunpack.c.l.b16 %v1310
        %v1415 = vunpack.c.h.b16 %v1310
        %v1416 = vunpack.c.l.b16 %v1311
        %v1417 = vunpack.c.h.b16 %v1311
        %v1418 = vunpack.c.l.b16 %v1312
        %v1419 = vunpack.c.h.b16 %v1312
        %v1420 = vunpack.c.l.b16 %v1313
        %v1421 = vunpack.c.h.b16 %v1313
        %v1422 = vpack.c.b16 %v1360, %v1358
        %v1423 = vpack.c.b16 %v1361, %v1359
        %v1424 = vpack.c.b16 %v1364, %v1362
        %v1425 = vpack.c.b16 %v1365, %v1363
        %v1426 = vpack.c.b16 %v1368, %v1366
        %v1427 = vpack.c.b16 %v1369, %v1367
        %v1428 = vpack.c.b16 %v1372, %v1370
        %v1429 = vpack.c.b16 %v1373, %v1371
        %v1430 = vpack.c.b16 %v1376, %v1374
        %v1431 = vpack.c.b16 %v1377, %v1375
        %v1432 = vpack.c.b16 %v1380, %v1378
        %v1433 = vpack.c.b16 %v1381, %v1379
        %v1434 = vpack.c.b16 %v1384, %v1382
        %v1435 = vpack.c.b16 %v1385, %v1383
        %v1436 = vpack.c.b16 %v1388, %v1386
        %v1437 = vpack.c.b16 %v1389, %v1387
        %v1438 = vpack.c.b16 %v1392, %v1390
        %v1439 = vpack.c.b16 %v1393, %v1391
        %v1440 = vpack.c.b16 %v1396, %v1394
        %v1441 = vpack.c.b16 %v1397, %v1395
        %v1442 = vpack.c.b16 %v1400, %v1398
        %v1443 = vpack.c.b16 %v1401, %v1399
        %v1444 = vpack.c.b16 %v1404, %v1402
        %v1445 = vpack.c.b16 %v1405, %v1403
        %v1446 = vpack.c.b16 %v1408, %v1406
        %v1447 = vpack.c.b16 %v1409, %v1407
        %v1448 = vpack.c.b16 %v1412, %v1410
        %v1449 = vpack.c.b16 %v1413, %v1411
        %v1450 = vpack.c.b16 %v1416, %v1414
        %v1451 = vpack.c.b16 %v1417, %v1415
        %v1452 = vpack.c.b16 %v1420, %v1418
        %v1453 = vpack.c.b16 %v1421, %v1419
        %1486 = vmatprep.subr.bf16.mxu0 %v1423
        %1487 = vmatpush1.bf16.msra.mxu0 %v1422
        %1488 = vmatprep.subr.bf16.mxu0 %v1425
        %1489 = vmatpush1.bf16.msra.mxu0 %v1424
        %1490 = vmatprep.subr.bf16.mxu0 %v1427
        %1491 = vmatpush1.bf16.msra.mxu0 %v1426
        %1492 = vmatprep.subr.bf16.mxu0 %v1429
        %1493 = vmatpush1.bf16.msra.mxu0 %v1428
        %1494 = vmatprep.subr.bf16.mxu0 %v1431
        %1495 = vmatpush1.bf16.msra.mxu0 %v1430
        %1496 = vmatprep.subr.bf16.mxu0 %v1433
        %1497 = vmatpush1.bf16.msra.mxu0 %v1432
        %1498 = vmatprep.subr.bf16.mxu0 %v1435
        %1499 = vmatpush1.bf16.msra.mxu0 %v1434
        %1500 = vmatprep.subr.bf16.mxu0 %v1437
        %1501 = vmatpush1.bf16.msra.mxu0 %v1436
        %1502 = vmatprep.subr.bf16.mxu0 %v1439
        %1503 = vmatpush1.bf16.msra.mxu0 %v1438
        %1504 = vmatprep.subr.bf16.mxu0 %v1441
        %1505 = vmatpush1.bf16.msra.mxu0 %v1440
        %1506 = vmatprep.subr.bf16.mxu0 %v1443
        %1507 = vmatpush1.bf16.msra.mxu0 %v1442
        %1508 = vmatprep.subr.bf16.mxu0 %v1445
        %1509 = vmatpush1.bf16.msra.mxu0 %v1444
        %1510 = vmatprep.subr.bf16.mxu0 %v1447
        %1511 = vmatpush1.bf16.msra.mxu0 %v1446
        %1512 = vmatprep.subr.bf16.mxu0 %v1449
        %1513 = vmatpush1.bf16.msra.mxu0 %v1448
        %1514 = vmatprep.subr.bf16.mxu0 %v1451
        %1515 = vmatpush1.bf16.msra.mxu0 %v1450
        %1516 = vmatprep.subr.bf16.mxu0 %v1453
        %1517 = vmatpush1.bf16.msra.mxu0 %v1452
        %1518 = vmatprep.mubr.bf16.mxu0 %v1279
        %1519 = vmatmul.mubr.bf16.gmra.mrb[0].mxu0 %v1278
        %v1520 = vpop.f32.mrb[0].mxu0
        %v1521 = vadd.f32 %v1319, %v1520
        %v1522 = vpop.f32.mrb[0].mxu0
        %v1523 = vadd.f32 %v1323, %v1522
        %v1524 = vpop.f32.mrb[0].mxu0
        %v1525 = vadd.f32 %v1319, %v1524
        %v1526 = vpop.f32.mrb[0].mxu0
        %v1527 = vadd.f32 %v1323, %v1526
        %1528 = vmatprep.mubr.bf16.mxu0 %v1281
        %1529 = vmatmul.mubr.bf16.gmra.mrb[0].mxu0 %v1280
        %v1530 = vpop.f32.mrb[0].mxu0
        %v1531 = vadd.f32 %v1319, %v1530
        %v1532 = vpop.f32.mrb[0].mxu0
        %v1533 = vadd.f32 %v1323, %v1532
        %v1534 = vpop.f32.mrb[0].mxu0
        %v1535 = vadd.f32 %v1319, %v1534
        %v1536 = vpop.f32.mrb[0].mxu0
        %v1537 = vadd.f32 %v1323, %v1536
        %1538 = vdwg.mxu0
        %v1539 = vld [vmem:[%s2] sm:$0xff]
        %v1540 = vld [vmem:[%s2 + $0x8] sm:$0xff]
        %v1541 = vld [vmem:[%s2 + $0x10] sm:$0xff]
        %v1542 = vld [vmem:[%s2 + $0x18] sm:$0xff]
        %v1543 = vpack.c.bf16 %v1211, %v1207
        %v1544 = vpack.c.bf16 %v1221, %v1217
        %v1545 = vpack.c.bf16 %v1264, %v1260
        %v1546 = vpack.c.bf16 %v1274, %v1270
        %v1547 = vpack.c.bf16 %v1525, %v1521
        %v1548 = vpack.c.bf16 %v1535, %v1531
        %vm1549 = vcmask 261120
        %v1551 = vsel %vm1549, %v1543, 0
        %v1554 = vsel %vm1549, %v1544, 0
        %v1557 = vsel %vm1549, %v1545, 0
        %v1560 = vsel %vm1549, %v1546, 0
        %1562 = vmatprep.subr.bf16.mxu0 0
        %1563 = vmatpush1.bf16.xpose.msra.mxu0 %v1557
        %1564 = vmatprep.subr.bf16.mxu0 0
        %1565 = vmatpush1.bf16.xpose.msra.mxu0 %v1560
        %1566 = vmatprep.subr.bf16.mxu0 0
        %1567 = vmatpush1.bf16.xpose.msra.mxu0 0
        %1568 = vmatprep.subr.bf16.mxu0 0
        %1569 = vmatpush1.bf16.xpose.msra.mxu0 0
        %1570 = vmatprep.subr.bf16.mxu0 0
        %1571 = vmatpush1.bf16.xpose.msra.mxu0 0
        %1572 = vmatprep.subr.bf16.mxu0 0
        %1573 = vmatpush1.bf16.xpose.msra.mxu0 0
        %1574 = vmatprep.subr.bf16.mxu0 0
        %1575 = vmatpush1.bf16.xpose.msra.mxu0 0
        %1576 = vmatprep.subr.bf16.mxu0 0
        %1577 = vmatpush1.bf16.xpose.msra.mxu0 0
        %1578 = vmatprep.subr.bf16.mxu0 0
        %1579 = vmatpush1.bf16.xpose.msra.mxu0 0
        %1580 = vmatprep.subr.bf16.mxu0 0
        %1581 = vmatpush1.bf16.xpose.msra.mxu0 0
        %1582 = vmatprep.subr.bf16.mxu0 0
        %1583 = vmatpush1.bf16.xpose.msra.mxu0 0
        %1584 = vmatprep.subr.bf16.mxu0 0
        %1585 = vmatpush1.bf16.xpose.msra.mxu0 0
        %1586 = vmatprep.subr.bf16.mxu0 0
        %1587 = vmatpush1.bf16.xpose.msra.mxu0 0
        %1588 = vmatprep.subr.bf16.mxu0 0
        %1589 = vmatpush1.bf16.xpose.msra.mxu0 0
        %1590 = vmatprep.subr.bf16.mxu0 0
        %1591 = vmatpush1.bf16.xpose.msra.mxu0 0
        %1592 = vmatprep.subr.bf16.mxu0 0
        %1593 = vmatpush1.bf16.xpose.msra.mxu0 0
        %1594 = vmatprep.mubr.bf16.mxu0 0
        %1595 = vmatmul.mubr.bf16.gmra.mrb[0].mxu0 %v1551
        %v1596 = vpop.f32.mrb[0].mxu0
        %v1597 = vadd.f32 0.0, %v1596
        %v1598 = vpop.f32.mrb[0].mxu0
        %v1599 = vpop.f32.mrb[0].mxu0
        %v1600 = vadd.f32 0.0, %v1599
        %v1601 = vpop.f32.mrb[0].mxu0
        %1602 = vmatprep.mubr.bf16.mxu0 0
        %1603 = vmatmul.mubr.bf16.gmra.mrb[0].mxu0 %v1554
        %v1604 = vpop.f32.mrb[0].mxu0
        %v1605 = vadd.f32 0.0, %v1604
        %v1606 = vpop.f32.mrb[0].mxu0
        %v1607 = vpop.f32.mrb[0].mxu0
        %v1608 = vadd.f32 0.0, %v1607
        %v1609 = vpop.f32.mrb[0].mxu0
        %1610 = vdwg.mxu0
        %v1611 = vmul.f32 %v1597, 0.18898223
        %v1612 = vmul.f32 %v1600, 0.18898223
        %v1613 = vmul.f32 %v1605, 0.18898223
        %v1614 = vmul.f32 %v1608, 0.18898223
        %v1615 = vadd.f32 %v1611, %v1539
        %v1616 = vadd.f32 %v1612, %v1540
        %v1617 = vadd.f32 %v1613, %v1541
        %v1618 = vadd.f32 %v1614, %v1542
        %v1619 = vsel %vm1549, %v1615, -inf
        %1620 = vmax.xlane.f32.xlu0 %v1619
        %v1621 = vpop.xlane.xlu0 %1620
        %v1622 = vsel %vm1549, %v1616, -inf
        %1623 = vmax.xlane.f32.xlu0 %v1622
        %v1624 = vpop.xlane.xlu0 %1623
        %v1625 = vsel %vm1549, %v1617, -inf
        %1626 = vmax.xlane.f32.xlu0 %v1625
        %v1627 = vpop.xlane.xlu0 %1626
        %v1628 = vsel %vm1549, %v1618, -inf
        %1629 = vmax.xlane.f32.xlu0 %v1628
        %v1630 = vpop.xlane.xlu0 %1629
        %v1631 = vsub.f32 %v1615, %v1621
        %v1632 = vsub.f32 %v1616, %v1624
        %v1633 = vsub.f32 %v1617, %v1627
        %v1634 = vsub.f32 %v1618, %v1630
        %v1635 = vmul.f32 %v1631, 1.442695
        %v1636 = vpow.pop %v1635
        %v1637 = vmul.f32 %v1632, 1.442695
        %v1638 = vpow.pop %v1637
        %v1639 = vmul.f32 %v1633, 1.442695
        %v1640 = vpow.pop %v1639
        %v1641 = vmul.f32 %v1634, 1.442695
        %v1642 = vpow.pop %v1641
        %v1643 = vsel %vm1549, %v1636, 0.0
        %1644 = vadd.xlane.f32.xlu0 %v1643
        %v1645 = vpop.xlane.xlu0 %1644
        %v1646 = vsel %vm1549, %v1638, 0.0
        %1647 = vadd.xlane.f32.xlu0 %v1646
        %v1648 = vpop.xlane.xlu0 %1647
        %v1649 = vsel %vm1549, %v1640, 0.0
        %1650 = vadd.xlane.f32.xlu0 %v1649
        %v1651 = vpop.xlane.xlu0 %1650
        %v1652 = vsel %vm1549, %v1642, 0.0
        %1653 = vadd.xlane.f32.xlu0 %v1652
        %v1654 = vpop.xlane.xlu0 %1653
        %v1655 = vrcp.pop %v1645
        %v1656 = vrcp.pop %v1648
        %v1657 = vrcp.pop %v1651
        %v1658 = vrcp.pop %v1654
        %v1659 = vmul.f32 %v1636, %v1655
        %v1660 = vmul.f32 %v1638, %v1656
        %v1661 = vmul.f32 %v1640, %v1657
        %v1662 = vmul.f32 %v1642, %v1658
        %v1663 = vpack.c.bf16 %v1660, %v1659
        %v1664 = vpack.c.bf16 %v1662, %v1661
        %v1666 = vsel %vm1549, %v1663, 0
        %v1669 = vsel %vm1549, %v1664, 0
        %1671 = vmatprep.subr.bf16.mxu0 0
        %1672 = vmatpush1.bf16.msra.mxu0 %v1547
        %1673 = vmatprep.subr.bf16.mxu0 0
        %1674 = vmatpush1.bf16.msra.mxu0 %v1548
        %1675 = vmatprep.subr.bf16.mxu0 0
        %1676 = vmatpush1.bf16.msra.mxu0 0
        %1677 = vmatprep.subr.bf16.mxu0 0
        %1678 = vmatpush1.bf16.msra.mxu0 0
        %1679 = vmatprep.subr.bf16.mxu0 0
        %1680 = vmatpush1.bf16.msra.mxu0 0
        %1681 = vmatprep.subr.bf16.mxu0 0
        %1682 = vmatpush1.bf16.msra.mxu0 0
        %1683 = vmatprep.subr.bf16.mxu0 0
        %1684 = vmatpush1.bf16.msra.mxu0 0
        %1685 = vmatprep.subr.bf16.mxu0 0
        %1686 = vmatpush1.bf16.msra.mxu0 0
        %1687 = vmatprep.subr.bf16.mxu0 0
        %1688 = vmatpush1.bf16.msra.mxu0 0
        %1689 = vmatprep.subr.bf16.mxu0 0
        %1690 = vmatpush1.bf16.msra.mxu0 0
        %1691 = vmatprep.subr.bf16.mxu0 0
        %1692 = vmatpush1.bf16.msra.mxu0 0
        %1693 = vmatprep.subr.bf16.mxu0 0
        %1694 = vmatpush1.bf16.msra.mxu0 0
        %1695 = vmatprep.subr.bf16.mxu0 0
        %1696 = vmatpush1.bf16.msra.mxu0 0
        %1697 = vmatprep.subr.bf16.mxu0 0
        %1698 = vmatpush1.bf16.msra.mxu0 0
        %1699 = vmatprep.subr.bf16.mxu0 0
        %1700 = vmatpush1.bf16.msra.mxu0 0
        %1701 = vmatprep.subr.bf16.mxu0 0
        %1702 = vmatpush1.bf16.msra.mxu0 0
        %1703 = vmatprep.mubr.bf16.mxu0 0
        %1704 = vmatmul.mubr.bf16.gmra.mrb[0].mxu0 %v1666
        %v1705 = vpop.f32.mrb[0].mxu0
        %v1706 = vadd.f32 0.0, %v1705
        %v1707 = vpop.f32.mrb[0].mxu0
        %v1708 = vpop.f32.mrb[0].mxu0
        %v1709 = vadd.f32 0.0, %v1708
        %v1710 = vpop.f32.mrb[0].mxu0
        %1711 = vmatprep.mubr.bf16.mxu0 0
        %1712 = vmatmul.mubr.bf16.gmra.mrb[0].mxu0 %v1669
        %v1713 = vpop.f32.mrb[0].mxu0
        %v1714 = vadd.f32 0.0, %v1713
        %v1715 = vpop.f32.mrb[0].mxu0
        %v1716 = vpop.f32.mrb[0].mxu0
        %v1717 = vadd.f32 0.0, %v1716
        %v1718 = vpop.f32.mrb[0].mxu0
        %1719 = vdwg.mxu0
        %1720 = vst.msk [vmem:[#allocation3] sm:$0xff] %vm1549, %v1706
        %1721 = vst.msk [vmem:[#allocation3 + $0x10] sm:$0xff] %vm1549, %v1709
        %1722 = vst.msk [vmem:[#allocation3 + $0x20] sm:$0xff] %vm1549, %v1714
        %1723 = vst.msk [vmem:[#allocation3 + $0x30] sm:$0xff] %vm1549, %v1717
        %1726 = vrot.lane.b32.xlu0 %v1543, 96
        %v1727 = vpop.permute.xlu0 %1726
        %1728 = vrot.lane.b32.xlu0 %v1544, 96
        %v1729 = vpop.permute.xlu0 %1728
        %1732 = vrot.lane.b32.xlu0 %v1545, 96
        %v1733 = vpop.permute.xlu0 %1732
        %1734 = vrot.lane.b32.xlu0 %v1546, 96
        %v1735 = vpop.permute.xlu0 %1734
        %v1737 = vsel %vm1549, %v1727, 0
        %v1740 = vsel %vm1549, %v1729, 0
        %v1743 = vsel %vm1549, %v1733, 0
        %v1746 = vsel %vm1549, %v1735, 0
        %1748 = vmatprep.subr.bf16.mxu0 0
        %1749 = vmatpush1.bf16.xpose.msra.mxu0 %v1743
        %1750 = vmatprep.subr.bf16.mxu0 0
        %1751 = vmatpush1.bf16.xpose.msra.mxu0 %v1746
        %1752 = vmatprep.subr.bf16.mxu0 0
        %1753 = vmatpush1.bf16.xpose.msra.mxu0 0
        %1754 = vmatprep.subr.bf16.mxu0 0
        %1755 = vmatpush1.bf16.xpose.msra.mxu0 0
        %1756 = vmatprep.subr.bf16.mxu0 0
        %1757 = vmatpush1.bf16.xpose.msra.mxu0 0
        %1758 = vmatprep.subr.bf16.mxu0 0
        %1759 = vmatpush1.bf16.xpose.msra.mxu0 0
        %1760 = vmatprep.subr.bf16.mxu0 0
        %1761 = vmatpush1.bf16.xpose.msra.mxu0 0
        %1762 = vmatprep.subr.bf16.mxu0 0
        %1763 = vmatpush1.bf16.xpose.msra.mxu0 0
        %1764 = vmatprep.subr.bf16.mxu0 0
        %1765 = vmatpush1.bf16.xpose.msra.mxu0 0
        %1766 = vmatprep.subr.bf16.mxu0 0
        %1767 = vmatpush1.bf16.xpose.msra.mxu0 0
        %1768 = vmatprep.subr.bf16.mxu0 0
        %1769 = vmatpush1.bf16.xpose.msra.mxu0 0
        %1770 = vmatprep.subr.bf16.mxu0 0
        %1771 = vmatpush1.bf16.xpose.msra.mxu0 0
        %1772 = vmatprep.subr.bf16.mxu0 0
        %1773 = vmatpush1.bf16.xpose.msra.mxu0 0
        %1774 = vmatprep.subr.bf16.mxu0 0
        %1775 = vmatpush1.bf16.xpose.msra.mxu0 0
        %1776 = vmatprep.subr.bf16.mxu0 0
        %1777 = vmatpush1.bf16.xpose.msra.mxu0 0
        %1778 = vmatprep.subr.bf16.mxu0 0
        %1779 = vmatpush1.bf16.xpose.msra.mxu0 0
        %1780 = vmatprep.mubr.bf16.mxu0 0
        %1781 = vmatmul.mubr.bf16.gmra.mrb[0].mxu0 %v1737
        %v1782 = vpop.f32.mrb[0].mxu0
        %v1783 = vadd.f32 0.0, %v1782
        %v1784 = vpop.f32.mrb[0].mxu0
        %v1785 = vpop.f32.mrb[0].mxu0
        %v1786 = vadd.f32 0.0, %v1785
        %v1787 = vpop.f32.mrb[0].mxu0
        %1788 = vmatprep.mubr.bf16.mxu0 0
        %1789 = vmatmul.mubr.bf16.gmra.mrb[0].mxu0 %v1740
        %v1790 = vpop.f32.mrb[0].mxu0
        %v1791 = vadd.f32 0.0, %v1790
        %v1792 = vpop.f32.mrb[0].mxu0
        %v1793 = vpop.f32.mrb[0].mxu0
        %v1794 = vadd.f32 0.0, %v1793
        %v1795 = vpop.f32.mrb[0].mxu0
        %1796 = vdwg.mxu0
        %v1797 = vmul.f32 %v1783, 0.18898223
        %v1798 = vmul.f32 %v1786, 0.18898223
        %v1799 = vmul.f32 %v1791, 0.18898223
        %v1800 = vmul.f32 %v1794, 0.18898223
        %v1801 = vadd.f32 %v1797, %v1539
        %v1802 = vadd.f32 %v1798, %v1540
        %v1803 = vadd.f32 %v1799, %v1541
        %v1804 = vadd.f32 %v1800, %v1542
        %v1805 = vsel %vm1549, %v1801, -inf
        %1806 = vmax.xlane.f32.xlu0 %v1805
        %v1807 = vpop.xlane.xlu0 %1806
        %v1808 = vsel %vm1549, %v1802, -inf
        %1809 = vmax.xlane.f32.xlu0 %v1808
        %v1810 = vpop.xlane.xlu0 %1809
        %v1811 = vsel %vm1549, %v1803, -inf
        %1812 = vmax.xlane.f32.xlu0 %v1811
        %v1813 = vpop.xlane.xlu0 %1812
        %v1814 = vsel %vm1549, %v1804, -inf
        %1815 = vmax.xlane.f32.xlu0 %v1814
        %v1816 = vpop.xlane.xlu0 %1815
        %v1817 = vsub.f32 %v1801, %v1807
        %v1818 = vsub.f32 %v1802, %v1810
        %v1819 = vsub.f32 %v1803, %v1813
        %v1820 = vsub.f32 %v1804, %v1816
        %v1821 = vmul.f32 %v1817, 1.442695
        %v1822 = vpow.pop %v1821
        %v1823 = vmul.f32 %v1818, 1.442695
        %v1824 = vpow.pop %v1823
        %v1825 = vmul.f32 %v1819, 1.442695
        %v1826 = vpow.pop %v1825
        %v1827 = vmul.f32 %v1820, 1.442695
        %v1828 = vpow.pop %v1827
        %v1829 = vsel %vm1549, %v1822, 0.0
        %1830 = vadd.xlane.f32.xlu0 %v1829
        %v1831 = vpop.xlane.xlu0 %1830
        %v1832 = vsel %vm1549, %v1824, 0.0
        %1833 = vadd.xlane.f32.xlu0 %v1832
        %v1834 = vpop.xlane.xlu0 %1833
        %v1835 = vsel %vm1549, %v1826, 0.0
        %1836 = vadd.xlane.f32.xlu0 %v1835
        %v1837 = vpop.xlane.xlu0 %1836
        %v1838 = vsel %vm1549, %v1828, 0.0
        %1839 = vadd.xlane.f32.xlu0 %v1838
        %v1840 = vpop.xlane.xlu0 %1839
        %v1841 = vrcp.pop %v1831
        %v1842 = vrcp.pop %v1834
        %v1843 = vrcp.pop %v1837
        %v1844 = vrcp.pop %v1840
        %v1845 = vmul.f32 %v1822, %v1841
        %v1846 = vmul.f32 %v1824, %v1842
        %v1847 = vmul.f32 %v1826, %v1843
        %v1848 = vmul.f32 %v1828, %v1844
        %v1849 = vpack.c.bf16 %v1846, %v1845
        %v1850 = vpack.c.bf16 %v1848, %v1847
        %1853 = vrot.lane.b32.xlu0 %v1547, 96
        %v1854 = vpop.permute.xlu0 %1853
        %1855 = vrot.lane.b32.xlu0 %v1548, 96
        %v1856 = vpop.permute.xlu0 %1855
        %v1860 = vsel %vm1549, %v1849, 0
        %v1863 = vsel %vm1549, %v1850, 0
        %1865 = vmatprep.subr.bf16.mxu0 0
        %1866 = vmatpush1.bf16.msra.mxu0 %v1854
        %1867 = vmatprep.subr.bf16.mxu0 0
        %1868 = vmatpush1.bf16.msra.mxu0 %v1856
        %1869 = vmatprep.subr.bf16.mxu0 0
        %1870 = vmatpush1.bf16.msra.mxu0 0
        %1871 = vmatprep.subr.bf16.mxu0 0
        %1872 = vmatpush1.bf16.msra.mxu0 0
        %1873 = vmatprep.subr.bf16.mxu0 0
        %1874 = vmatpush1.bf16.msra.mxu0 0
        %1875 = vmatprep.subr.bf16.mxu0 0
        %1876 = vmatpush1.bf16.msra.mxu0 0
        %1877 = vmatprep.subr.bf16.mxu0 0
        %1878 = vmatpush1.bf16.msra.mxu0 0
        %1879 = vmatprep.subr.bf16.mxu0 0
        %1880 = vmatpush1.bf16.msra.mxu0 0
        %1881 = vmatprep.subr.bf16.mxu0 0
        %1882 = vmatpush1.bf16.msra.mxu0 0
        %1883 = vmatprep.subr.bf16.mxu0 0
        %1884 = vmatpush1.bf16.msra.mxu0 0
        %1885 = vmatprep.subr.bf16.mxu0 0
        %1886 = vmatpush1.bf16.msra.mxu0 0
        %1887 = vmatprep.subr.bf16.mxu0 0
        %1888 = vmatpush1.bf16.msra.mxu0 0
        %1889 = vmatprep.subr.bf16.mxu0 0
        %1890 = vmatpush1.bf16.msra.mxu0 0
        %1891 = vmatprep.subr.bf16.mxu0 0
        %1892 = vmatpush1.bf16.msra.mxu0 0
        %1893 = vmatprep.subr.bf16.mxu0 0
        %1894 = vmatpush1.bf16.msra.mxu0 0
        %1895 = vmatprep.subr.bf16.mxu0 0
        %1896 = vmatpush1.bf16.msra.mxu0 0
        %1897 = vmatprep.mubr.bf16.mxu0 0
        %1898 = vmatmul.mubr.bf16.gmra.mrb[0].mxu0 %v1860
        %v1899 = vpop.f32.mrb[0].mxu0
        %v1900 = vadd.f32 0.0, %v1899
        %v1901 = vpop.f32.mrb[0].mxu0
        %v1902 = vpop.f32.mrb[0].mxu0
        %v1903 = vadd.f32 0.0, %v1902
        %v1904 = vpop.f32.mrb[0].mxu0
        %1905 = vmatprep.mubr.bf16.mxu0 0
        %1906 = vmatmul.mubr.bf16.gmra.mrb[0].mxu0 %v1863
        %v1907 = vpop.f32.mrb[0].mxu0
        %v1908 = vadd.f32 0.0, %v1907
        %v1909 = vpop.f32.mrb[0].mxu0
        %v1910 = vpop.f32.mrb[0].mxu0
        %v1911 = vadd.f32 0.0, %v1910
        %v1912 = vpop.f32.mrb[0].mxu0
        %1913 = vdwg.mxu0
        %1918 = vrot.lane.b32.xlu0 %v1900, 32
        %v1919 = vpop.permute.xlu0 %1918
        %1920 = vrot.lane.b32.xlu0 %v1903, 32
        %v1921 = vpop.permute.xlu0 %1920
        %1922 = vrot.lane.b32.xlu0 %v1908, 32
        %v1923 = vpop.permute.xlu0 %1922
        %1924 = vrot.lane.b32.xlu0 %v1911, 32
        %v1925 = vpop.permute.xlu0 %1924
        %vm1930 = vcmask 523520
        %1931 = vst.msk [vmem:[#allocation3] sm:$0xff] %vm1930, %v1919
        %1932 = vst.msk [vmem:[#allocation3 + $0x10] sm:$0xff] %vm1930, %v1921
        %1933 = vst.msk [vmem:[#allocation3 + $0x20] sm:$0xff] %vm1930, %v1923
        %1934 = vst.msk [vmem:[#allocation3 + $0x30] sm:$0xff] %vm1930, %v1925
        %1935 = vrot.lane.b32.xlu0 %v1543, 64
        %v1936 = vpop.permute.xlu0 %1935
        %1937 = vrot.lane.b32.xlu0 %v1544, 64
        %v1938 = vpop.permute.xlu0 %1937
        %1939 = vrot.lane.b32.xlu0 %v1545, 64
        %v1940 = vpop.permute.xlu0 %1939
        %1941 = vrot.lane.b32.xlu0 %v1546, 64
        %v1942 = vpop.permute.xlu0 %1941
        %v1944 = vsel %vm1549, %v1936, 0
        %v1947 = vsel %vm1549, %v1938, 0
        %v1950 = vsel %vm1549, %v1940, 0
        %v1953 = vsel %vm1549, %v1942, 0
        %1955 = vmatprep.subr.bf16.mxu0 0
        %1956 = vmatpush1.bf16.xpose.msra.mxu0 %v1950
        %1957 = vmatprep.subr.bf16.mxu0 0
        %1958 = vmatpush1.bf16.xpose.msra.mxu0 %v1953
        %1959 = vmatprep.subr.bf16.mxu0 0
        %1960 = vmatpush1.bf16.xpose.msra.mxu0 0
        %1961 = vmatprep.subr.bf16.mxu0 0
        %1962 = vmatpush1.bf16.xpose.msra.mxu0 0
        %1963 = vmatprep.subr.bf16.mxu0 0
        %1964 = vmatpush1.bf16.xpose.msra.mxu0 0
        %1965 = vmatprep.subr.bf16.mxu0 0
        %1966 = vmatpush1.bf16.xpose.msra.mxu0 0
        %1967 = vmatprep.subr.bf16.mxu0 0
        %1968 = vmatpush1.bf16.xpose.msra.mxu0 0
        %1969 = vmatprep.subr.bf16.mxu0 0
        %1970 = vmatpush1.bf16.xpose.msra.mxu0 0
        %1971 = vmatprep.subr.bf16.mxu0 0
        %1972 = vmatpush1.bf16.xpose.msra.mxu0 0
        %1973 = vmatprep.subr.bf16.mxu0 0
        %1974 = vmatpush1.bf16.xpose.msra.mxu0 0
        %1975 = vmatprep.subr.bf16.mxu0 0
        %1976 = vmatpush1.bf16.xpose.msra.mxu0 0
        %1977 = vmatprep.subr.bf16.mxu0 0
        %1978 = vmatpush1.bf16.xpose.msra.mxu0 0
        %1979 = vmatprep.subr.bf16.mxu0 0
        %1980 = vmatpush1.bf16.xpose.msra.mxu0 0
        %1981 = vmatprep.subr.bf16.mxu0 0
        %1982 = vmatpush1.bf16.xpose.msra.mxu0 0
        %1983 = vmatprep.subr.bf16.mxu0 0
        %1984 = vmatpush1.bf16.xpose.msra.mxu0 0
        %1985 = vmatprep.subr.bf16.mxu0 0
        %1986 = vmatpush1.bf16.xpose.msra.mxu0 0
        %1987 = vmatprep.mubr.bf16.mxu0 0
        %1988 = vmatmul.mubr.bf16.gmra.mrb[0].mxu0 %v1944
        %v1989 = vpop.f32.mrb[0].mxu0
        %v1990 = vadd.f32 0.0, %v1989
        %v1991 = vpop.f32.mrb[0].mxu0
        %v1992 = vpop.f32.mrb[0].mxu0
        %v1993 = vadd.f32 0.0, %v1992
        %v1994 = vpop.f32.mrb[0].mxu0
        %1995 = vmatprep.mubr.bf16.mxu0 0
        %1996 = vmatmul.mubr.bf16.gmra.mrb[0].mxu0 %v1947
        %v1997 = vpop.f32.mrb[0].mxu0
        %v1998 = vadd.f32 0.0, %v1997
        %v1999 = vpop.f32.mrb[0].mxu0
        %v2000 = vpop.f32.mrb[0].mxu0
        %v2001 = vadd.f32 0.0, %v2000
        %v2002 = vpop.f32.mrb[0].mxu0
        %2003 = vdwg.mxu0
        %v2004 = vmul.f32 %v1990, 0.18898223
        %v2005 = vmul.f32 %v1993, 0.18898223
        %v2006 = vmul.f32 %v1998, 0.18898223
        %v2007 = vmul.f32 %v2001, 0.18898223
        %v2008 = vadd.f32 %v2004, %v1539
        %v2009 = vadd.f32 %v2005, %v1540
        %v2010 = vadd.f32 %v2006, %v1541
        %v2011 = vadd.f32 %v2007, %v1542
        %v2012 = vsel %vm1549, %v2008, -inf
        %2013 = vmax.xlane.f32.xlu0 %v2012
        %v2014 = vpop.xlane.xlu0 %2013
        %v2015 = vsel %vm1549, %v2009, -inf
        %2016 = vmax.xlane.f32.xlu0 %v2015
        %v2017 = vpop.xlane.xlu0 %2016
        %v2018 = vsel %vm1549, %v2010, -inf
        %2019 = vmax.xlane.f32.xlu0 %v2018
        %v2020 = vpop.xlane.xlu0 %2019
        %v2021 = vsel %vm1549, %v2011, -inf
        %2022 = vmax.xlane.f32.xlu0 %v2021
        %v2023 = vpop.xlane.xlu0 %2022
        %v2024 = vsub.f32 %v2008, %v2014
        %v2025 = vsub.f32 %v2009, %v2017
        %v2026 = vsub.f32 %v2010, %v2020
        %v2027 = vsub.f32 %v2011, %v2023
        %v2028 = vmul.f32 %v2024, 1.442695
        %v2029 = vpow.pop %v2028
        %v2030 = vmul.f32 %v2025, 1.442695
        %v2031 = vpow.pop %v2030
        %v2032 = vmul.f32 %v2026, 1.442695
        %v2033 = vpow.pop %v2032
        %v2034 = vmul.f32 %v2027, 1.442695
        %v2035 = vpow.pop %v2034
        %v2036 = vsel %vm1549, %v2029, 0.0
        %2037 = vadd.xlane.f32.xlu0 %v2036
        %v2038 = vpop.xlane.xlu0 %2037
        %v2039 = vsel %vm1549, %v2031, 0.0
        %2040 = vadd.xlane.f32.xlu0 %v2039
        %v2041 = vpop.xlane.xlu0 %2040
        %v2042 = vsel %vm1549, %v2033, 0.0
        %2043 = vadd.xlane.f32.xlu0 %v2042
        %v2044 = vpop.xlane.xlu0 %2043
        %v2045 = vsel %vm1549, %v2035, 0.0
        %2046 = vadd.xlane.f32.xlu0 %v2045
        %v2047 = vpop.xlane.xlu0 %2046
        %v2048 = vrcp.pop %v2038
        %v2049 = vrcp.pop %v2041
        %v2050 = vrcp.pop %v2044
        %v2051 = vrcp.pop %v2047
        %v2052 = vmul.f32 %v2029, %v2048
        %v2053 = vmul.f32 %v2031, %v2049
        %v2054 = vmul.f32 %v2033, %v2050
        %v2055 = vmul.f32 %v2035, %v2051
        %v2056 = vpack.c.bf16 %v2053, %v2052
        %v2057 = vpack.c.bf16 %v2055, %v2054
        %2058 = vrot.lane.b32.xlu0 %v1547, 64
        %v2059 = vpop.permute.xlu0 %2058
        %2060 = vrot.lane.b32.xlu0 %v1548, 64
        %v2061 = vpop.permute.xlu0 %2060
        %v2065 = vsel %vm1549, %v2056, 0
        %v2068 = vsel %vm1549, %v2057, 0
        %2070 = vmatprep.subr.bf16.mxu0 0
        %2071 = vmatpush1.bf16.msra.mxu0 %v2059
        %2072 = vmatprep.subr.bf16.mxu0 0
        %2073 = vmatpush1.bf16.msra.mxu0 %v2061
        %2074 = vmatprep.subr.bf16.mxu0 0
        %2075 = vmatpush1.bf16.msra.mxu0 0
        %2076 = vmatprep.subr.bf16.mxu0 0
        %2077 = vmatpush1.bf16.msra.mxu0 0
        %2078 = vmatprep.subr.bf16.mxu0 0
        %2079 = vmatpush1.bf16.msra.mxu0 0
        %2080 = vmatprep.subr.bf16.mxu0 0
        %2081 = vmatpush1.bf16.msra.mxu0 0
        %2082 = vmatprep.subr.bf16.mxu0 0
        %2083 = vmatpush1.bf16.msra.mxu0 0
        %2084 = vmatprep.subr.bf16.mxu0 0
        %2085 = vmatpush1.bf16.msra.mxu0 0
        %2086 = vmatprep.subr.bf16.mxu0 0
        %2087 = vmatpush1.bf16.msra.mxu0 0
        %2088 = vmatprep.subr.bf16.mxu0 0
        %2089 = vmatpush1.bf16.msra.mxu0 0
        %2090 = vmatprep.subr.bf16.mxu0 0
        %2091 = vmatpush1.bf16.msra.mxu0 0
        %2092 = vmatprep.subr.bf16.mxu0 0
        %2093 = vmatpush1.bf16.msra.mxu0 0
        %2094 = vmatprep.subr.bf16.mxu0 0
        %2095 = vmatpush1.bf16.msra.mxu0 0
        %2096 = vmatprep.subr.bf16.mxu0 0
        %2097 = vmatpush1.bf16.msra.mxu0 0
        %2098 = vmatprep.subr.bf16.mxu0 0
        %2099 = vmatpush1.bf16.msra.mxu0 0
        %2100 = vmatprep.subr.bf16.mxu0 0
        %2101 = vmatpush1.bf16.msra.mxu0 0
        %2102 = vmatprep.mubr.bf16.mxu0 0
        %2103 = vmatmul.mubr.bf16.gmra.mrb[0].mxu0 %v2065
        %v2104 = vpop.f32.mrb[0].mxu0
        %v2105 = vadd.f32 0.0, %v2104
        %v2106 = vpop.f32.mrb[0].mxu0
        %v2107 = vpop.f32.mrb[0].mxu0
        %v2108 = vadd.f32 0.0, %v2107
        %v2109 = vpop.f32.mrb[0].mxu0
        %2110 = vmatprep.mubr.bf16.mxu0 0
        %2111 = vmatmul.mubr.bf16.gmra.mrb[0].mxu0 %v2068
        %v2112 = vpop.f32.mrb[0].mxu0
        %v2113 = vadd.f32 0.0, %v2112
        %v2114 = vpop.f32.mrb[0].mxu0
        %v2115 = vpop.f32.mrb[0].mxu0
        %v2116 = vadd.f32 0.0, %v2115
        %v2117 = vpop.f32.mrb[0].mxu0
        %2118 = vdwg.mxu0
        %2123 = vrot.lane.b32.xlu0 %v2105, 64
        %v2124 = vpop.permute.xlu0 %2123
        %2125 = vrot.lane.b32.xlu0 %v2108, 64
        %v2126 = vpop.permute.xlu0 %2125
        %2127 = vrot.lane.b32.xlu0 %v2113, 64
        %v2128 = vpop.permute.xlu0 %2127
        %2129 = vrot.lane.b32.xlu0 %v2116, 64
        %v2130 = vpop.permute.xlu0 %2129
        %vm2135 = vcmask 785920
        %2136 = vst.msk [vmem:[#allocation3] sm:$0xff] %vm2135, %v2124
        %2137 = vst.msk [vmem:[#allocation3 + $0x10] sm:$0xff] %vm2135, %v2126
        %2138 = vst.msk [vmem:[#allocation3 + $0x20] sm:$0xff] %vm2135, %v2128
        %2139 = vst.msk [vmem:[#allocation3 + $0x30] sm:$0xff] %vm2135, %v2130
        %2140 = vrot.lane.b32.xlu0 %v1543, 32
        %v2141 = vpop.permute.xlu0 %2140
        %2142 = vrot.lane.b32.xlu0 %v1544, 32
        %v2143 = vpop.permute.xlu0 %2142
        %2144 = vrot.lane.b32.xlu0 %v1545, 32
        %v2145 = vpop.permute.xlu0 %2144
        %2146 = vrot.lane.b32.xlu0 %v1546, 32
        %v2147 = vpop.permute.xlu0 %2146
        %v2149 = vsel %vm1549, %v2141, 0
        %v2152 = vsel %vm1549, %v2143, 0
        %v2155 = vsel %vm1549, %v2145, 0
        %v2158 = vsel %vm1549, %v2147, 0
        %2160 = vmatprep.subr.bf16.mxu0 0
        %2161 = vmatpush1.bf16.xpose.msra.mxu0 %v2155
        %2162 = vmatprep.subr.bf16.mxu0 0
        %2163 = vmatpush1.bf16.xpose.msra.mxu0 %v2158
        %2164 = vmatprep.subr.bf16.mxu0 0
        %2165 = vmatpush1.bf16.xpose.msra.mxu0 0
        %2166 = vmatprep.subr.bf16.mxu0 0
        %2167 = vmatpush1.bf16.xpose.msra.mxu0 0
        %2168 = vmatprep.subr.bf16.mxu0 0
        %2169 = vmatpush1.bf16.xpose.msra.mxu0 0
        %2170 = vmatprep.subr.bf16.mxu0 0
        %2171 = vmatpush1.bf16.xpose.msra.mxu0 0
        %2172 = vmatprep.subr.bf16.mxu0 0
        %2173 = vmatpush1.bf16.xpose.msra.mxu0 0
        %2174 = vmatprep.subr.bf16.mxu0 0
        %2175 = vmatpush1.bf16.xpose.msra.mxu0 0
        %2176 = vmatprep.subr.bf16.mxu0 0
        %2177 = vmatpush1.bf16.xpose.msra.mxu0 0
        %2178 = vmatprep.subr.bf16.mxu0 0
        %2179 = vmatpush1.bf16.xpose.msra.mxu0 0
        %2180 = vmatprep.subr.bf16.mxu0 0
        %2181 = vmatpush1.bf16.xpose.msra.mxu0 0
        %2182 = vmatprep.subr.bf16.mxu0 0
        %2183 = vmatpush1.bf16.xpose.msra.mxu0 0
        %2184 = vmatprep.subr.bf16.mxu0 0
        %2185 = vmatpush1.bf16.xpose.msra.mxu0 0
        %2186 = vmatprep.subr.bf16.mxu0 0
        %2187 = vmatpush1.bf16.xpose.msra.mxu0 0
        %2188 = vmatprep.subr.bf16.mxu0 0
        %2189 = vmatpush1.bf16.xpose.msra.mxu0 0
        %2190 = vmatprep.subr.bf16.mxu0 0
        %2191 = vmatpush1.bf16.xpose.msra.mxu0 0
        %2192 = vmatprep.mubr.bf16.mxu0 0
        %2193 = vmatmul.mubr.bf16.gmra.mrb[0].mxu0 %v2149
        %v2194 = vpop.f32.mrb[0].mxu0
        %v2195 = vadd.f32 0.0, %v2194
        %v2196 = vpop.f32.mrb[0].mxu0
        %v2197 = vpop.f32.mrb[0].mxu0
        %v2198 = vadd.f32 0.0, %v2197
        %v2199 = vpop.f32.mrb[0].mxu0
        %2200 = vmatprep.mubr.bf16.mxu0 0
        %2201 = vmatmul.mubr.bf16.gmra.mrb[0].mxu0 %v2152
        %v2202 = vpop.f32.mrb[0].mxu0
        %v2203 = vadd.f32 0.0, %v2202
        %v2204 = vpop.f32.mrb[0].mxu0
        %v2205 = vpop.f32.mrb[0].mxu0
        %v2206 = vadd.f32 0.0, %v2205
        %v2207 = vpop.f32.mrb[0].mxu0
        %2208 = vdwg.mxu0
        %v2209 = vmul.f32 %v2195, 0.18898223
        %v2210 = vmul.f32 %v2198, 0.18898223
        %v2211 = vmul.f32 %v2203, 0.18898223
        %v2212 = vmul.f32 %v2206, 0.18898223
        %v2213 = vadd.f32 %v2209, %v1539
        %v2214 = vadd.f32 %v2210, %v1540
        %v2215 = vadd.f32 %v2211, %v1541
        %v2216 = vadd.f32 %v2212, %v1542
        %v2217 = vsel %vm1549, %v2213, -inf
        %2218 = vmax.xlane.f32.xlu0 %v2217
        %v2219 = vpop.xlane.xlu0 %2218
        %v2220 = vsel %vm1549, %v2214, -inf
        %2221 = vmax.xlane.f32.xlu0 %v2220
        %v2222 = vpop.xlane.xlu0 %2221
        %v2223 = vsel %vm1549, %v2215, -inf
        %2224 = vmax.xlane.f32.xlu0 %v2223
        %v2225 = vpop.xlane.xlu0 %2224
        %v2226 = vsel %vm1549, %v2216, -inf
        %2227 = vmax.xlane.f32.xlu0 %v2226
        %v2228 = vpop.xlane.xlu0 %2227
        %v2229 = vsub.f32 %v2213, %v2219
        %v2230 = vsub.f32 %v2214, %v2222
        %v2231 = vsub.f32 %v2215, %v2225
        %v2232 = vsub.f32 %v2216, %v2228
        %v2233 = vmul.f32 %v2229, 1.442695
        %v2234 = vpow.pop %v2233
        %v2235 = vmul.f32 %v2230, 1.442695
        %v2236 = vpow.pop %v2235
        %v2237 = vmul.f32 %v2231, 1.442695
        %v2238 = vpow.pop %v2237
        %v2239 = vmul.f32 %v2232, 1.442695
        %v2240 = vpow.pop %v2239
        %v2241 = vsel %vm1549, %v2234, 0.0
        %2242 = vadd.xlane.f32.xlu0 %v2241
        %v2243 = vpop.xlane.xlu0 %2242
        %v2244 = vsel %vm1549, %v2236, 0.0
        %2245 = vadd.xlane.f32.xlu0 %v2244
        %v2246 = vpop.xlane.xlu0 %2245
        %v2247 = vsel %vm1549, %v2238, 0.0
        %2248 = vadd.xlane.f32.xlu0 %v2247
        %v2249 = vpop.xlane.xlu0 %2248
        %v2250 = vsel %vm1549, %v2240, 0.0
        %2251 = vadd.xlane.f32.xlu0 %v2250
        %v2252 = vpop.xlane.xlu0 %2251
        %v2253 = vrcp.pop %v2243
        %v2254 = vrcp.pop %v2246
        %v2255 = vrcp.pop %v2249
        %v2256 = vrcp.pop %v2252
        %v2257 = vmul.f32 %v2234, %v2253
        %v2258 = vmul.f32 %v2236, %v2254
        %v2259 = vmul.f32 %v2238, %v2255
        %v2260 = vmul.f32 %v2240, %v2256
        %v2261 = vpack.c.bf16 %v2258, %v2257
        %v2262 = vpack.c.bf16 %v2260, %v2259
        %2263 = vrot.lane.b32.xlu0 %v1547, 32
        %v2264 = vpop.permute.xlu0 %2263
        %2265 = vrot.lane.b32.xlu0 %v1548, 32
        %v2266 = vpop.permute.xlu0 %2265
        %v2270 = vsel %vm1549, %v2261, 0
        %v2273 = vsel %vm1549, %v2262, 0
        %2275 = vmatprep.subr.bf16.mxu0 0
        %2276 = vmatpush1.bf16.msra.mxu0 %v2264
        %2277 = vmatprep.subr.bf16.mxu0 0
        %2278 = vmatpush1.bf16.msra.mxu0 %v2266
        %2279 = vmatprep.subr.bf16.mxu0 0
        %2280 = vmatpush1.bf16.msra.mxu0 0
        %2281 = vmatprep.subr.bf16.mxu0 0
        %2282 = vmatpush1.bf16.msra.mxu0 0
        %2283 = vmatprep.subr.bf16.mxu0 0
        %2284 = vmatpush1.bf16.msra.mxu0 0
        %2285 = vmatprep.subr.bf16.mxu0 0
        %2286 = vmatpush1.bf16.msra.mxu0 0
        %2287 = vmatprep.subr.bf16.mxu0 0
        %2288 = vmatpush1.bf16.msra.mxu0 0
        %2289 = vmatprep.subr.bf16.mxu0 0
        %2290 = vmatpush1.bf16.msra.mxu0 0
        %2291 = vmatprep.subr.bf16.mxu0 0
        %2292 = vmatpush1.bf16.msra.mxu0 0
        %2293 = vmatprep.subr.bf16.mxu0 0
        %2294 = vmatpush1.bf16.msra.mxu0 0
        %2295 = vmatprep.subr.bf16.mxu0 0
        %2296 = vmatpush1.bf16.msra.mxu0 0
        %2297 = vmatprep.subr.bf16.mxu0 0
        %2298 = vmatpush1.bf16.msra.mxu0 0
        %2299 = vmatprep.subr.bf16.mxu0 0
        %2300 = vmatpush1.bf16.msra.mxu0 0
        %2301 = vmatprep.subr.bf16.mxu0 0
        %2302 = vmatpush1.bf16.msra.mxu0 0
        %2303 = vmatprep.subr.bf16.mxu0 0
        %2304 = vmatpush1.bf16.msra.mxu0 0
        %2305 = vmatprep.subr.bf16.mxu0 0
        %2306 = vmatpush1.bf16.msra.mxu0 0
        %2307 = vmatprep.mubr.bf16.mxu0 0
        %2308 = vmatmul.mubr.bf16.gmra.mrb[0].mxu0 %v2270
        %v2309 = vpop.f32.mrb[0].mxu0
        %v2310 = vadd.f32 0.0, %v2309
        %v2311 = vpop.f32.mrb[0].mxu0
        %v2312 = vpop.f32.mrb[0].mxu0
        %v2313 = vadd.f32 0.0, %v2312
        %v2314 = vpop.f32.mrb[0].mxu0
        %2315 = vmatprep.mubr.bf16.mxu0 0
        %2316 = vmatmul.mubr.bf16.gmra.mrb[0].mxu0 %v2273
        %v2317 = vpop.f32.mrb[0].mxu0
        %v2318 = vadd.f32 0.0, %v2317
        %v2319 = vpop.f32.mrb[0].mxu0
        %v2320 = vpop.f32.mrb[0].mxu0
        %v2321 = vadd.f32 0.0, %v2320
        %v2322 = vpop.f32.mrb[0].mxu0
        %2323 = vdwg.mxu0
        %2328 = vrot.lane.b32.xlu0 %v2310, 96
        %v2329 = vpop.permute.xlu0 %2328
        %2330 = vrot.lane.b32.xlu0 %v2313, 96
        %v2331 = vpop.permute.xlu0 %2330
        %2332 = vrot.lane.b32.xlu0 %v2318, 96
        %v2333 = vpop.permute.xlu0 %2332
        %2334 = vrot.lane.b32.xlu0 %v2321, 96
        %v2335 = vpop.permute.xlu0 %2334
        %vm2340 = vcmask 1048320
        %2341 = vst.msk [vmem:[#allocation3] sm:$0xff] %vm2340, %v2329
        %2342 = vst.msk [vmem:[#allocation3 + $0x10] sm:$0xff] %vm2340, %v2331
        %2343 = vst.msk [vmem:[#allocation3 + $0x20] sm:$0xff] %vm2340, %v2333
        %2344 = vst.msk [vmem:[#allocation3 + $0x30] sm:$0xff] %vm2340, %v2335
        %v2345 = vpack.c.bf16 %v1213, %v1209
        %v2346 = vpack.c.bf16 %v1223, %v1219
        %v2347 = vpack.c.bf16 %v1266, %v1262
        %v2348 = vpack.c.bf16 %v1276, %v1272
        %v2349 = vpack.c.bf16 %v1527, %v1523
        %v2350 = vpack.c.bf16 %v1537, %v1533
        %v2352 = vsel %vm1549, %v2345, 0
        %v2355 = vsel %vm1549, %v2346, 0
        %v2358 = vsel %vm1549, %v2347, 0
        %v2361 = vsel %vm1549, %v2348, 0
        %2363 = vmatprep.subr.bf16.mxu0 0
        %2364 = vmatpush1.bf16.xpose.msra.mxu0 %v2358
        %2365 = vmatprep.subr.bf16.mxu0 0
        %2366 = vmatpush1.bf16.xpose.msra.mxu0 %v2361
        %2367 = vmatprep.subr.bf16.mxu0 0
        %2368 = vmatpush1.bf16.xpose.msra.mxu0 0
        %2369 = vmatprep.subr.bf16.mxu0 0
        %2370 = vmatpush1.bf16.xpose.msra.mxu0 0
        %2371 = vmatprep.subr.bf16.mxu0 0
        %2372 = vmatpush1.bf16.xpose.msra.mxu0 0
        %2373 = vmatprep.subr.bf16.mxu0 0
        %2374 = vmatpush1.bf16.xpose.msra.mxu0 0
        %2375 = vmatprep.subr.bf16.mxu0 0
        %2376 = vmatpush1.bf16.xpose.msra.mxu0 0
        %2377 = vmatprep.subr.bf16.mxu0 0
        %2378 = vmatpush1.bf16.xpose.msra.mxu0 0
        %2379 = vmatprep.subr.bf16.mxu0 0
        %2380 = vmatpush1.bf16.xpose.msra.mxu0 0
        %2381 = vmatprep.subr.bf16.mxu0 0
        %2382 = vmatpush1.bf16.xpose.msra.mxu0 0
        %2383 = vmatprep.subr.bf16.mxu0 0
        %2384 = vmatpush1.bf16.xpose.msra.mxu0 0
        %2385 = vmatprep.subr.bf16.mxu0 0
        %2386 = vmatpush1.bf16.xpose.msra.mxu0 0
        %2387 = vmatprep.subr.bf16.mxu0 0
        %2388 = vmatpush1.bf16.xpose.msra.mxu0 0
        %2389 = vmatprep.subr.bf16.mxu0 0
        %2390 = vmatpush1.bf16.xpose.msra.mxu0 0
        %2391 = vmatprep.subr.bf16.mxu0 0
        %2392 = vmatpush1.bf16.xpose.msra.mxu0 0
        %2393 = vmatprep.subr.bf16.mxu0 0
        %2394 = vmatpush1.bf16.xpose.msra.mxu0 0
        %2395 = vmatprep.mubr.bf16.mxu0 0
        %2396 = vmatmul.mubr.bf16.gmra.mrb[0].mxu0 %v2352
        %v2397 = vpop.f32.mrb[0].mxu0
        %v2398 = vadd.f32 0.0, %v2397
        %v2399 = vpop.f32.mrb[0].mxu0
        %v2400 = vpop.f32.mrb[0].mxu0
        %v2401 = vadd.f32 0.0, %v2400
        %v2402 = vpop.f32.mrb[0].mxu0
        %2403 = vmatprep.mubr.bf16.mxu0 0
        %2404 = vmatmul.mubr.bf16.gmra.mrb[0].mxu0 %v2355
        %v2405 = vpop.f32.mrb[0].mxu0
        %v2406 = vadd.f32 0.0, %v2405
        %v2407 = vpop.f32.mrb[0].mxu0
        %v2408 = vpop.f32.mrb[0].mxu0
        %v2409 = vadd.f32 0.0, %v2408
        %v2410 = vpop.f32.mrb[0].mxu0
        %2411 = vdwg.mxu0
        %v2412 = vmul.f32 %v2398, 0.18898223
        %v2413 = vmul.f32 %v2401, 0.18898223
        %v2414 = vmul.f32 %v2406, 0.18898223
        %v2415 = vmul.f32 %v2409, 0.18898223
        %v2416 = vadd.f32 %v2412, %v1539
        %v2417 = vadd.f32 %v2413, %v1540
        %v2418 = vadd.f32 %v2414, %v1541
        %v2419 = vadd.f32 %v2415, %v1542
        %v2420 = vsel %vm1549, %v2416, -inf
        %2421 = vmax.xlane.f32.xlu0 %v2420
        %v2422 = vpop.xlane.xlu0 %2421
        %v2423 = vsel %vm1549, %v2417, -inf
        %2424 = vmax.xlane.f32.xlu0 %v2423
        %v2425 = vpop.xlane.xlu0 %2424
        %v2426 = vsel %vm1549, %v2418, -inf
        %2427 = vmax.xlane.f32.xlu0 %v2426
        %v2428 = vpop.xlane.xlu0 %2427
        %v2429 = vsel %vm1549, %v2419, -inf
        %2430 = vmax.xlane.f32.xlu0 %v2429
        %v2431 = vpop.xlane.xlu0 %2430
        %v2432 = vsub.f32 %v2416, %v2422
        %v2433 = vsub.f32 %v2417, %v2425
        %v2434 = vsub.f32 %v2418, %v2428
        %v2435 = vsub.f32 %v2419, %v2431
        %v2436 = vmul.f32 %v2432, 1.442695
        %v2437 = vpow.pop %v2436
        %v2438 = vmul.f32 %v2433, 1.442695
        %v2439 = vpow.pop %v2438
        %v2440 = vmul.f32 %v2434, 1.442695
        %v2441 = vpow.pop %v2440
        %v2442 = vmul.f32 %v2435, 1.442695
        %v2443 = vpow.pop %v2442
        %v2444 = vsel %vm1549, %v2437, 0.0
        %2445 = vadd.xlane.f32.xlu0 %v2444
        %v2446 = vpop.xlane.xlu0 %2445
        %v2447 = vsel %vm1549, %v2439, 0.0
        %2448 = vadd.xlane.f32.xlu0 %v2447
        %v2449 = vpop.xlane.xlu0 %2448
        %v2450 = vsel %vm1549, %v2441, 0.0
        %2451 = vadd.xlane.f32.xlu0 %v2450
        %v2452 = vpop.xlane.xlu0 %2451
        %v2453 = vsel %vm1549, %v2443, 0.0
        %2454 = vadd.xlane.f32.xlu0 %v2453
        %v2455 = vpop.xlane.xlu0 %2454
        %v2456 = vrcp.pop %v2446
        %v2457 = vrcp.pop %v2449
        %v2458 = vrcp.pop %v2452
        %v2459 = vrcp.pop %v2455
        %v2460 = vmul.f32 %v2437, %v2456
        %v2461 = vmul.f32 %v2439, %v2457
        %v2462 = vmul.f32 %v2441, %v2458
        %v2463 = vmul.f32 %v2443, %v2459
        %v2464 = vpack.c.bf16 %v2461, %v2460
        %v2465 = vpack.c.bf16 %v2463, %v2462
        %v2467 = vsel %vm1549, %v2464, 0
        %v2470 = vsel %vm1549, %v2465, 0
        %2472 = vmatprep.subr.bf16.mxu0 0
        %2473 = vmatpush1.bf16.msra.mxu0 %v2349
        %2474 = vmatprep.subr.bf16.mxu0 0
        %2475 = vmatpush1.bf16.msra.mxu0 %v2350
        %2476 = vmatprep.subr.bf16.mxu0 0
        %2477 = vmatpush1.bf16.msra.mxu0 0
        %2478 = vmatprep.subr.bf16.mxu0 0
        %2479 = vmatpush1.bf16.msra.mxu0 0
        %2480 = vmatprep.subr.bf16.mxu0 0
        %2481 = vmatpush1.bf16.msra.mxu0 0
        %2482 = vmatprep.subr.bf16.mxu0 0
        %2483 = vmatpush1.bf16.msra.mxu0 0
        %2484 = vmatprep.subr.bf16.mxu0 0
        %2485 = vmatpush1.bf16.msra.mxu0 0
        %2486 = vmatprep.subr.bf16.mxu0 0
        %2487 = vmatpush1.bf16.msra.mxu0 0
        %2488 = vmatprep.subr.bf16.mxu0 0
        %2489 = vmatpush1.bf16.msra.mxu0 0
        %2490 = vmatprep.subr.bf16.mxu0 0
        %2491 = vmatpush1.bf16.msra.mxu0 0
        %2492 = vmatprep.subr.bf16.mxu0 0
        %2493 = vmatpush1.bf16.msra.mxu0 0
        %2494 = vmatprep.subr.bf16.mxu0 0
        %2495 = vmatpush1.bf16.msra.mxu0 0
        %2496 = vmatprep.subr.bf16.mxu0 0
        %2497 = vmatpush1.bf16.msra.mxu0 0
        %2498 = vmatprep.subr.bf16.mxu0 0
        %2499 = vmatpush1.bf16.msra.mxu0 0
        %2500 = vmatprep.subr.bf16.mxu0 0
        %2501 = vmatpush1.bf16.msra.mxu0 0
        %2502 = vmatprep.subr.bf16.mxu0 0
        %2503 = vmatpush1.bf16.msra.mxu0 0
        %2504 = vmatprep.mubr.bf16.mxu0 0
        %2505 = vmatmul.mubr.bf16.gmra.mrb[0].mxu0 %v2467
        %v2506 = vpop.f32.mrb[0].mxu0
        %v2507 = vadd.f32 0.0, %v2506
        %v2508 = vpop.f32.mrb[0].mxu0
        %v2509 = vpop.f32.mrb[0].mxu0
        %v2510 = vadd.f32 0.0, %v2509
        %v2511 = vpop.f32.mrb[0].mxu0
        %2512 = vmatprep.mubr.bf16.mxu0 0
        %2513 = vmatmul.mubr.bf16.gmra.mrb[0].mxu0 %v2470
        %v2514 = vpop.f32.mrb[0].mxu0
        %v2515 = vadd.f32 0.0, %v2514
        %v2516 = vpop.f32.mrb[0].mxu0
        %v2517 = vpop.f32.mrb[0].mxu0
        %v2518 = vadd.f32 0.0, %v2517
        %v2519 = vpop.f32.mrb[0].mxu0
        %2520 = vdwg.mxu0
        %2521 = vst.msk [vmem:[#allocation3 + $0x8] sm:$0xff] %vm1549, %v2507
        %2522 = vst.msk [vmem:[#allocation3 + $0x18] sm:$0xff] %vm1549, %v2510
        %2523 = vst.msk [vmem:[#allocation3 + $0x28] sm:$0xff] %vm1549, %v2515
        %2524 = vst.msk [vmem:[#allocation3 + $0x38] sm:$0xff] %vm1549, %v2518
        %2527 = vrot.lane.b32.xlu0 %v2345, 96
        %v2528 = vpop.permute.xlu0 %2527
        %2529 = vrot.lane.b32.xlu0 %v2346, 96
        %v2530 = vpop.permute.xlu0 %2529
        %2533 = vrot.lane.b32.xlu0 %v2347, 96
        %v2534 = vpop.permute.xlu0 %2533
        %2535 = vrot.lane.b32.xlu0 %v2348, 96
        %v2536 = vpop.permute.xlu0 %2535
        %v2538 = vsel %vm1549, %v2528, 0
        %v2541 = vsel %vm1549, %v2530, 0
        %v2544 = vsel %vm1549, %v2534, 0
        %v2547 = vsel %vm1549, %v2536, 0
        %2549 = vmatprep.subr.bf16.mxu0 0
        %2550 = vmatpush1.bf16.xpose.msra.mxu0 %v2544
        %2551 = vmatprep.subr.bf16.mxu0 0
        %2552 = vmatpush1.bf16.xpose.msra.mxu0 %v2547
        %2553 = vmatprep.subr.bf16.mxu0 0
        %2554 = vmatpush1.bf16.xpose.msra.mxu0 0
        %2555 = vmatprep.subr.bf16.mxu0 0
        %2556 = vmatpush1.bf16.xpose.msra.mxu0 0
        %2557 = vmatprep.subr.bf16.mxu0 0
        %2558 = vmatpush1.bf16.xpose.msra.mxu0 0
        %2559 = vmatprep.subr.bf16.mxu0 0
        %2560 = vmatpush1.bf16.xpose.msra.mxu0 0
        %2561 = vmatprep.subr.bf16.mxu0 0
        %2562 = vmatpush1.bf16.xpose.msra.mxu0 0
        %2563 = vmatprep.subr.bf16.mxu0 0
        %2564 = vmatpush1.bf16.xpose.msra.mxu0 0
        %2565 = vmatprep.subr.bf16.mxu0 0
        %2566 = vmatpush1.bf16.xpose.msra.mxu0 0
        %2567 = vmatprep.subr.bf16.mxu0 0
        %2568 = vmatpush1.bf16.xpose.msra.mxu0 0
        %2569 = vmatprep.subr.bf16.mxu0 0
        %2570 = vmatpush1.bf16.xpose.msra.mxu0 0
        %2571 = vmatprep.subr.bf16.mxu0 0
        %2572 = vmatpush1.bf16.xpose.msra.mxu0 0
        %2573 = vmatprep.subr.bf16.mxu0 0
        %2574 = vmatpush1.bf16.xpose.msra.mxu0 0
        %2575 = vmatprep.subr.bf16.mxu0 0
        %2576 = vmatpush1.bf16.xpose.msra.mxu0 0
        %2577 = vmatprep.subr.bf16.mxu0 0
        %2578 = vmatpush1.bf16.xpose.msra.mxu0 0
        %2579 = vmatprep.subr.bf16.mxu0 0
        %2580 = vmatpush1.bf16.xpose.msra.mxu0 0
        %2581 = vmatprep.mubr.bf16.mxu0 0
        %2582 = vmatmul.mubr.bf16.gmra.mrb[0].mxu0 %v2538
        %v2583 = vpop.f32.mrb[0].mxu0
        %v2584 = vadd.f32 0.0, %v2583
        %v2585 = vpop.f32.mrb[0].mxu0
        %v2586 = vpop.f32.mrb[0].mxu0
        %v2587 = vadd.f32 0.0, %v2586
        %v2588 = vpop.f32.mrb[0].mxu0
        %2589 = vmatprep.mubr.bf16.mxu0 0
        %2590 = vmatmul.mubr.bf16.gmra.mrb[0].mxu0 %v2541
        %v2591 = vpop.f32.mrb[0].mxu0
        %v2592 = vadd.f32 0.0, %v2591
        %v2593 = vpop.f32.mrb[0].mxu0
        %v2594 = vpop.f32.mrb[0].mxu0
        %v2595 = vadd.f32 0.0, %v2594
        %v2596 = vpop.f32.mrb[0].mxu0
        %2597 = vdwg.mxu0
        %v2598 = vmul.f32 %v2584, 0.18898223
        %v2599 = vmul.f32 %v2587, 0.18898223
        %v2600 = vmul.f32 %v2592, 0.18898223
        %v2601 = vmul.f32 %v2595, 0.18898223
        %v2602 = vadd.f32 %v2598, %v1539
        %v2603 = vadd.f32 %v2599, %v1540
        %v2604 = vadd.f32 %v2600, %v1541
        %v2605 = vadd.f32 %v2601, %v1542
        %v2606 = vsel %vm1549, %v2602, -inf
        %2607 = vmax.xlane.f32.xlu0 %v2606
        %v2608 = vpop.xlane.xlu0 %2607
        %v2609 = vsel %vm1549, %v2603, -inf
        %2610 = vmax.xlane.f32.xlu0 %v2609
        %v2611 = vpop.xlane.xlu0 %2610
        %v2612 = vsel %vm1549, %v2604, -inf
        %2613 = vmax.xlane.f32.xlu0 %v2612
        %v2614 = vpop.xlane.xlu0 %2613
        %v2615 = vsel %vm1549, %v2605, -inf
        %2616 = vmax.xlane.f32.xlu0 %v2615
        %v2617 = vpop.xlane.xlu0 %2616
        %v2618 = vsub.f32 %v2602, %v2608
        %v2619 = vsub.f32 %v2603, %v2611
        %v2620 = vsub.f32 %v2604, %v2614
        %v2621 = vsub.f32 %v2605, %v2617
        %v2622 = vmul.f32 %v2618, 1.442695
        %v2623 = vpow.pop %v2622
        %v2624 = vmul.f32 %v2619, 1.442695
        %v2625 = vpow.pop %v2624
        %v2626 = vmul.f32 %v2620, 1.442695
        %v2627 = vpow.pop %v2626
        %v2628 = vmul.f32 %v2621, 1.442695
        %v2629 = vpow.pop %v2628
        %v2630 = vsel %vm1549, %v2623, 0.0
        %2631 = vadd.xlane.f32.xlu0 %v2630
        %v2632 = vpop.xlane.xlu0 %2631
        %v2633 = vsel %vm1549, %v2625, 0.0
        %2634 = vadd.xlane.f32.xlu0 %v2633
        %v2635 = vpop.xlane.xlu0 %2634
        %v2636 = vsel %vm1549, %v2627, 0.0
        %2637 = vadd.xlane.f32.xlu0 %v2636
        %v2638 = vpop.xlane.xlu0 %2637
        %v2639 = vsel %vm1549, %v2629, 0.0
        %2640 = vadd.xlane.f32.xlu0 %v2639
        %v2641 = vpop.xlane.xlu0 %2640
        %v2642 = vrcp.pop %v2632
        %v2643 = vrcp.pop %v2635
        %v2644 = vrcp.pop %v2638
        %v2645 = vrcp.pop %v2641
        %v2646 = vmul.f32 %v2623, %v2642
        %v2647 = vmul.f32 %v2625, %v2643
        %v2648 = vmul.f32 %v2627, %v2644
        %v2649 = vmul.f32 %v2629, %v2645
        %v2650 = vpack.c.bf16 %v2647, %v2646
        %v2651 = vpack.c.bf16 %v2649, %v2648
        %2654 = vrot.lane.b32.xlu0 %v2349, 96
        %v2655 = vpop.permute.xlu0 %2654
        %2656 = vrot.lane.b32.xlu0 %v2350, 96
        %v2657 = vpop.permute.xlu0 %2656
        %v2661 = vsel %vm1549, %v2650, 0
        %v2664 = vsel %vm1549, %v2651, 0
        %2666 = vmatprep.subr.bf16.mxu0 0
        %2667 = vmatpush1.bf16.msra.mxu0 %v2655
        %2668 = vmatprep.subr.bf16.mxu0 0
        %2669 = vmatpush1.bf16.msra.mxu0 %v2657
        %2670 = vmatprep.subr.bf16.mxu0 0
        %2671 = vmatpush1.bf16.msra.mxu0 0
        %2672 = vmatprep.subr.bf16.mxu0 0
        %2673 = vmatpush1.bf16.msra.mxu0 0
        %2674 = vmatprep.subr.bf16.mxu0 0
        %2675 = vmatpush1.bf16.msra.mxu0 0
        %2676 = vmatprep.subr.bf16.mxu0 0
        %2677 = vmatpush1.bf16.msra.mxu0 0
        %2678 = vmatprep.subr.bf16.mxu0 0
        %2679 = vmatpush1.bf16.msra.mxu0 0
        %2680 = vmatprep.subr.bf16.mxu0 0
        %2681 = vmatpush1.bf16.msra.mxu0 0
        %2682 = vmatprep.subr.bf16.mxu0 0
        %2683 = vmatpush1.bf16.msra.mxu0 0
        %2684 = vmatprep.subr.bf16.mxu0 0
        %2685 = vmatpush1.bf16.msra.mxu0 0
        %2686 = vmatprep.subr.bf16.mxu0 0
        %2687 = vmatpush1.bf16.msra.mxu0 0
        %2688 = vmatprep.subr.bf16.mxu0 0
        %2689 = vmatpush1.bf16.msra.mxu0 0
        %2690 = vmatprep.subr.bf16.mxu0 0
        %2691 = vmatpush1.bf16.msra.mxu0 0
        %2692 = vmatprep.subr.bf16.mxu0 0
        %2693 = vmatpush1.bf16.msra.mxu0 0
        %2694 = vmatprep.subr.bf16.mxu0 0
        %2695 = vmatpush1.bf16.msra.mxu0 0
        %2696 = vmatprep.subr.bf16.mxu0 0
        %2697 = vmatpush1.bf16.msra.mxu0 0
        %2698 = vmatprep.mubr.bf16.mxu0 0
        %2699 = vmatmul.mubr.bf16.gmra.mrb[0].mxu0 %v2661
        %v2700 = vpop.f32.mrb[0].mxu0
        %v2701 = vadd.f32 0.0, %v2700
        %v2702 = vpop.f32.mrb[0].mxu0
        %v2703 = vpop.f32.mrb[0].mxu0
        %v2704 = vadd.f32 0.0, %v2703
        %v2705 = vpop.f32.mrb[0].mxu0
        %2706 = vmatprep.mubr.bf16.mxu0 0
        %2707 = vmatmul.mubr.bf16.gmra.mrb[0].mxu0 %v2664
        %v2708 = vpop.f32.mrb[0].mxu0
        %v2709 = vadd.f32 0.0, %v2708
        %v2710 = vpop.f32.mrb[0].mxu0
        %v2711 = vpop.f32.mrb[0].mxu0
        %v2712 = vadd.f32 0.0, %v2711
        %v2713 = vpop.f32.mrb[0].mxu0
        %2714 = vdwg.mxu0
        %2719 = vrot.lane.b32.xlu0 %v2701, 32
        %v2720 = vpop.permute.xlu0 %2719
        %2721 = vrot.lane.b32.xlu0 %v2704, 32
        %v2722 = vpop.permute.xlu0 %2721
        %2723 = vrot.lane.b32.xlu0 %v2709, 32
        %v2724 = vpop.permute.xlu0 %2723
        %2725 = vrot.lane.b32.xlu0 %v2712, 32
        %v2726 = vpop.permute.xlu0 %2725
        %2731 = vst.msk [vmem:[#allocation3 + $0x8] sm:$0xff] %vm1930, %v2720
        %2732 = vst.msk [vmem:[#allocation3 + $0x18] sm:$0xff] %vm1930, %v2722
        %2733 = vst.msk [vmem:[#allocation3 + $0x28] sm:$0xff] %vm1930, %v2724
        %2734 = vst.msk [vmem:[#allocation3 + $0x38] sm:$0xff] %vm1930, %v2726
        %2735 = vrot.lane.b32.xlu0 %v2345, 64
        %v2736 = vpop.permute.xlu0 %2735
        %2737 = vrot.lane.b32.xlu0 %v2346, 64
        %v2738 = vpop.permute.xlu0 %2737
        %2739 = vrot.lane.b32.xlu0 %v2347, 64
        %v2740 = vpop.permute.xlu0 %2739
        %2741 = vrot.lane.b32.xlu0 %v2348, 64
        %v2742 = vpop.permute.xlu0 %2741
        %v2744 = vsel %vm1549, %v2736, 0
        %v2747 = vsel %vm1549, %v2738, 0
        %v2750 = vsel %vm1549, %v2740, 0
        %v2753 = vsel %vm1549, %v2742, 0
        %2755 = vmatprep.subr.bf16.mxu0 0
        %2756 = vmatpush1.bf16.xpose.msra.mxu0 %v2750
        %2757 = vmatprep.subr.bf16.mxu0 0
        %2758 = vmatpush1.bf16.xpose.msra.mxu0 %v2753
        %2759 = vmatprep.subr.bf16.mxu0 0
        %2760 = vmatpush1.bf16.xpose.msra.mxu0 0
        %2761 = vmatprep.subr.bf16.mxu0 0
        %2762 = vmatpush1.bf16.xpose.msra.mxu0 0
        %2763 = vmatprep.subr.bf16.mxu0 0
        %2764 = vmatpush1.bf16.xpose.msra.mxu0 0
        %2765 = vmatprep.subr.bf16.mxu0 0
        %2766 = vmatpush1.bf16.xpose.msra.mxu0 0
        %2767 = vmatprep.subr.bf16.mxu0 0
        %2768 = vmatpush1.bf16.xpose.msra.mxu0 0
        %2769 = vmatprep.subr.bf16.mxu0 0
        %2770 = vmatpush1.bf16.xpose.msra.mxu0 0
        %2771 = vmatprep.subr.bf16.mxu0 0
        %2772 = vmatpush1.bf16.xpose.msra.mxu0 0
        %2773 = vmatprep.subr.bf16.mxu0 0
        %2774 = vmatpush1.bf16.xpose.msra.mxu0 0
        %2775 = vmatprep.subr.bf16.mxu0 0
        %2776 = vmatpush1.bf16.xpose.msra.mxu0 0
        %2777 = vmatprep.subr.bf16.mxu0 0
        %2778 = vmatpush1.bf16.xpose.msra.mxu0 0
        %2779 = vmatprep.subr.bf16.mxu0 0
        %2780 = vmatpush1.bf16.xpose.msra.mxu0 0
        %2781 = vmatprep.subr.bf16.mxu0 0
        %2782 = vmatpush1.bf16.xpose.msra.mxu0 0
        %2783 = vmatprep.subr.bf16.mxu0 0
        %2784 = vmatpush1.bf16.xpose.msra.mxu0 0
        %2785 = vmatprep.subr.bf16.mxu0 0
        %2786 = vmatpush1.bf16.xpose.msra.mxu0 0
        %2787 = vmatprep.mubr.bf16.mxu0 0
        %2788 = vmatmul.mubr.bf16.gmra.mrb[0].mxu0 %v2744
        %v2789 = vpop.f32.mrb[0].mxu0
        %v2790 = vadd.f32 0.0, %v2789
        %v2791 = vpop.f32.mrb[0].mxu0
        %v2792 = vpop.f32.mrb[0].mxu0
        %v2793 = vadd.f32 0.0, %v2792
        %v2794 = vpop.f32.mrb[0].mxu0
        %2795 = vmatprep.mubr.bf16.mxu0 0
        %2796 = vmatmul.mubr.bf16.gmra.mrb[0].mxu0 %v2747
        %v2797 = vpop.f32.mrb[0].mxu0
        %v2798 = vadd.f32 0.0, %v2797
        %v2799 = vpop.f32.mrb[0].mxu0
        %v2800 = vpop.f32.mrb[0].mxu0
        %v2801 = vadd.f32 0.0, %v2800
        %v2802 = vpop.f32.mrb[0].mxu0
        %2803 = vdwg.mxu0
        %v2804 = vmul.f32 %v2790, 0.18898223
        %v2805 = vmul.f32 %v2793, 0.18898223
        %v2806 = vmul.f32 %v2798, 0.18898223
        %v2807 = vmul.f32 %v2801, 0.18898223
        %v2808 = vadd.f32 %v2804, %v1539
        %v2809 = vadd.f32 %v2805, %v1540
        %v2810 = vadd.f32 %v2806, %v1541
        %v2811 = vadd.f32 %v2807, %v1542
        %v2812 = vsel %vm1549, %v2808, -inf
        %2813 = vmax.xlane.f32.xlu0 %v2812
        %v2814 = vpop.xlane.xlu0 %2813
        %v2815 = vsel %vm1549, %v2809, -inf
        %2816 = vmax.xlane.f32.xlu0 %v2815
        %v2817 = vpop.xlane.xlu0 %2816
        %v2818 = vsel %vm1549, %v2810, -inf
        %2819 = vmax.xlane.f32.xlu0 %v2818
        %v2820 = vpop.xlane.xlu0 %2819
        %v2821 = vsel %vm1549, %v2811, -inf
        %2822 = vmax.xlane.f32.xlu0 %v2821
        %v2823 = vpop.xlane.xlu0 %2822
        %v2824 = vsub.f32 %v2808, %v2814
        %v2825 = vsub.f32 %v2809, %v2817
        %v2826 = vsub.f32 %v2810, %v2820
        %v2827 = vsub.f32 %v2811, %v2823
        %v2828 = vmul.f32 %v2824, 1.442695
        %v2829 = vpow.pop %v2828
        %v2830 = vmul.f32 %v2825, 1.442695
        %v2831 = vpow.pop %v2830
        %v2832 = vmul.f32 %v2826, 1.442695
        %v2833 = vpow.pop %v2832
        %v2834 = vmul.f32 %v2827, 1.442695
        %v2835 = vpow.pop %v2834
        %v2836 = vsel %vm1549, %v2829, 0.0
        %2837 = vadd.xlane.f32.xlu0 %v2836
        %v2838 = vpop.xlane.xlu0 %2837
        %v2839 = vsel %vm1549, %v2831, 0.0
        %2840 = vadd.xlane.f32.xlu0 %v2839
        %v2841 = vpop.xlane.xlu0 %2840
        %v2842 = vsel %vm1549, %v2833, 0.0
        %2843 = vadd.xlane.f32.xlu0 %v2842
        %v2844 = vpop.xlane.xlu0 %2843
        %v2845 = vsel %vm1549, %v2835, 0.0
        %2846 = vadd.xlane.f32.xlu0 %v2845
        %v2847 = vpop.xlane.xlu0 %2846
        %v2848 = vrcp.pop %v2838
        %v2849 = vrcp.pop %v2841
        %v2850 = vrcp.pop %v2844
        %v2851 = vrcp.pop %v2847
        %v2852 = vmul.f32 %v2829, %v2848
        %v2853 = vmul.f32 %v2831, %v2849
        %v2854 = vmul.f32 %v2833, %v2850
        %v2855 = vmul.f32 %v2835, %v2851
        %v2856 = vpack.c.bf16 %v2853, %v2852
        %v2857 = vpack.c.bf16 %v2855, %v2854
        %2858 = vrot.lane.b32.xlu0 %v2349, 64
        %v2859 = vpop.permute.xlu0 %2858
        %2860 = vrot.lane.b32.xlu0 %v2350, 64
        %v2861 = vpop.permute.xlu0 %2860
        %v2865 = vsel %vm1549, %v2856, 0
        %v2868 = vsel %vm1549, %v2857, 0
        %2870 = vmatprep.subr.bf16.mxu0 0
        %2871 = vmatpush1.bf16.msra.mxu0 %v2859
        %2872 = vmatprep.subr.bf16.mxu0 0
        %2873 = vmatpush1.bf16.msra.mxu0 %v2861
        %2874 = vmatprep.subr.bf16.mxu0 0
        %2875 = vmatpush1.bf16.msra.mxu0 0
        %2876 = vmatprep.subr.bf16.mxu0 0
        %2877 = vmatpush1.bf16.msra.mxu0 0
        %2878 = vmatprep.subr.bf16.mxu0 0
        %2879 = vmatpush1.bf16.msra.mxu0 0
        %2880 = vmatprep.subr.bf16.mxu0 0
        %2881 = vmatpush1.bf16.msra.mxu0 0
        %2882 = vmatprep.subr.bf16.mxu0 0
        %2883 = vmatpush1.bf16.msra.mxu0 0
        %2884 = vmatprep.subr.bf16.mxu0 0
        %2885 = vmatpush1.bf16.msra.mxu0 0
        %2886 = vmatprep.subr.bf16.mxu0 0
        %2887 = vmatpush1.bf16.msra.mxu0 0
        %2888 = vmatprep.subr.bf16.mxu0 0
        %2889 = vmatpush1.bf16.msra.mxu0 0
        %2890 = vmatprep.subr.bf16.mxu0 0
        %2891 = vmatpush1.bf16.msra.mxu0 0
        %2892 = vmatprep.subr.bf16.mxu0 0
        %2893 = vmatpush1.bf16.msra.mxu0 0
        %2894 = vmatprep.subr.bf16.mxu0 0
        %2895 = vmatpush1.bf16.msra.mxu0 0
        %2896 = vmatprep.subr.bf16.mxu0 0
        %2897 = vmatpush1.bf16.msra.mxu0 0
        %2898 = vmatprep.subr.bf16.mxu0 0
        %2899 = vmatpush1.bf16.msra.mxu0 0
        %2900 = vmatprep.subr.bf16.mxu0 0
        %2901 = vmatpush1.bf16.msra.mxu0 0
        %2902 = vmatprep.mubr.bf16.mxu0 0
        %2903 = vmatmul.mubr.bf16.gmra.mrb[0].mxu0 %v2865
        %v2904 = vpop.f32.mrb[0].mxu0
        %v2905 = vadd.f32 0.0, %v2904
        %v2906 = vpop.f32.mrb[0].mxu0
        %v2907 = vpop.f32.mrb[0].mxu0
        %v2908 = vadd.f32 0.0, %v2907
        %v2909 = vpop.f32.mrb[0].mxu0
        %2910 = vmatprep.mubr.bf16.mxu0 0
        %2911 = vmatmul.mubr.bf16.gmra.mrb[0].mxu0 %v2868
        %v2912 = vpop.f32.mrb[0].mxu0
        %v2913 = vadd.f32 0.0, %v2912
        %v2914 = vpop.f32.mrb[0].mxu0
        %v2915 = vpop.f32.mrb[0].mxu0
        %v2916 = vadd.f32 0.0, %v2915
        %v2917 = vpop.f32.mrb[0].mxu0
        %2918 = vdwg.mxu0
        %2923 = vrot.lane.b32.xlu0 %v2905, 64
        %v2924 = vpop.permute.xlu0 %2923
        %2925 = vrot.lane.b32.xlu0 %v2908, 64
        %v2926 = vpop.permute.xlu0 %2925
        %2927 = vrot.lane.b32.xlu0 %v2913, 64
        %v2928 = vpop.permute.xlu0 %2927
        %2929 = vrot.lane.b32.xlu0 %v2916, 64
        %v2930 = vpop.permute.xlu0 %2929
        %2935 = vst.msk [vmem:[#allocation3 + $0x8] sm:$0xff] %vm2135, %v2924
        %2936 = vst.msk [vmem:[#allocation3 + $0x18] sm:$0xff] %vm2135, %v2926
        %2937 = vst.msk [vmem:[#allocation3 + $0x28] sm:$0xff] %vm2135, %v2928
        %2938 = vst.msk [vmem:[#allocation3 + $0x38] sm:$0xff] %vm2135, %v2930
        %2939 = vrot.lane.b32.xlu0 %v2345, 32
        %v2940 = vpop.permute.xlu0 %2939
        %2941 = vrot.lane.b32.xlu0 %v2346, 32
        %v2942 = vpop.permute.xlu0 %2941
        %2943 = vrot.lane.b32.xlu0 %v2347, 32
        %v2944 = vpop.permute.xlu0 %2943
        %2945 = vrot.lane.b32.xlu0 %v2348, 32
        %v2946 = vpop.permute.xlu0 %2945
        %v2948 = vsel %vm1549, %v2940, 0
        %v2951 = vsel %vm1549, %v2942, 0
        %v2954 = vsel %vm1549, %v2944, 0
        %v2957 = vsel %vm1549, %v2946, 0
        %2959 = vmatprep.subr.bf16.mxu0 0
        %2960 = vmatpush1.bf16.xpose.msra.mxu0 %v2954
        %2961 = vmatprep.subr.bf16.mxu0 0
        %2962 = vmatpush1.bf16.xpose.msra.mxu0 %v2957
        %2963 = vmatprep.subr.bf16.mxu0 0
        %2964 = vmatpush1.bf16.xpose.msra.mxu0 0
        %2965 = vmatprep.subr.bf16.mxu0 0
        %2966 = vmatpush1.bf16.xpose.msra.mxu0 0
        %2967 = vmatprep.subr.bf16.mxu0 0
        %2968 = vmatpush1.bf16.xpose.msra.mxu0 0
        %2969 = vmatprep.subr.bf16.mxu0 0
        %2970 = vmatpush1.bf16.xpose.msra.mxu0 0
        %2971 = vmatprep.subr.bf16.mxu0 0
        %2972 = vmatpush1.bf16.xpose.msra.mxu0 0
        %2973 = vmatprep.subr.bf16.mxu0 0
        %2974 = vmatpush1.bf16.xpose.msra.mxu0 0
        %2975 = vmatprep.subr.bf16.mxu0 0
        %2976 = vmatpush1.bf16.xpose.msra.mxu0 0
        %2977 = vmatprep.subr.bf16.mxu0 0
        %2978 = vmatpush1.bf16.xpose.msra.mxu0 0
        %2979 = vmatprep.subr.bf16.mxu0 0
        %2980 = vmatpush1.bf16.xpose.msra.mxu0 0
        %2981 = vmatprep.subr.bf16.mxu0 0
        %2982 = vmatpush1.bf16.xpose.msra.mxu0 0
        %2983 = vmatprep.subr.bf16.mxu0 0
        %2984 = vmatpush1.bf16.xpose.msra.mxu0 0
        %2985 = vmatprep.subr.bf16.mxu0 0
        %2986 = vmatpush1.bf16.xpose.msra.mxu0 0
        %2987 = vmatprep.subr.bf16.mxu0 0
        %2988 = vmatpush1.bf16.xpose.msra.mxu0 0
        %2989 = vmatprep.subr.bf16.mxu0 0
        %2990 = vmatpush1.bf16.xpose.msra.mxu0 0
        %2991 = vmatprep.mubr.bf16.mxu0 0
        %2992 = vmatmul.mubr.bf16.gmra.mrb[0].mxu0 %v2948
        %v2993 = vpop.f32.mrb[0].mxu0
        %v2994 = vadd.f32 0.0, %v2993
        %v2995 = vpop.f32.mrb[0].mxu0
        %v2996 = vpop.f32.mrb[0].mxu0
        %v2997 = vadd.f32 0.0, %v2996
        %v2998 = vpop.f32.mrb[0].mxu0
        %2999 = vmatprep.mubr.bf16.mxu0 0
        %3000 = vmatmul.mubr.bf16.gmra.mrb[0].mxu0 %v2951
        %v3001 = vpop.f32.mrb[0].mxu0
        %v3002 = vadd.f32 0.0, %v3001
        %v3003 = vpop.f32.mrb[0].mxu0
        %v3004 = vpop.f32.mrb[0].mxu0
        %v3005 = vadd.f32 0.0, %v3004
        %v3006 = vpop.f32.mrb[0].mxu0
        %3007 = vdwg.mxu0
        %v3008 = vmul.f32 %v2994, 0.18898223
        %v3009 = vmul.f32 %v2997, 0.18898223
        %v3010 = vmul.f32 %v3002, 0.18898223
        %v3011 = vmul.f32 %v3005, 0.18898223
        %v3012 = vadd.f32 %v3008, %v1539
        %v3013 = vadd.f32 %v3009, %v1540
        %v3014 = vadd.f32 %v3010, %v1541
        %v3015 = vadd.f32 %v3011, %v1542
        %v3016 = vsel %vm1549, %v3012, -inf
        %3017 = vmax.xlane.f32.xlu0 %v3016
        %v3018 = vpop.xlane.xlu0 %3017
        %v3019 = vsel %vm1549, %v3013, -inf
        %3020 = vmax.xlane.f32.xlu0 %v3019
        %v3021 = vpop.xlane.xlu0 %3020
        %v3022 = vsel %vm1549, %v3014, -inf
        %3023 = vmax.xlane.f32.xlu0 %v3022
        %v3024 = vpop.xlane.xlu0 %3023
        %v3025 = vsel %vm1549, %v3015, -inf
        %3026 = vmax.xlane.f32.xlu0 %v3025
        %v3027 = vpop.xlane.xlu0 %3026
        %v3028 = vsub.f32 %v3012, %v3018
        %v3029 = vsub.f32 %v3013, %v3021
        %v3030 = vsub.f32 %v3014, %v3024
        %v3031 = vsub.f32 %v3015, %v3027
        %v3032 = vmul.f32 %v3028, 1.442695
        %v3033 = vpow.pop %v3032
        %v3034 = vmul.f32 %v3029, 1.442695
        %v3035 = vpow.pop %v3034
        %v3036 = vmul.f32 %v3030, 1.442695
        %v3037 = vpow.pop %v3036
        %v3038 = vmul.f32 %v3031, 1.442695
        %v3039 = vpow.pop %v3038
        %v3040 = vsel %vm1549, %v3033, 0.0
        %3041 = vadd.xlane.f32.xlu0 %v3040
        %v3042 = vpop.xlane.xlu0 %3041
        %v3043 = vsel %vm1549, %v3035, 0.0
        %3044 = vadd.xlane.f32.xlu0 %v3043
        %v3045 = vpop.xlane.xlu0 %3044
        %v3046 = vsel %vm1549, %v3037, 0.0
        %3047 = vadd.xlane.f32.xlu0 %v3046
        %v3048 = vpop.xlane.xlu0 %3047
        %v3049 = vsel %vm1549, %v3039, 0.0
        %3050 = vadd.xlane.f32.xlu0 %v3049
        %v3051 = vpop.xlane.xlu0 %3050
        %v3052 = vrcp.pop %v3042
        %v3053 = vrcp.pop %v3045
        %v3054 = vrcp.pop %v3048
        %v3055 = vrcp.pop %v3051
        %v3056 = vmul.f32 %v3033, %v3052
        %v3057 = vmul.f32 %v3035, %v3053
        %v3058 = vmul.f32 %v3037, %v3054
        %v3059 = vmul.f32 %v3039, %v3055
        %v3060 = vpack.c.bf16 %v3057, %v3056
        %v3061 = vpack.c.bf16 %v3059, %v3058
        %3062 = vrot.lane.b32.xlu0 %v2349, 32
        %v3063 = vpop.permute.xlu0 %3062
        %3064 = vrot.lane.b32.xlu0 %v2350, 32
        %v3065 = vpop.permute.xlu0 %3064
        %v3069 = vsel %vm1549, %v3060, 0
        %v3072 = vsel %vm1549, %v3061, 0
        %3074 = vmatprep.subr.bf16.mxu0 0
        %3075 = vmatpush1.bf16.msra.mxu0 %v3063
        %3076 = vmatprep.subr.bf16.mxu0 0
        %3077 = vmatpush1.bf16.msra.mxu0 %v3065
        %3078 = vmatprep.subr.bf16.mxu0 0
        %3079 = vmatpush1.bf16.msra.mxu0 0
        %3080 = vmatprep.subr.bf16.mxu0 0
        %3081 = vmatpush1.bf16.msra.mxu0 0
        %3082 = vmatprep.subr.bf16.mxu0 0
        %3083 = vmatpush1.bf16.msra.mxu0 0
        %3084 = vmatprep.subr.bf16.mxu0 0
        %3085 = vmatpush1.bf16.msra.mxu0 0
        %3086 = vmatprep.subr.bf16.mxu0 0
        %3087 = vmatpush1.bf16.msra.mxu0 0
        %3088 = vmatprep.subr.bf16.mxu0 0
        %3089 = vmatpush1.bf16.msra.mxu0 0
        %3090 = vmatprep.subr.bf16.mxu0 0
        %3091 = vmatpush1.bf16.msra.mxu0 0
        %3092 = vmatprep.subr.bf16.mxu0 0
        %3093 = vmatpush1.bf16.msra.mxu0 0
        %3094 = vmatprep.subr.bf16.mxu0 0
        %3095 = vmatpush1.bf16.msra.mxu0 0
        %3096 = vmatprep.subr.bf16.mxu0 0
        %3097 = vmatpush1.bf16.msra.mxu0 0
        %3098 = vmatprep.subr.bf16.mxu0 0
        %3099 = vmatpush1.bf16.msra.mxu0 0
        %3100 = vmatprep.subr.bf16.mxu0 0
        %3101 = vmatpush1.bf16.msra.mxu0 0
        %3102 = vmatprep.subr.bf16.mxu0 0
        %3103 = vmatpush1.bf16.msra.mxu0 0
        %3104 = vmatprep.subr.bf16.mxu0 0
        %3105 = vmatpush1.bf16.msra.mxu0 0
        %3106 = vmatprep.mubr.bf16.mxu0 0
        %3107 = vmatmul.mubr.bf16.gmra.mrb[0].mxu0 %v3069
        %v3108 = vpop.f32.mrb[0].mxu0
        %v3109 = vadd.f32 0.0, %v3108
        %v3110 = vpop.f32.mrb[0].mxu0
        %v3111 = vpop.f32.mrb[0].mxu0
        %v3112 = vadd.f32 0.0, %v3111
        %v3113 = vpop.f32.mrb[0].mxu0
        %3114 = vmatprep.mubr.bf16.mxu0 0
        %3115 = vmatmul.mubr.bf16.gmra.mrb[0].mxu0 %v3072
        %v3116 = vpop.f32.mrb[0].mxu0
        %v3117 = vadd.f32 0.0, %v3116
        %v3118 = vpop.f32.mrb[0].mxu0
        %v3119 = vpop.f32.mrb[0].mxu0
        %v3120 = vadd.f32 0.0, %v3119
        %v3121 = vpop.f32.mrb[0].mxu0
        %3122 = vdwg.mxu0
        %3127 = vrot.lane.b32.xlu0 %v3109, 96
        %v3128 = vpop.permute.xlu0 %3127
        %3129 = vrot.lane.b32.xlu0 %v3112, 96
        %v3130 = vpop.permute.xlu0 %3129
        %3131 = vrot.lane.b32.xlu0 %v3117, 96
        %v3132 = vpop.permute.xlu0 %3131
        %3133 = vrot.lane.b32.xlu0 %v3120, 96
        %v3134 = vpop.permute.xlu0 %3133
        %3139 = vst.msk [vmem:[#allocation3 + $0x8] sm:$0xff] %vm2340, %v3128
        %3140 = vst.msk [vmem:[#allocation3 + $0x18] sm:$0xff] %vm2340, %v3130
        %3141 = vst.msk [vmem:[#allocation3 + $0x28] sm:$0xff] %vm2340, %v3132
        %3142 = vst.msk [vmem:[#allocation3 + $0x38] sm:$0xff] %vm2340, %v3134
        %v3143 = vld [vmem:[#allocation3] sm:$0xff]
        %v3144 = vld [vmem:[#allocation3 + $0x8] sm:$0xff]
        %v3145 = vld [vmem:[#allocation3 + $0x10] sm:$0xff]
        %v3146 = vld [vmem:[#allocation3 + $0x18] sm:$0xff]
        %v3147 = vld [vmem:[#allocation3 + $0x20] sm:$0xff]
        %v3148 = vld [vmem:[#allocation3 + $0x28] sm:$0xff]
        %v3149 = vld [vmem:[#allocation3 + $0x30] sm:$0xff]
        %v3150 = vld [vmem:[#allocation3 + $0x38] sm:$0xff]
        %v3151 = vpack.c.bf16 %v3145, %v3143
        %v3152 = vpack.c.bf16 %v3146, %v3144
        %v3153 = vpack.c.bf16 %v3149, %v3147
        %v3154 = vpack.c.bf16 %v3150, %v3148
        %v3155 = vld [vmem:[#allocation4] sm:$0xff]
        %v3156 = vld [vmem:[#allocation4 + $0x8] sm:$0xff]
        %v3157 = vld [vmem:[#allocation4 + $0x10] sm:$0xff]
        %v3158 = vld [vmem:[#allocation4 + $0x18] sm:$0xff]
        %v3159 = vld [vmem:[#allocation4 + $0x20] sm:$0xff]
        %v3160 = vld [vmem:[#allocation4 + $0x28] sm:$0xff]
        %v3161 = vld [vmem:[#allocation4 + $0x30] sm:$0xff]
        %v3162 = vld [vmem:[#allocation4 + $0x38] sm:$0xff]
        %v3163 = vld [vmem:[#allocation4 + $0x40] sm:$0xff]
        %v3164 = vld [vmem:[#allocation4 + $0x48] sm:$0xff]
        %v3165 = vld [vmem:[#allocation4 + $0x50] sm:$0xff]
        %v3166 = vld [vmem:[#allocation4 + $0x58] sm:$0xff]
        %v3167 = vld [vmem:[#allocation4 + $0x60] sm:$0xff]
        %v3168 = vld [vmem:[#allocation4 + $0x68] sm:$0xff]
        %v3169 = vld [vmem:[#allocation4 + $0x70] sm:$0xff]
        %v3170 = vld [vmem:[#allocation4 + $0x78] sm:$0xff]
        %v3171 = vld [vmem:[#allocation4 + $0x80] sm:$0xff]
        %v3172 = vld [vmem:[#allocation4 + $0x88] sm:$0xff]
        %v3173 = vld [vmem:[#allocation4 + $0x90] sm:$0xff]
        %v3174 = vld [vmem:[#allocation4 + $0x98] sm:$0xff]
        %v3175 = vld [vmem:[#allocation4 + $0xa0] sm:$0xff]
        %v3176 = vld [vmem:[#allocation4 + $0xa8] sm:$0xff]
        %v3177 = vld [vmem:[#allocation4 + $0xb0] sm:$0xff]
        %v3178 = vld [vmem:[#allocation4 + $0xb8] sm:$0xff]
        %v3179 = vld [vmem:[#allocation4 + $0xc0] sm:$0xff]
        %v3180 = vld [vmem:[#allocation4 + $0xc8] sm:$0xff]
        %v3181 = vld [vmem:[#allocation4 + $0xd0] sm:$0xff]
        %v3182 = vld [vmem:[#allocation4 + $0xd8] sm:$0xff]
        %v3183 = vld [vmem:[#allocation4 + $0xe0] sm:$0xff]
        %v3184 = vld [vmem:[#allocation4 + $0xe8] sm:$0xff]
        %v3185 = vld [vmem:[#allocation4 + $0xf0] sm:$0xff]
        %v3186 = vld [vmem:[#allocation4 + $0xf8] sm:$0xff]
        %v3187 = vld [vmem:[%s8] sm:$0x3]
        %v3189 = vlaneseq
        %v3190 = vshrl.u32 %v3189, 7
        %v3191 = vsub.s32 0, %v3190
        %v3192 = vrot.slane %v3187, %v3191
        %v3193 = vlaneseq
        %v3194 = vshrl.u32 %v3193, 7
        %v3195 = vsub.s32 1, %v3194
        %v3196 = vrot.slane %v3187, %v3195
        %v3231 = vunpack.c.l.b16 %v3155
        %v3232 = vunpack.c.h.b16 %v3155
        %v3233 = vunpack.c.l.b16 %v3156
        %v3234 = vunpack.c.h.b16 %v3156
        %v3235 = vunpack.c.l.b16 %v3157
        %v3236 = vunpack.c.h.b16 %v3157
        %v3237 = vunpack.c.l.b16 %v3158
        %v3238 = vunpack.c.h.b16 %v3158
        %v3239 = vunpack.c.l.b16 %v3159
        %v3240 = vunpack.c.h.b16 %v3159
        %v3241 = vunpack.c.l.b16 %v3160
        %v3242 = vunpack.c.h.b16 %v3160
        %v3243 = vunpack.c.l.b16 %v3161
        %v3244 = vunpack.c.h.b16 %v3161
        %v3245 = vunpack.c.l.b16 %v3162
        %v3246 = vunpack.c.h.b16 %v3162
        %v3247 = vunpack.c.l.b16 %v3163
        %v3248 = vunpack.c.h.b16 %v3163
        %v3249 = vunpack.c.l.b16 %v3164
        %v3250 = vunpack.c.h.b16 %v3164
        %v3251 = vunpack.c.l.b16 %v3165
        %v3252 = vunpack.c.h.b16 %v3165
        %v3253 = vunpack.c.l.b16 %v3166
        %v3254 = vunpack.c.h.b16 %v3166
        %v3255 = vunpack.c.l.b16 %v3167
        %v3256 = vunpack.c.h.b16 %v3167
        %v3257 = vunpack.c.l.b16 %v3168
        %v3258 = vunpack.c.h.b16 %v3168
        %v3259 = vunpack.c.l.b16 %v3169
        %v3260 = vunpack.c.h.b16 %v3169
        %v3261 = vunpack.c.l.b16 %v3170
        %v3262 = vunpack.c.h.b16 %v3170
        %v3263 = vunpack.c.l.b16 %v3171
        %v3264 = vunpack.c.h.b16 %v3171
        %v3265 = vunpack.c.l.b16 %v3172
        %v3266 = vunpack.c.h.b16 %v3172
        %v3267 = vunpack.c.l.b16 %v3173
        %v3268 = vunpack.c.h.b16 %v3173
        %v3269 = vunpack.c.l.b16 %v3174
        %v3270 = vunpack.c.h.b16 %v3174
        %v3271 = vunpack.c.l.b16 %v3175
        %v3272 = vunpack.c.h.b16 %v3175
        %v3273 = vunpack.c.l.b16 %v3176
        %v3274 = vunpack.c.h.b16 %v3176
        %v3275 = vunpack.c.l.b16 %v3177
        %v3276 = vunpack.c.h.b16 %v3177
        %v3277 = vunpack.c.l.b16 %v3178
        %v3278 = vunpack.c.h.b16 %v3178
        %v3279 = vunpack.c.l.b16 %v3179
        %v3280 = vunpack.c.h.b16 %v3179
        %v3281 = vunpack.c.l.b16 %v3180
        %v3282 = vunpack.c.h.b16 %v3180
        %v3283 = vunpack.c.l.b16 %v3181
        %v3284 = vunpack.c.h.b16 %v3181
        %v3285 = vunpack.c.l.b16 %v3182
        %v3286 = vunpack.c.h.b16 %v3182
        %v3287 = vunpack.c.l.b16 %v3183
        %v3288 = vunpack.c.h.b16 %v3183
        %v3289 = vunpack.c.l.b16 %v3184
        %v3290 = vunpack.c.h.b16 %v3184
        %v3291 = vunpack.c.l.b16 %v3185
        %v3292 = vunpack.c.h.b16 %v3185
        %v3293 = vunpack.c.l.b16 %v3186
        %v3294 = vunpack.c.h.b16 %v3186
        %v3295 = vpack.c.b16 %v3233, %v3231
        %v3296 = vpack.c.b16 %v3234, %v3232
        %v3297 = vpack.c.b16 %v3237, %v3235
        %v3298 = vpack.c.b16 %v3238, %v3236
        %v3299 = vpack.c.b16 %v3241, %v3239
        %v3300 = vpack.c.b16 %v3242, %v3240
        %v3301 = vpack.c.b16 %v3245, %v3243
        %v3302 = vpack.c.b16 %v3246, %v3244
        %v3303 = vpack.c.b16 %v3249, %v3247
        %v3304 = vpack.c.b16 %v3250, %v3248
        %v3305 = vpack.c.b16 %v3253, %v3251
        %v3306 = vpack.c.b16 %v3254, %v3252
        %v3307 = vpack.c.b16 %v3257, %v3255
        %v3308 = vpack.c.b16 %v3258, %v3256
        %v3309 = vpack.c.b16 %v3261, %v3259
        %v3310 = vpack.c.b16 %v3262, %v3260
        %v3311 = vpack.c.b16 %v3265, %v3263
        %v3312 = vpack.c.b16 %v3266, %v3264
        %v3313 = vpack.c.b16 %v3269, %v3267
        %v3314 = vpack.c.b16 %v3270, %v3268
        %v3315 = vpack.c.b16 %v3273, %v3271
        %v3316 = vpack.c.b16 %v3274, %v3272
        %v3317 = vpack.c.b16 %v3277, %v3275
        %v3318 = vpack.c.b16 %v3278, %v3276
        %v3319 = vpack.c.b16 %v3281, %v3279
        %v3320 = vpack.c.b16 %v3282, %v3280
        %v3321 = vpack.c.b16 %v3285, %v3283
        %v3322 = vpack.c.b16 %v3286, %v3284
        %v3323 = vpack.c.b16 %v3289, %v3287
        %v3324 = vpack.c.b16 %v3290, %v3288
        %v3325 = vpack.c.b16 %v3293, %v3291
        %v3326 = vpack.c.b16 %v3294, %v3292
        %3359 = vmatprep.subr.bf16.mxu0 %v3296
        %3360 = vmatpush1.bf16.msra.mxu0 %v3295
        %3361 = vmatprep.subr.bf16.mxu0 %v3298
        %3362 = vmatpush1.bf16.msra.mxu0 %v3297
        %3363 = vmatprep.subr.bf16.mxu0 %v3300
        %3364 = vmatpush1.bf16.msra.mxu0 %v3299
        %3365 = vmatprep.subr.bf16.mxu0 %v3302
        %3366 = vmatpush1.bf16.msra.mxu0 %v3301
        %3367 = vmatprep.subr.bf16.mxu0 %v3304
        %3368 = vmatpush1.bf16.msra.mxu0 %v3303
        %3369 = vmatprep.subr.bf16.mxu0 %v3306
        %3370 = vmatpush1.bf16.msra.mxu0 %v3305
        %3371 = vmatprep.subr.bf16.mxu0 %v3308
        %3372 = vmatpush1.bf16.msra.mxu0 %v3307
        %3373 = vmatprep.subr.bf16.mxu0 %v3310
        %3374 = vmatpush1.bf16.msra.mxu0 %v3309
        %3375 = vmatprep.subr.bf16.mxu0 %v3312
        %3376 = vmatpush1.bf16.msra.mxu0 %v3311
        %3377 = vmatprep.subr.bf16.mxu0 %v3314
        %3378 = vmatpush1.bf16.msra.mxu0 %v3313
        %3379 = vmatprep.subr.bf16.mxu0 %v3316
        %3380 = vmatpush1.bf16.msra.mxu0 %v3315
        %3381 = vmatprep.subr.bf16.mxu0 %v3318
        %3382 = vmatpush1.bf16.msra.mxu0 %v3317
        %3383 = vmatprep.subr.bf16.mxu0 %v3320
        %3384 = vmatpush1.bf16.msra.mxu0 %v3319
        %3385 = vmatprep.subr.bf16.mxu0 %v3322
        %3386 = vmatpush1.bf16.msra.mxu0 %v3321
        %3387 = vmatprep.subr.bf16.mxu0 %v3324
        %3388 = vmatpush1.bf16.msra.mxu0 %v3323
        %3389 = vmatprep.subr.bf16.mxu0 %v3326
        %3390 = vmatpush1.bf16.msra.mxu0 %v3325
        %3391 = vmatprep.mubr.bf16.mxu0 %v3152
        %3392 = vmatmul.mubr.bf16.gmra.mrb[0].mxu0 %v3151
        %v3393 = vpop.f32.mrb[0].mxu0
        %v3394 = vadd.f32 %v3192, %v3393
        %v3395 = vpop.f32.mrb[0].mxu0
        %v3396 = vadd.f32 %v3196, %v3395
        %v3397 = vpop.f32.mrb[0].mxu0
        %v3398 = vadd.f32 %v3192, %v3397
        %v3399 = vpop.f32.mrb[0].mxu0
        %v3400 = vadd.f32 %v3196, %v3399
        %3401 = vmatprep.mubr.bf16.mxu0 %v3154
        %3402 = vmatmul.mubr.bf16.gmra.mrb[0].mxu0 %v3153
        %v3403 = vpop.f32.mrb[0].mxu0
        %v3404 = vadd.f32 %v3192, %v3403
        %v3405 = vpop.f32.mrb[0].mxu0
        %v3406 = vadd.f32 %v3196, %v3405
        %v3407 = vpop.f32.mrb[0].mxu0
        %v3408 = vadd.f32 %v3192, %v3407
        %v3409 = vpop.f32.mrb[0].mxu0
        %v3410 = vadd.f32 %v3196, %v3409
        %3411 = vdwg.mxu0
        %v3412 = vadd.f32 %v729, %v3394
        %v3413 = vadd.f32 %v730, %v3396
        %v3414 = vadd.f32 %v731, %v3398
        %v3415 = vadd.f32 %v732, %v3400
        %v3416 = vadd.f32 %v733, %v3404
        %v3417 = vadd.f32 %v734, %v3406
        %v3418 = vadd.f32 %v735, %v3408
        %v3419 = vadd.f32 %v736, %v3410
        %v3420 = vld [vmem:[%s9] sm:$0x3]
        %v3421 = vld [vmem:[%s10] sm:$0x3]
        %v3422 = vadd.f32 %v3412, %v3413
        %3423 = vadd.xlane.f32.xlu0 %v3422
        %v3424 = vpop.xlane.xlu0 %3423
        %v3425 = vadd.f32 %v3414, %v3415
        %3426 = vadd.xlane.f32.xlu0 %v3425
        %v3427 = vpop.xlane.xlu0 %3426
        %v3428 = vadd.f32 %v3416, %v3417
        %3429 = vadd.xlane.f32.xlu0 %v3428
        %v3430 = vpop.xlane.xlu0 %3429
        %v3431 = vadd.f32 %v3418, %v3419
        %3432 = vadd.xlane.f32.xlu0 %v3431
        %v3433 = vpop.xlane.xlu0 %3432
        %v3434 = vmul.f32 %v3424, 0.004464286
        %v3435 = vmul.f32 %v3427, 0.004464286
        %v3436 = vmul.f32 %v3430, 0.004464286
        %v3437 = vmul.f32 %v3433, 0.004464286
        %v3438 = vsub.f32 %v3412, %v3434
        %v3439 = vsub.f32 %v3413, %v3434
        %v3440 = vsub.f32 %v3414, %v3435
        %v3441 = vsub.f32 %v3415, %v3435
        %v3442 = vsub.f32 %v3416, %v3436
        %v3443 = vsub.f32 %v3417, %v3436
        %v3444 = vsub.f32 %v3418, %v3437
        %v3445 = vsub.f32 %v3419, %v3437
        %v3446 = vmul.f32 %v3438, %v752
        %v3447 = vmul.f32 %v3439, %v753
        %v3448 = vmul.f32 %v3440, %v752
        %v3449 = vmul.f32 %v3441, %v753
        %v3450 = vmul.f32 %v3442, %v752
        %v3451 = vmul.f32 %v3443, %v753
        %v3452 = vmul.f32 %v3444, %v752
        %v3453 = vmul.f32 %v3445, %v753
        %v3454 = vmul.f32 %v3446, %v3446
        %v3455 = vmul.f32 %v3447, %v3447
        %v3456 = vmul.f32 %v3448, %v3448
        %v3457 = vmul.f32 %v3449, %v3449
        %v3458 = vmul.f32 %v3450, %v3450
        %v3459 = vmul.f32 %v3451, %v3451
        %v3460 = vmul.f32 %v3452, %v3452
        %v3461 = vmul.f32 %v3453, %v3453
        %v3462 = vadd.f32 %v3454, %v3455
        %3463 = vadd.xlane.f32.xlu0 %v3462
        %v3464 = vpop.xlane.xlu0 %3463
        %v3465 = vadd.f32 %v3456, %v3457
        %3466 = vadd.xlane.f32.xlu0 %v3465
        %v3467 = vpop.xlane.xlu0 %3466
        %v3468 = vadd.f32 %v3458, %v3459
        %3469 = vadd.xlane.f32.xlu0 %v3468
        %v3470 = vpop.xlane.xlu0 %3469
        %v3471 = vadd.f32 %v3460, %v3461
        %3472 = vadd.xlane.f32.xlu0 %v3471
        %v3473 = vpop.xlane.xlu0 %3472
        %v3474 = vmul.f32 %v3464, 0.004464286
        %v3475 = vmul.f32 %v3467, 0.004464286
        %v3476 = vmul.f32 %v3470, 0.004464286
        %v3477 = vmul.f32 %v3473, 0.004464286
        %v3478 = vadd.f32 %v3474, 1e-05
        %v3479 = vadd.f32 %v3475, 1e-05
        %v3480 = vadd.f32 %v3476, 1e-05
        %v3481 = vadd.f32 %v3477, 1e-05
        %v3482 = vrsqrt.pop %v3478
        %v3483 = vrsqrt.pop %v3479
        %v3484 = vrsqrt.pop %v3480
        %v3485 = vrsqrt.pop %v3481
        %v3486 = vmul.f32 %v3446, %v3482
        %v3487 = vmul.f32 %v3447, %v3482
        %v3488 = vmul.f32 %v3448, %v3483
        %v3489 = vmul.f32 %v3449, %v3483
        %v3490 = vmul.f32 %v3450, %v3484
        %v3491 = vmul.f32 %v3451, %v3484
        %v3492 = vmul.f32 %v3452, %v3485
        %v3493 = vmul.f32 %v3453, %v3485
        %v3495 = vlaneseq
        %v3496 = vshrl.u32 %v3495, 7
        %v3497 = vsub.s32 0, %v3496
        %v3498 = vrot.slane %v3420, %v3497
        %v3499 = vlaneseq
        %v3500 = vshrl.u32 %v3499, 7
        %v3501 = vsub.s32 1, %v3500
        %v3502 = vrot.slane %v3420, %v3501
        %v3505 = vmul.f32 %v3486, %v3498
        %v3506 = vmul.f32 %v3487, %v3502
        %v3507 = vmul.f32 %v3488, %v3498
        %v3508 = vmul.f32 %v3489, %v3502
        %v3509 = vmul.f32 %v3490, %v3498
        %v3510 = vmul.f32 %v3491, %v3502
        %v3511 = vmul.f32 %v3492, %v3498
        %v3512 = vmul.f32 %v3493, %v3502
        %v3514 = vlaneseq
        %v3515 = vshrl.u32 %v3514, 7
        %v3516 = vsub.s32 0, %v3515
        %v3517 = vrot.slane %v3421, %v3516
        %v3518 = vlaneseq
        %v3519 = vshrl.u32 %v3518, 7
        %v3520 = vsub.s32 1, %v3519
        %v3521 = vrot.slane %v3421, %v3520
        %v3524 = vadd.f32 %v3505, %v3517
        %v3525 = vadd.f32 %v3506, %v3521
        %v3526 = vadd.f32 %v3507, %v3517
        %v3527 = vadd.f32 %v3508, %v3521
        %v3528 = vadd.f32 %v3509, %v3517
        %v3529 = vadd.f32 %v3510, %v3521
        %v3530 = vadd.f32 %v3511, %v3517
        %v3531 = vadd.f32 %v3512, %v3521
        %v3532 = vpack.c.bf16 %v3526, %v3524
        %v3533 = vpack.c.bf16 %v3527, %v3525
        %v3534 = vpack.c.bf16 %v3530, %v3528
        %v3535 = vpack.c.bf16 %v3531, %v3529
        %v3536 = vld [vmem:[#allocation6] sm:$0xff]
        %v3537 = vld [vmem:[#allocation6 + $0x8] sm:$0xff]
        %v3538 = vld [vmem:[#allocation6 + $0x10] sm:$0xff]
        %v3539 = vld [vmem:[#allocation6 + $0x18] sm:$0xff]
        %v3540 = vld [vmem:[#allocation6 + $0x20] sm:$0xff]
        %v3541 = vld [vmem:[#allocation6 + $0x28] sm:$0xff]
        %v3542 = vld [vmem:[#allocation6 + $0x30] sm:$0xff]
        %v3543 = vld [vmem:[#allocation6 + $0x38] sm:$0xff]
        %v3544 = vld [vmem:[#allocation6 + $0x40] sm:$0xff]
        %v3545 = vld [vmem:[#allocation6 + $0x48] sm:$0xff]
        %v3546 = vld [vmem:[#allocation6 + $0x50] sm:$0xff]
        %v3547 = vld [vmem:[#allocation6 + $0x58] sm:$0xff]
        %v3548 = vld [vmem:[#allocation6 + $0x60] sm:$0xff]
        %v3549 = vld [vmem:[#allocation6 + $0x68] sm:$0xff]
        %v3550 = vld [vmem:[#allocation6 + $0x70] sm:$0xff]
        %v3551 = vld [vmem:[#allocation6 + $0x78] sm:$0xff]
        %v3552 = vld [vmem:[#allocation6 + $0x80] sm:$0xff]
        %v3553 = vld [vmem:[#allocation6 + $0x88] sm:$0xff]
        %v3554 = vld [vmem:[#allocation6 + $0x90] sm:$0xff]
        %v3555 = vld [vmem:[#allocation6 + $0x98] sm:$0xff]
        %v3556 = vld [vmem:[#allocation6 + $0xa0] sm:$0xff]
        %v3557 = vld [vmem:[#allocation6 + $0xa8] sm:$0xff]
        %v3558 = vld [vmem:[#allocation6 + $0xb0] sm:$0xff]
        %v3559 = vld [vmem:[#allocation6 + $0xb8] sm:$0xff]
        %v3560 = vld [vmem:[#allocation6 + $0xc0] sm:$0xff]
        %v3561 = vld [vmem:[#allocation6 + $0xc8] sm:$0xff]
        %v3562 = vld [vmem:[#allocation6 + $0xd0] sm:$0xff]
        %v3563 = vld [vmem:[#allocation6 + $0xd8] sm:$0xff]
        %v3564 = vld [vmem:[#allocation6 + $0xe0] sm:$0xff]
        %v3565 = vld [vmem:[#allocation6 + $0xe8] sm:$0xff]
        %v3566 = vld [vmem:[#allocation6 + $0xf0] sm:$0xff]
        %v3567 = vld [vmem:[#allocation6 + $0xf8] sm:$0xff]
        %v3568 = vld [vmem:[%s12] sm:$0x3]
        %v3570 = vlaneseq
        %v3571 = vshrl.u32 %v3570, 7
        %v3572 = vsub.s32 0, %v3571
        %v3573 = vrot.slane %v3568, %v3572
        %v3574 = vlaneseq
        %v3575 = vshrl.u32 %v3574, 7
        %v3576 = vsub.s32 1, %v3575
        %v3577 = vrot.slane %v3568, %v3576
        %v3612 = vunpack.c.l.b16 %v3536
        %v3613 = vunpack.c.h.b16 %v3536
        %v3614 = vunpack.c.l.b16 %v3537
        %v3615 = vunpack.c.h.b16 %v3537
        %v3616 = vunpack.c.l.b16 %v3538
        %v3617 = vunpack.c.h.b16 %v3538
        %v3618 = vunpack.c.l.b16 %v3539
        %v3619 = vunpack.c.h.b16 %v3539
        %v3620 = vunpack.c.l.b16 %v3540
        %v3621 = vunpack.c.h.b16 %v3540
        %v3622 = vunpack.c.l.b16 %v3541
        %v3623 = vunpack.c.h.b16 %v3541
        %v3624 = vunpack.c.l.b16 %v3542
        %v3625 = vunpack.c.h.b16 %v3542
        %v3626 = vunpack.c.l.b16 %v3543
        %v3627 = vunpack.c.h.b16 %v3543
        %v3628 = vunpack.c.l.b16 %v3544
        %v3629 = vunpack.c.h.b16 %v3544
        %v3630 = vunpack.c.l.b16 %v3545
        %v3631 = vunpack.c.h.b16 %v3545
        %v3632 = vunpack.c.l.b16 %v3546
        %v3633 = vunpack.c.h.b16 %v3546
        %v3634 = vunpack.c.l.b16 %v3547
        %v3635 = vunpack.c.h.b16 %v3547
        %v3636 = vunpack.c.l.b16 %v3548
        %v3637 = vunpack.c.h.b16 %v3548
        %v3638 = vunpack.c.l.b16 %v3549
        %v3639 = vunpack.c.h.b16 %v3549
        %v3640 = vunpack.c.l.b16 %v3550
        %v3641 = vunpack.c.h.b16 %v3550
        %v3642 = vunpack.c.l.b16 %v3551
        %v3643 = vunpack.c.h.b16 %v3551
        %v3644 = vunpack.c.l.b16 %v3552
        %v3645 = vunpack.c.h.b16 %v3552
        %v3646 = vunpack.c.l.b16 %v3553
        %v3647 = vunpack.c.h.b16 %v3553
        %v3648 = vunpack.c.l.b16 %v3554
        %v3649 = vunpack.c.h.b16 %v3554
        %v3650 = vunpack.c.l.b16 %v3555
        %v3651 = vunpack.c.h.b16 %v3555
        %v3652 = vunpack.c.l.b16 %v3556
        %v3653 = vunpack.c.h.b16 %v3556
        %v3654 = vunpack.c.l.b16 %v3557
        %v3655 = vunpack.c.h.b16 %v3557
        %v3656 = vunpack.c.l.b16 %v3558
        %v3657 = vunpack.c.h.b16 %v3558
        %v3658 = vunpack.c.l.b16 %v3559
        %v3659 = vunpack.c.h.b16 %v3559
        %v3660 = vunpack.c.l.b16 %v3560
        %v3661 = vunpack.c.h.b16 %v3560
        %v3662 = vunpack.c.l.b16 %v3561
        %v3663 = vunpack.c.h.b16 %v3561
        %v3664 = vunpack.c.l.b16 %v3562
        %v3665 = vunpack.c.h.b16 %v3562
        %v3666 = vunpack.c.l.b16 %v3563
        %v3667 = vunpack.c.h.b16 %v3563
        %v3668 = vunpack.c.l.b16 %v3564
        %v3669 = vunpack.c.h.b16 %v3564
        %v3670 = vunpack.c.l.b16 %v3565
        %v3671 = vunpack.c.h.b16 %v3565
        %v3672 = vunpack.c.l.b16 %v3566
        %v3673 = vunpack.c.h.b16 %v3566
        %v3674 = vunpack.c.l.b16 %v3567
        %v3675 = vunpack.c.h.b16 %v3567
        %v3676 = vpack.c.b16 %v3614, %v3612
        %v3677 = vpack.c.b16 %v3615, %v3613
        %v3678 = vpack.c.b16 %v3618, %v3616
        %v3679 = vpack.c.b16 %v3619, %v3617
        %v3680 = vpack.c.b16 %v3622, %v3620
        %v3681 = vpack.c.b16 %v3623, %v3621
        %v3682 = vpack.c.b16 %v3626, %v3624
        %v3683 = vpack.c.b16 %v3627, %v3625
        %v3684 = vpack.c.b16 %v3630, %v3628
        %v3685 = vpack.c.b16 %v3631, %v3629
        %v3686 = vpack.c.b16 %v3634, %v3632
        %v3687 = vpack.c.b16 %v3635, %v3633
        %v3688 = vpack.c.b16 %v3638, %v3636
        %v3689 = vpack.c.b16 %v3639, %v3637
        %v3690 = vpack.c.b16 %v3642, %v3640
        %v3691 = vpack.c.b16 %v3643, %v3641
        %v3692 = vpack.c.b16 %v3646, %v3644
        %v3693 = vpack.c.b16 %v3647, %v3645
        %v3694 = vpack.c.b16 %v3650, %v3648
        %v3695 = vpack.c.b16 %v3651, %v3649
        %v3696 = vpack.c.b16 %v3654, %v3652
        %v3697 = vpack.c.b16 %v3655, %v3653
        %v3698 = vpack.c.b16 %v3658, %v3656
        %v3699 = vpack.c.b16 %v3659, %v3657
        %v3700 = vpack.c.b16 %v3662, %v3660
        %v3701 = vpack.c.b16 %v3663, %v3661
        %v3702 = vpack.c.b16 %v3666, %v3664
        %v3703 = vpack.c.b16 %v3667, %v3665
        %v3704 = vpack.c.b16 %v3670, %v3668
        %v3705 = vpack.c.b16 %v3671, %v3669
        %v3706 = vpack.c.b16 %v3674, %v3672
        %v3707 = vpack.c.b16 %v3675, %v3673
        %3740 = vmatprep.subr.bf16.mxu0 %v3677
        %3741 = vmatpush1.bf16.msra.mxu0 %v3676
        %3742 = vmatprep.subr.bf16.mxu0 %v3679
        %3743 = vmatpush1.bf16.msra.mxu0 %v3678
        %3744 = vmatprep.subr.bf16.mxu0 %v3681
        %3745 = vmatpush1.bf16.msra.mxu0 %v3680
        %3746 = vmatprep.subr.bf16.mxu0 %v3683
        %3747 = vmatpush1.bf16.msra.mxu0 %v3682
        %3748 = vmatprep.subr.bf16.mxu0 %v3685
        %3749 = vmatpush1.bf16.msra.mxu0 %v3684
        %3750 = vmatprep.subr.bf16.mxu0 %v3687
        %3751 = vmatpush1.bf16.msra.mxu0 %v3686
        %3752 = vmatprep.subr.bf16.mxu0 %v3689
        %3753 = vmatpush1.bf16.msra.mxu0 %v3688
        %3754 = vmatprep.subr.bf16.mxu0 %v3691
        %3755 = vmatpush1.bf16.msra.mxu0 %v3690
        %3756 = vmatprep.subr.bf16.mxu0 %v3693
        %3757 = vmatpush1.bf16.msra.mxu0 %v3692
        %3758 = vmatprep.subr.bf16.mxu0 %v3695
        %3759 = vmatpush1.bf16.msra.mxu0 %v3694
        %3760 = vmatprep.subr.bf16.mxu0 %v3697
        %3761 = vmatpush1.bf16.msra.mxu0 %v3696
        %3762 = vmatprep.subr.bf16.mxu0 %v3699
        %3763 = vmatpush1.bf16.msra.mxu0 %v3698
        %3764 = vmatprep.subr.bf16.mxu0 %v3701
        %3765 = vmatpush1.bf16.msra.mxu0 %v3700
        %3766 = vmatprep.subr.bf16.mxu0 %v3703
        %3767 = vmatpush1.bf16.msra.mxu0 %v3702
        %3768 = vmatprep.subr.bf16.mxu0 %v3705
        %3769 = vmatpush1.bf16.msra.mxu0 %v3704
        %3770 = vmatprep.subr.bf16.mxu0 %v3707
        %3771 = vmatpush1.bf16.msra.mxu0 %v3706
        %3772 = vmatprep.mubr.bf16.mxu0 %v3533
        %3773 = vmatmul.mubr.bf16.gmra.mrb[0].mxu0 %v3532
        %v3774 = vpop.f32.mrb[0].mxu0
        %v3775 = vadd.f32 %v3573, %v3774
        %v3776 = vpop.f32.mrb[0].mxu0
        %v3777 = vadd.f32 %v3577, %v3776
        %v3778 = vpop.f32.mrb[0].mxu0
        %v3779 = vadd.f32 %v3573, %v3778
        %v3780 = vpop.f32.mrb[0].mxu0
        %v3781 = vadd.f32 %v3577, %v3780
        %3782 = vmatprep.mubr.bf16.mxu0 %v3535
        %3783 = vmatmul.mubr.bf16.gmra.mrb[0].mxu0 %v3534
        %v3784 = vpop.f32.mrb[0].mxu0
        %v3785 = vadd.f32 %v3573, %v3784
        %v3786 = vpop.f32.mrb[0].mxu0
        %v3787 = vadd.f32 %v3577, %v3786
        %v3788 = vpop.f32.mrb[0].mxu0
        %v3789 = vadd.f32 %v3573, %v3788
        %v3790 = vpop.f32.mrb[0].mxu0
        %v3791 = vadd.f32 %v3577, %v3790
        %3792 = vdwg.mxu0
        %v3793 = vmax.f32 %v3775, 0.0
        %v3794 = vmax.f32 %v3777, 0.0
        %v3795 = vmax.f32 %v3779, 0.0
        %v3796 = vmax.f32 %v3781, 0.0
        %v3797 = vmax.f32 %v3785, 0.0
        %v3798 = vmax.f32 %v3787, 0.0
        %v3799 = vmax.f32 %v3789, 0.0
        %v3800 = vmax.f32 %v3791, 0.0
        %v3801 = vpack.c.bf16 %v3795, %v3793
        %v3802 = vpack.c.bf16 %v3796, %v3794
        %v3803 = vpack.c.bf16 %v3799, %v3797
        %v3804 = vpack.c.bf16 %v3800, %v3798
        %v3805 = vld [vmem:[#allocation8] sm:$0xff]
        %v3806 = vld [vmem:[#allocation8 + $0x8] sm:$0xff]
        %v3807 = vld [vmem:[#allocation8 + $0x10] sm:$0xff]
        %v3808 = vld [vmem:[#allocation8 + $0x18] sm:$0xff]
        %v3809 = vld [vmem:[#allocation8 + $0x20] sm:$0xff]
        %v3810 = vld [vmem:[#allocation8 + $0x28] sm:$0xff]
        %v3811 = vld [vmem:[#allocation8 + $0x30] sm:$0xff]
        %v3812 = vld [vmem:[#allocation8 + $0x38] sm:$0xff]
        %v3813 = vld [vmem:[#allocation8 + $0x40] sm:$0xff]
        %v3814 = vld [vmem:[#allocation8 + $0x48] sm:$0xff]
        %v3815 = vld [vmem:[#allocation8 + $0x50] sm:$0xff]
        %v3816 = vld [vmem:[#allocation8 + $0x58] sm:$0xff]
        %v3817 = vld [vmem:[#allocation8 + $0x60] sm:$0xff]
        %v3818 = vld [vmem:[#allocation8 + $0x68] sm:$0xff]
        %v3819 = vld [vmem:[#allocation8 + $0x70] sm:$0xff]
        %v3820 = vld [vmem:[#allocation8 + $0x78] sm:$0xff]
        %v3821 = vld [vmem:[#allocation8 + $0x80] sm:$0xff]
        %v3822 = vld [vmem:[#allocation8 + $0x88] sm:$0xff]
        %v3823 = vld [vmem:[#allocation8 + $0x90] sm:$0xff]
        %v3824 = vld [vmem:[#allocation8 + $0x98] sm:$0xff]
        %v3825 = vld [vmem:[#allocation8 + $0xa0] sm:$0xff]
        %v3826 = vld [vmem:[#allocation8 + $0xa8] sm:$0xff]
        %v3827 = vld [vmem:[#allocation8 + $0xb0] sm:$0xff]
        %v3828 = vld [vmem:[#allocation8 + $0xb8] sm:$0xff]
        %v3829 = vld [vmem:[#allocation8 + $0xc0] sm:$0xff]
        %v3830 = vld [vmem:[#allocation8 + $0xc8] sm:$0xff]
        %v3831 = vld [vmem:[#allocation8 + $0xd0] sm:$0xff]
        %v3832 = vld [vmem:[#allocation8 + $0xd8] sm:$0xff]
        %v3833 = vld [vmem:[#allocation8 + $0xe0] sm:$0xff]
        %v3834 = vld [vmem:[#allocation8 + $0xe8] sm:$0xff]
        %v3835 = vld [vmem:[#allocation8 + $0xf0] sm:$0xff]
        %v3836 = vld [vmem:[#allocation8 + $0xf8] sm:$0xff]
        %v3837 = vld [vmem:[%s14] sm:$0x3]
        %v3839 = vlaneseq
        %v3840 = vshrl.u32 %v3839, 7
        %v3841 = vsub.s32 0, %v3840
        %v3842 = vrot.slane %v3837, %v3841
        %v3843 = vlaneseq
        %v3844 = vshrl.u32 %v3843, 7
        %v3845 = vsub.s32 1, %v3844
        %v3846 = vrot.slane %v3837, %v3845
        %v3881 = vunpack.c.l.b16 %v3805
        %v3882 = vunpack.c.h.b16 %v3805
        %v3883 = vunpack.c.l.b16 %v3806
        %v3884 = vunpack.c.h.b16 %v3806
        %v3885 = vunpack.c.l.b16 %v3807
        %v3886 = vunpack.c.h.b16 %v3807
        %v3887 = vunpack.c.l.b16 %v3808
        %v3888 = vunpack.c.h.b16 %v3808
        %v3889 = vunpack.c.l.b16 %v3809
        %v3890 = vunpack.c.h.b16 %v3809
        %v3891 = vunpack.c.l.b16 %v3810
        %v3892 = vunpack.c.h.b16 %v3810
        %v3893 = vunpack.c.l.b16 %v3811
        %v3894 = vunpack.c.h.b16 %v3811
        %v3895 = vunpack.c.l.b16 %v3812
        %v3896 = vunpack.c.h.b16 %v3812
        %v3897 = vunpack.c.l.b16 %v3813
        %v3898 = vunpack.c.h.b16 %v3813
        %v3899 = vunpack.c.l.b16 %v3814
        %v3900 = vunpack.c.h.b16 %v3814
        %v3901 = vunpack.c.l.b16 %v3815
        %v3902 = vunpack.c.h.b16 %v3815
        %v3903 = vunpack.c.l.b16 %v3816
        %v3904 = vunpack.c.h.b16 %v3816
        %v3905 = vunpack.c.l.b16 %v3817
        %v3906 = vunpack.c.h.b16 %v3817
        %v3907 = vunpack.c.l.b16 %v3818
        %v3908 = vunpack.c.h.b16 %v3818
        %v3909 = vunpack.c.l.b16 %v3819
        %v3910 = vunpack.c.h.b16 %v3819
        %v3911 = vunpack.c.l.b16 %v3820
        %v3912 = vunpack.c.h.b16 %v3820
        %v3913 = vunpack.c.l.b16 %v3821
        %v3914 = vunpack.c.h.b16 %v3821
        %v3915 = vunpack.c.l.b16 %v3822
        %v3916 = vunpack.c.h.b16 %v3822
        %v3917 = vunpack.c.l.b16 %v3823
        %v3918 = vunpack.c.h.b16 %v3823
        %v3919 = vunpack.c.l.b16 %v3824
        %v3920 = vunpack.c.h.b16 %v3824
        %v3921 = vunpack.c.l.b16 %v3825
        %v3922 = vunpack.c.h.b16 %v3825
        %v3923 = vunpack.c.l.b16 %v3826
        %v3924 = vunpack.c.h.b16 %v3826
        %v3925 = vunpack.c.l.b16 %v3827
        %v3926 = vunpack.c.h.b16 %v3827
        %v3927 = vunpack.c.l.b16 %v3828
        %v3928 = vunpack.c.h.b16 %v3828
        %v3929 = vunpack.c.l.b16 %v3829
        %v3930 = vunpack.c.h.b16 %v3829
        %v3931 = vunpack.c.l.b16 %v3830
        %v3932 = vunpack.c.h.b16 %v3830
        %v3933 = vunpack.c.l.b16 %v3831
        %v3934 = vunpack.c.h.b16 %v3831
        %v3935 = vunpack.c.l.b16 %v3832
        %v3936 = vunpack.c.h.b16 %v3832
        %v3937 = vunpack.c.l.b16 %v3833
        %v3938 = vunpack.c.h.b16 %v3833
        %v3939 = vunpack.c.l.b16 %v3834
        %v3940 = vunpack.c.h.b16 %v3834
        %v3941 = vunpack.c.l.b16 %v3835
        %v3942 = vunpack.c.h.b16 %v3835
        %v3943 = vunpack.c.l.b16 %v3836
        %v3944 = vunpack.c.h.b16 %v3836
        %v3945 = vpack.c.b16 %v3883, %v3881
        %v3946 = vpack.c.b16 %v3884, %v3882
        %v3947 = vpack.c.b16 %v3887, %v3885
        %v3948 = vpack.c.b16 %v3888, %v3886
        %v3949 = vpack.c.b16 %v3891, %v3889
        %v3950 = vpack.c.b16 %v3892, %v3890
        %v3951 = vpack.c.b16 %v3895, %v3893
        %v3952 = vpack.c.b16 %v3896, %v3894
        %v3953 = vpack.c.b16 %v3899, %v3897
        %v3954 = vpack.c.b16 %v3900, %v3898
        %v3955 = vpack.c.b16 %v3903, %v3901
        %v3956 = vpack.c.b16 %v3904, %v3902
        %v3957 = vpack.c.b16 %v3907, %v3905
        %v3958 = vpack.c.b16 %v3908, %v3906
        %v3959 = vpack.c.b16 %v3911, %v3909
        %v3960 = vpack.c.b16 %v3912, %v3910
        %v3961 = vpack.c.b16 %v3915, %v3913
        %v3962 = vpack.c.b16 %v3916, %v3914
        %v3963 = vpack.c.b16 %v3919, %v3917
        %v3964 = vpack.c.b16 %v3920, %v3918
        %v3965 = vpack.c.b16 %v3923, %v3921
        %v3966 = vpack.c.b16 %v3924, %v3922
        %v3967 = vpack.c.b16 %v3927, %v3925
        %v3968 = vpack.c.b16 %v3928, %v3926
        %v3969 = vpack.c.b16 %v3931, %v3929
        %v3970 = vpack.c.b16 %v3932, %v3930
        %v3971 = vpack.c.b16 %v3935, %v3933
        %v3972 = vpack.c.b16 %v3936, %v3934
        %v3973 = vpack.c.b16 %v3939, %v3937
        %v3974 = vpack.c.b16 %v3940, %v3938
        %v3975 = vpack.c.b16 %v3943, %v3941
        %v3976 = vpack.c.b16 %v3944, %v3942
        %4009 = vmatprep.subr.bf16.mxu0 %v3946
        %4010 = vmatpush1.bf16.msra.mxu0 %v3945
        %4011 = vmatprep.subr.bf16.mxu0 %v3948
        %4012 = vmatpush1.bf16.msra.mxu0 %v3947
        %4013 = vmatprep.subr.bf16.mxu0 %v3950
        %4014 = vmatpush1.bf16.msra.mxu0 %v3949
        %4015 = vmatprep.subr.bf16.mxu0 %v3952
        %4016 = vmatpush1.bf16.msra.mxu0 %v3951
        %4017 = vmatprep.subr.bf16.mxu0 %v3954
        %4018 = vmatpush1.bf16.msra.mxu0 %v3953
        %4019 = vmatprep.subr.bf16.mxu0 %v3956
        %4020 = vmatpush1.bf16.msra.mxu0 %v3955
        %4021 = vmatprep.subr.bf16.mxu0 %v3958
        %4022 = vmatpush1.bf16.msra.mxu0 %v3957
        %4023 = vmatprep.subr.bf16.mxu0 %v3960
        %4024 = vmatpush1.bf16.msra.mxu0 %v3959
        %4025 = vmatprep.subr.bf16.mxu0 %v3962
        %4026 = vmatpush1.bf16.msra.mxu0 %v3961
        %4027 = vmatprep.subr.bf16.mxu0 %v3964
        %4028 = vmatpush1.bf16.msra.mxu0 %v3963
        %4029 = vmatprep.subr.bf16.mxu0 %v3966
        %4030 = vmatpush1.bf16.msra.mxu0 %v3965
        %4031 = vmatprep.subr.bf16.mxu0 %v3968
        %4032 = vmatpush1.bf16.msra.mxu0 %v3967
        %4033 = vmatprep.subr.bf16.mxu0 %v3970
        %4034 = vmatpush1.bf16.msra.mxu0 %v3969
        %4035 = vmatprep.subr.bf16.mxu0 %v3972
        %4036 = vmatpush1.bf16.msra.mxu0 %v3971
        %4037 = vmatprep.subr.bf16.mxu0 %v3974
        %4038 = vmatpush1.bf16.msra.mxu0 %v3973
        %4039 = vmatprep.subr.bf16.mxu0 %v3976
        %4040 = vmatpush1.bf16.msra.mxu0 %v3975
        %4041 = vmatprep.mubr.bf16.mxu0 %v3802
        %4042 = vmatmul.mubr.bf16.gmra.mrb[0].mxu0 %v3801
        %v4043 = vpop.f32.mrb[0].mxu0
        %v4044 = vadd.f32 %v3842, %v4043
        %v4045 = vpop.f32.mrb[0].mxu0
        %v4046 = vadd.f32 %v3846, %v4045
        %v4047 = vpop.f32.mrb[0].mxu0
        %v4048 = vadd.f32 %v3842, %v4047
        %v4049 = vpop.f32.mrb[0].mxu0
        %v4050 = vadd.f32 %v3846, %v4049
        %4051 = vmatprep.mubr.bf16.mxu0 %v3804
        %4052 = vmatmul.mubr.bf16.gmra.mrb[0].mxu0 %v3803
        %v4053 = vpop.f32.mrb[0].mxu0
        %v4054 = vadd.f32 %v3842, %v4053
        %v4055 = vpop.f32.mrb[0].mxu0
        %v4056 = vadd.f32 %v3846, %v4055
        %v4057 = vpop.f32.mrb[0].mxu0
        %v4058 = vadd.f32 %v3842, %v4057
        %v4059 = vpop.f32.mrb[0].mxu0
        %v4060 = vadd.f32 %v3846, %v4059
        %4061 = vdwg.mxu0
        %v4062 = vadd.f32 %v3524, %v4044
        %v4063 = vadd.f32 %v3525, %v4046
        %v4064 = vadd.f32 %v3526, %v4048
        %v4065 = vadd.f32 %v3527, %v4050
        %v4066 = vadd.f32 %v3528, %v4054
        %v4067 = vadd.f32 %v3529, %v4056
        %v4068 = vadd.f32 %v3530, %v4058
        %v4069 = vadd.f32 %v3531, %v4060
        %v4070 = vld [vmem:[%s15] sm:$0x3]
        %v4071 = vld [vmem:[%s16] sm:$0x3]
        %v4072 = vadd.f32 %v4062, %v4063
        %4073 = vadd.xlane.f32.xlu0 %v4072
        %v4074 = vpop.xlane.xlu0 %4073
        %v4075 = vadd.f32 %v4064, %v4065
        %4076 = vadd.xlane.f32.xlu0 %v4075
        %v4077 = vpop.xlane.xlu0 %4076
        %v4078 = vadd.f32 %v4066, %v4067
        %4079 = vadd.xlane.f32.xlu0 %v4078
        %v4080 = vpop.xlane.xlu0 %4079
        %v4081 = vadd.f32 %v4068, %v4069
        %4082 = vadd.xlane.f32.xlu0 %v4081
        %v4083 = vpop.xlane.xlu0 %4082
        %v4084 = vmul.f32 %v4074, 0.004464286
        %v4085 = vmul.f32 %v4077, 0.004464286
        %v4086 = vmul.f32 %v4080, 0.004464286
        %v4087 = vmul.f32 %v4083, 0.004464286
        %v4088 = vsub.f32 %v4062, %v4084
        %v4089 = vsub.f32 %v4063, %v4084
        %v4090 = vsub.f32 %v4064, %v4085
        %v4091 = vsub.f32 %v4065, %v4085
        %v4092 = vsub.f32 %v4066, %v4086
        %v4093 = vsub.f32 %v4067, %v4086
        %v4094 = vsub.f32 %v4068, %v4087
        %v4095 = vsub.f32 %v4069, %v4087
        %v4096 = vmul.f32 %v4088, %v752
        %v4097 = vmul.f32 %v4089, %v753
        %v4098 = vmul.f32 %v4090, %v752
        %v4099 = vmul.f32 %v4091, %v753
        %v4100 = vmul.f32 %v4092, %v752
        %v4101 = vmul.f32 %v4093, %v753
        %v4102 = vmul.f32 %v4094, %v752
        %v4103 = vmul.f32 %v4095, %v753
        %v4104 = vmul.f32 %v4096, %v4096
        %v4105 = vmul.f32 %v4097, %v4097
        %v4106 = vmul.f32 %v4098, %v4098
        %v4107 = vmul.f32 %v4099, %v4099
        %v4108 = vmul.f32 %v4100, %v4100
        %v4109 = vmul.f32 %v4101, %v4101
        %v4110 = vmul.f32 %v4102, %v4102
        %v4111 = vmul.f32 %v4103, %v4103
        %v4112 = vadd.f32 %v4104, %v4105
        %4113 = vadd.xlane.f32.xlu0 %v4112
        %v4114 = vpop.xlane.xlu0 %4113
        %v4115 = vadd.f32 %v4106, %v4107
        %4116 = vadd.xlane.f32.xlu0 %v4115
        %v4117 = vpop.xlane.xlu0 %4116
        %v4118 = vadd.f32 %v4108, %v4109
        %4119 = vadd.xlane.f32.xlu0 %v4118
        %v4120 = vpop.xlane.xlu0 %4119
        %v4121 = vadd.f32 %v4110, %v4111
        %4122 = vadd.xlane.f32.xlu0 %v4121
        %v4123 = vpop.xlane.xlu0 %4122
        %v4124 = vmul.f32 %v4114, 0.004464286
        %v4125 = vmul.f32 %v4117, 0.004464286
        %v4126 = vmul.f32 %v4120, 0.004464286
        %v4127 = vmul.f32 %v4123, 0.004464286
        %v4128 = vadd.f32 %v4124, 1e-05
        %v4129 = vadd.f32 %v4125, 1e-05
        %v4130 = vadd.f32 %v4126, 1e-05
        %v4131 = vadd.f32 %v4127, 1e-05
        %v4132 = vrsqrt.pop %v4128
        %v4133 = vrsqrt.pop %v4129
        %v4134 = vrsqrt.pop %v4130
        %v4135 = vrsqrt.pop %v4131
        %v4136 = vmul.f32 %v4096, %v4132
        %v4137 = vmul.f32 %v4097, %v4132
        %v4138 = vmul.f32 %v4098, %v4133
        %v4139 = vmul.f32 %v4099, %v4133
        %v4140 = vmul.f32 %v4100, %v4134
        %v4141 = vmul.f32 %v4101, %v4134
        %v4142 = vmul.f32 %v4102, %v4135
        %v4143 = vmul.f32 %v4103, %v4135
        %v4145 = vlaneseq
        %v4146 = vshrl.u32 %v4145, 7
        %v4147 = vsub.s32 0, %v4146
        %v4148 = vrot.slane %v4070, %v4147
        %v4149 = vlaneseq
        %v4150 = vshrl.u32 %v4149, 7
        %v4151 = vsub.s32 1, %v4150
        %v4152 = vrot.slane %v4070, %v4151
        %v4155 = vmul.f32 %v4136, %v4148
        %v4156 = vmul.f32 %v4137, %v4152
        %v4157 = vmul.f32 %v4138, %v4148
        %v4158 = vmul.f32 %v4139, %v4152
        %v4159 = vmul.f32 %v4140, %v4148
        %v4160 = vmul.f32 %v4141, %v4152
        %v4161 = vmul.f32 %v4142, %v4148
        %v4162 = vmul.f32 %v4143, %v4152
        %v4164 = vlaneseq
        %v4165 = vshrl.u32 %v4164, 7
        %v4166 = vsub.s32 0, %v4165
        %v4167 = vrot.slane %v4071, %v4166
        %v4168 = vlaneseq
        %v4169 = vshrl.u32 %v4168, 7
        %v4170 = vsub.s32 1, %v4169
        %v4171 = vrot.slane %v4071, %v4170
        %v4174 = vadd.f32 %v4155, %v4167
        %v4175 = vadd.f32 %v4156, %v4171
        %v4176 = vadd.f32 %v4157, %v4167
        %v4177 = vadd.f32 %v4158, %v4171
        %v4178 = vadd.f32 %v4159, %v4167
        %v4179 = vadd.f32 %v4160, %v4171
        %v4180 = vadd.f32 %v4161, %v4167
        %v4181 = vadd.f32 %v4162, %v4171
        %v4182 = vmul.f32 %v729, %v729
        %v4183 = vmul.f32 %v730, %v730
        %v4184 = vmul.f32 %v731, %v731
        %v4185 = vmul.f32 %v732, %v732
        %v4186 = vmul.f32 %v733, %v733
        %v4187 = vmul.f32 %v734, %v734
        %v4188 = vmul.f32 %v735, %v735
        %v4189 = vmul.f32 %v736, %v736
        %v4190 = vadd.f32 %v4182, %v4183
        %4191 = vadd.xlane.f32.xlu0 %v4190
        %v4192 = vpop.xlane.xlu0 %4191
        %v4193 = vadd.f32 %v4184, %v4185
        %4194 = vadd.xlane.f32.xlu0 %v4193
        %v4195 = vpop.xlane.xlu0 %4194
        %v4196 = vadd.f32 %v4186, %v4187
        %4197 = vadd.xlane.f32.xlu0 %v4196
        %v4198 = vpop.xlane.xlu0 %4197
        %v4199 = vadd.f32 %v4188, %v4189
        %4200 = vadd.xlane.f32.xlu0 %v4199
        %v4201 = vpop.xlane.xlu0 %4200
        %v4202 = vmax.f32 %v4192, 1e-24
        %v4203 = vmax.f32 %v4195, 1e-24
        %v4204 = vmax.f32 %v4198, 1e-24
        %v4205 = vmax.f32 %v4201, 1e-24
        %v4206 = vrsqrt.pop %v4202
        %v4207 = vrsqrt.pop %v4203
        %v4208 = vrsqrt.pop %v4204
        %v4209 = vrsqrt.pop %v4205
        %v4210 = vmul.f32 %v729, %v4206
        %v4211 = vmul.f32 %v730, %v4206
        %v4212 = vmul.f32 %v731, %v4207
        %v4213 = vmul.f32 %v732, %v4207
        %v4214 = vmul.f32 %v733, %v4208
        %v4215 = vmul.f32 %v734, %v4208
        %v4216 = vmul.f32 %v735, %v4209
        %v4217 = vmul.f32 %v736, %v4209
        %v4218 = vmul.f32 %v4174, %v4174
        %v4219 = vmul.f32 %v4175, %v4175
        %v4220 = vmul.f32 %v4176, %v4176
        %v4221 = vmul.f32 %v4177, %v4177
        %v4222 = vmul.f32 %v4178, %v4178
        %v4223 = vmul.f32 %v4179, %v4179
        %v4224 = vmul.f32 %v4180, %v4180
        %v4225 = vmul.f32 %v4181, %v4181
        %v4226 = vadd.f32 %v4218, %v4219
        %4227 = vadd.xlane.f32.xlu0 %v4226
        %v4228 = vpop.xlane.xlu0 %4227
        %v4229 = vadd.f32 %v4220, %v4221
        %4230 = vadd.xlane.f32.xlu0 %v4229
        %v4231 = vpop.xlane.xlu0 %4230
        %v4232 = vadd.f32 %v4222, %v4223
        %4233 = vadd.xlane.f32.xlu0 %v4232
        %v4234 = vpop.xlane.xlu0 %4233
        %v4235 = vadd.f32 %v4224, %v4225
        %4236 = vadd.xlane.f32.xlu0 %v4235
        %v4237 = vpop.xlane.xlu0 %4236
        %v4238 = vmax.f32 %v4228, 1e-24
        %v4239 = vmax.f32 %v4231, 1e-24
        %v4240 = vmax.f32 %v4234, 1e-24
        %v4241 = vmax.f32 %v4237, 1e-24
        %v4242 = vrsqrt.pop %v4238
        %v4243 = vrsqrt.pop %v4239
        %v4244 = vrsqrt.pop %v4240
        %v4245 = vrsqrt.pop %v4241
        %v4246 = vmul.f32 %v4174, %v4242
        %v4247 = vmul.f32 %v4175, %v4242
        %v4248 = vmul.f32 %v4176, %v4243
        %v4249 = vmul.f32 %v4177, %v4243
        %v4250 = vmul.f32 %v4178, %v4244
        %v4251 = vmul.f32 %v4179, %v4244
        %v4252 = vmul.f32 %v4180, %v4245
        %v4253 = vmul.f32 %v4181, %v4245
        %v4254 = vmul.f32 %v4210, %v4246
        %v4255 = vmul.f32 %v4211, %v4247
        %v4256 = vmul.f32 %v4212, %v4248
        %v4257 = vmul.f32 %v4213, %v4249
        %v4258 = vmul.f32 %v4214, %v4250
        %v4259 = vmul.f32 %v4215, %v4251
        %v4260 = vmul.f32 %v4216, %v4252
        %v4261 = vmul.f32 %v4217, %v4253
        %v4262 = vadd.f32 %v4254, %v4255
        %4263 = vadd.xlane.f32.xlu0 %v4262
        %v4264 = vpop.xlane.xlu0 %4263
        %v4265 = vadd.f32 %v4256, %v4257
        %4266 = vadd.xlane.f32.xlu0 %v4265
        %v4267 = vpop.xlane.xlu0 %4266
        %v4268 = vadd.f32 %v4258, %v4259
        %4269 = vadd.xlane.f32.xlu0 %v4268
        %v4270 = vpop.xlane.xlu0 %4269
        %v4271 = vadd.f32 %v4260, %v4261
        %4272 = vadd.xlane.f32.xlu0 %v4271
        %v4273 = vpop.xlane.xlu0 %4272
        %v4274 = vsub.f32 1.0, %v4264
        %v4275 = vsub.f32 1.0, %v4267
        %v4276 = vsub.f32 1.0, %v4270
        %v4277 = vsub.f32 1.0, %v4273
        %v4278 = vpack.c.bf16 %v4176, %v4174
        %v4279 = vpack.c.bf16 %v4177, %v4175
        %v4280 = vpack.c.bf16 %v4180, %v4178
        %v4281 = vpack.c.bf16 %v4181, %v4179
        %v4282 = vld [vmem:[#allocation9] sm:$0xff]
        %v4283 = vld [vmem:[#allocation9 + $0x8] sm:$0xff]
        %v4284 = vld [vmem:[#allocation9 + $0x10] sm:$0xff]
        %v4285 = vld [vmem:[#allocation9 + $0x18] sm:$0xff]
        %v4286 = vld [vmem:[#allocation9 + $0x20] sm:$0xff]
        %v4287 = vld [vmem:[#allocation9 + $0x28] sm:$0xff]
        %v4288 = vld [vmem:[#allocation9 + $0x30] sm:$0xff]
        %v4289 = vld [vmem:[#allocation9 + $0x38] sm:$0xff]
        %v4290 = vld [vmem:[#allocation9 + $0x40] sm:$0xff]
        %v4291 = vld [vmem:[#allocation9 + $0x48] sm:$0xff]
        %v4292 = vld [vmem:[#allocation9 + $0x50] sm:$0xff]
        %v4293 = vld [vmem:[#allocation9 + $0x58] sm:$0xff]
        %v4294 = vld [vmem:[#allocation9 + $0x60] sm:$0xff]
        %v4295 = vld [vmem:[#allocation9 + $0x68] sm:$0xff]
        %v4296 = vld [vmem:[#allocation9 + $0x70] sm:$0xff]
        %v4297 = vld [vmem:[#allocation9 + $0x78] sm:$0xff]
        %v4298 = vld [vmem:[#allocation9 + $0x80] sm:$0xff]
        %v4299 = vld [vmem:[#allocation9 + $0x88] sm:$0xff]
        %v4300 = vld [vmem:[#allocation9 + $0x90] sm:$0xff]
        %v4301 = vld [vmem:[#allocation9 + $0x98] sm:$0xff]
        %v4302 = vld [vmem:[#allocation9 + $0xa0] sm:$0xff]
        %v4303 = vld [vmem:[#allocation9 + $0xa8] sm:$0xff]
        %v4304 = vld [vmem:[#allocation9 + $0xb0] sm:$0xff]
        %v4305 = vld [vmem:[#allocation9 + $0xb8] sm:$0xff]
        %v4306 = vld [vmem:[#allocation9 + $0xc0] sm:$0xff]
        %v4307 = vld [vmem:[#allocation9 + $0xc8] sm:$0xff]
        %v4308 = vld [vmem:[#allocation9 + $0xd0] sm:$0xff]
        %v4309 = vld [vmem:[#allocation9 + $0xd8] sm:$0xff]
        %v4310 = vld [vmem:[#allocation9 + $0xe0] sm:$0xff]
        %v4311 = vld [vmem:[#allocation9 + $0xe8] sm:$0xff]
        %v4312 = vld [vmem:[#allocation9 + $0xf0] sm:$0xff]
        %v4313 = vld [vmem:[#allocation9 + $0xf8] sm:$0xff]
        %v4314 = vld [vmem:[%s18] sm:$0x3]
        %v4316 = vlaneseq
        %v4317 = vshrl.u32 %v4316, 7
        %v4318 = vsub.s32 0, %v4317
        %v4319 = vrot.slane %v4314, %v4318
        %v4320 = vlaneseq
        %v4321 = vshrl.u32 %v4320, 7
        %v4322 = vsub.s32 1, %v4321
        %v4323 = vrot.slane %v4314, %v4322
        %v4326 = vmul.f32 %v4274, %v4319
        %v4327 = vmul.f32 %v4274, %v4323
        %v4328 = vmul.f32 %v4275, %v4319
        %v4329 = vmul.f32 %v4275, %v4323
        %v4330 = vmul.f32 %v4276, %v4319
        %v4331 = vmul.f32 %v4276, %v4323
        %v4332 = vmul.f32 %v4277, %v4319
        %v4333 = vmul.f32 %v4277, %v4323
        %v4366 = vunpack.c.l.b16 %v4282
        %v4367 = vunpack.c.h.b16 %v4282
        %v4368 = vunpack.c.l.b16 %v4283
        %v4369 = vunpack.c.h.b16 %v4283
        %v4370 = vunpack.c.l.b16 %v4284
        %v4371 = vunpack.c.h.b16 %v4284
        %v4372 = vunpack.c.l.b16 %v4285
        %v4373 = vunpack.c.h.b16 %v4285
        %v4374 = vunpack.c.l.b16 %v4286
        %v4375 = vunpack.c.h.b16 %v4286
        %v4376 = vunpack.c.l.b16 %v4287
        %v4377 = vunpack.c.h.b16 %v4287
        %v4378 = vunpack.c.l.b16 %v4288
        %v4379 = vunpack.c.h.b16 %v4288
        %v4380 = vunpack.c.l.b16 %v4289
        %v4381 = vunpack.c.h.b16 %v4289
        %v4382 = vunpack.c.l.b16 %v4290
        %v4383 = vunpack.c.h.b16 %v4290
        %v4384 = vunpack.c.l.b16 %v4291
        %v4385 = vunpack.c.h.b16 %v4291
        %v4386 = vunpack.c.l.b16 %v4292
        %v4387 = vunpack.c.h.b16 %v4292
        %v4388 = vunpack.c.l.b16 %v4293
        %v4389 = vunpack.c.h.b16 %v4293
        %v4390 = vunpack.c.l.b16 %v4294
        %v4391 = vunpack.c.h.b16 %v4294
        %v4392 = vunpack.c.l.b16 %v4295
        %v4393 = vunpack.c.h.b16 %v4295
        %v4394 = vunpack.c.l.b16 %v4296
        %v4395 = vunpack.c.h.b16 %v4296
        %v4396 = vunpack.c.l.b16 %v4297
        %v4397 = vunpack.c.h.b16 %v4297
        %v4398 = vunpack.c.l.b16 %v4298
        %v4399 = vunpack.c.h.b16 %v4298
        %v4400 = vunpack.c.l.b16 %v4299
        %v4401 = vunpack.c.h.b16 %v4299
        %v4402 = vunpack.c.l.b16 %v4300
        %v4403 = vunpack.c.h.b16 %v4300
        %v4404 = vunpack.c.l.b16 %v4301
        %v4405 = vunpack.c.h.b16 %v4301
        %v4406 = vunpack.c.l.b16 %v4302
        %v4407 = vunpack.c.h.b16 %v4302
        %v4408 = vunpack.c.l.b16 %v4303
        %v4409 = vunpack.c.h.b16 %v4303
        %v4410 = vunpack.c.l.b16 %v4304
        %v4411 = vunpack.c.h.b16 %v4304
        %v4412 = vunpack.c.l.b16 %v4305
        %v4413 = vunpack.c.h.b16 %v4305
        %v4414 = vunpack.c.l.b16 %v4306
        %v4415 = vunpack.c.h.b16 %v4306
        %v4416 = vunpack.c.l.b16 %v4307
        %v4417 = vunpack.c.h.b16 %v4307
        %v4418 = vunpack.c.l.b16 %v4308
        %v4419 = vunpack.c.h.b16 %v4308
        %v4420 = vunpack.c.l.b16 %v4309
        %v4421 = vunpack.c.h.b16 %v4309
        %v4422 = vunpack.c.l.b16 %v4310
        %v4423 = vunpack.c.h.b16 %v4310
        %v4424 = vunpack.c.l.b16 %v4311
        %v4425 = vunpack.c.h.b16 %v4311
        %v4426 = vunpack.c.l.b16 %v4312
        %v4427 = vunpack.c.h.b16 %v4312
        %v4428 = vunpack.c.l.b16 %v4313
        %v4429 = vunpack.c.h.b16 %v4313
        %v4430 = vpack.c.b16 %v4368, %v4366
        %v4431 = vpack.c.b16 %v4369, %v4367
        %v4432 = vpack.c.b16 %v4372, %v4370
        %v4433 = vpack.c.b16 %v4373, %v4371
        %v4434 = vpack.c.b16 %v4376, %v4374
        %v4435 = vpack.c.b16 %v4377, %v4375
        %v4436 = vpack.c.b16 %v4380, %v4378
        %v4437 = vpack.c.b16 %v4381, %v4379
        %v4438 = vpack.c.b16 %v4384, %v4382
        %v4439 = vpack.c.b16 %v4385, %v4383
        %v4440 = vpack.c.b16 %v4388, %v4386
        %v4441 = vpack.c.b16 %v4389, %v4387
        %v4442 = vpack.c.b16 %v4392, %v4390
        %v4443 = vpack.c.b16 %v4393, %v4391
        %v4444 = vpack.c.b16 %v4396, %v4394
        %v4445 = vpack.c.b16 %v4397, %v4395
        %v4446 = vpack.c.b16 %v4400, %v4398
        %v4447 = vpack.c.b16 %v4401, %v4399
        %v4448 = vpack.c.b16 %v4404, %v4402
        %v4449 = vpack.c.b16 %v4405, %v4403
        %v4450 = vpack.c.b16 %v4408, %v4406
        %v4451 = vpack.c.b16 %v4409, %v4407
        %v4452 = vpack.c.b16 %v4412, %v4410
        %v4453 = vpack.c.b16 %v4413, %v4411
        %v4454 = vpack.c.b16 %v4416, %v4414
        %v4455 = vpack.c.b16 %v4417, %v4415
        %v4456 = vpack.c.b16 %v4420, %v4418
        %v4457 = vpack.c.b16 %v4421, %v4419
        %v4458 = vpack.c.b16 %v4424, %v4422
        %v4459 = vpack.c.b16 %v4425, %v4423
        %v4460 = vpack.c.b16 %v4428, %v4426
        %v4461 = vpack.c.b16 %v4429, %v4427
        %4494 = vmatprep.subr.bf16.mxu0 %v4431
        %4495 = vmatpush1.bf16.msra.mxu0 %v4430
        %4496 = vmatprep.subr.bf16.mxu0 %v4433
        %4497 = vmatpush1.bf16.msra.mxu0 %v4432
        %4498 = vmatprep.subr.bf16.mxu0 %v4435
        %4499 = vmatpush1.bf16.msra.mxu0 %v4434
        %4500 = vmatprep.subr.bf16.mxu0 %v4437
        %4501 = vmatpush1.bf16.msra.mxu0 %v4436
        %4502 = vmatprep.subr.bf16.mxu0 %v4439
        %4503 = vmatpush1.bf16.msra.mxu0 %v4438
        %4504 = vmatprep.subr.bf16.mxu0 %v4441
        %4505 = vmatpush1.bf16.msra.mxu0 %v4440
        %4506 = vmatprep.subr.bf16.mxu0 %v4443
        %4507 = vmatpush1.bf16.msra.mxu0 %v4442
        %4508 = vmatprep.subr.bf16.mxu0 %v4445
        %4509 = vmatpush1.bf16.msra.mxu0 %v4444
        %4510 = vmatprep.subr.bf16.mxu0 %v4447
        %4511 = vmatpush1.bf16.msra.mxu0 %v4446
        %4512 = vmatprep.subr.bf16.mxu0 %v4449
        %4513 = vmatpush1.bf16.msra.mxu0 %v4448
        %4514 = vmatprep.subr.bf16.mxu0 %v4451
        %4515 = vmatpush1.bf16.msra.mxu0 %v4450
        %4516 = vmatprep.subr.bf16.mxu0 %v4453
        %4517 = vmatpush1.bf16.msra.mxu0 %v4452
        %4518 = vmatprep.subr.bf16.mxu0 %v4455
        %4519 = vmatpush1.bf16.msra.mxu0 %v4454
        %4520 = vmatprep.subr.bf16.mxu0 %v4457
        %4521 = vmatpush1.bf16.msra.mxu0 %v4456
        %4522 = vmatprep.subr.bf16.mxu0 %v4459
        %4523 = vmatpush1.bf16.msra.mxu0 %v4458
        %4524 = vmatprep.subr.bf16.mxu0 %v4461
        %4525 = vmatpush1.bf16.msra.mxu0 %v4460
        %4526 = vmatprep.mubr.bf16.mxu0 %v4279
        %4527 = vmatmul.mubr.bf16.gmra.mrb[0].mxu0 %v4278
        %v4528 = vpop.f32.mrb[0].mxu0
        %v4529 = vadd.f32 %v4326, %v4528
        %v4530 = vpop.f32.mrb[0].mxu0
        %v4531 = vadd.f32 %v4327, %v4530
        %v4532 = vpop.f32.mrb[0].mxu0
        %v4533 = vadd.f32 %v4328, %v4532
        %v4534 = vpop.f32.mrb[0].mxu0
        %v4535 = vadd.f32 %v4329, %v4534
        %4536 = vmatprep.mubr.bf16.mxu0 %v4281
        %4537 = vmatmul.mubr.bf16.gmra.mrb[0].mxu0 %v4280
        %v4538 = vpop.f32.mrb[0].mxu0
        %v4539 = vadd.f32 %v4330, %v4538
        %v4540 = vpop.f32.mrb[0].mxu0
        %v4541 = vadd.f32 %v4331, %v4540
        %v4542 = vpop.f32.mrb[0].mxu0
        %v4543 = vadd.f32 %v4332, %v4542
        %v4544 = vpop.f32.mrb[0].mxu0
        %v4545 = vadd.f32 %v4333, %v4544
        %4546 = vdwg.mxu0
        %v4547 = vld [vmem:[%s19] sm:$0x3]
        %v4549 = vlaneseq
        %v4550 = vshrl.u32 %v4549, 7
        %v4551 = vsub.s32 0, %v4550
        %v4552 = vrot.slane %v4547, %v4551
        %v4553 = vlaneseq
        %v4554 = vshrl.u32 %v4553, 7
        %v4555 = vsub.s32 1, %v4554
        %v4556 = vrot.slane %v4547, %v4555
        %v4559 = vadd.f32 %v4529, %v4552
        %v4560 = vadd.f32 %v4531, %v4556
        %v4561 = vadd.f32 %v4533, %v4552
        %v4562 = vadd.f32 %v4535, %v4556
        %v4563 = vadd.f32 %v4539, %v4552
        %v4564 = vadd.f32 %v4541, %v4556
        %v4565 = vadd.f32 %v4543, %v4552
        %v4566 = vadd.f32 %v4545, %v4556
        %v4567 = vsub.f32 0.0, %v4559
        %v4568 = vsub.f32 0.0, %v4560
        %v4569 = vsub.f32 0.0, %v4561
        %v4570 = vsub.f32 0.0, %v4562
        %v4571 = vsub.f32 0.0, %v4563
        %v4572 = vsub.f32 0.0, %v4564
        %v4573 = vsub.f32 0.0, %v4565
        %v4574 = vsub.f32 0.0, %v4566
        %v4575 = vmul.f32 %v4567, 1.442695
        %v4576 = vpow.pop %v4575
        %v4577 = vmul.f32 %v4568, 1.442695
        %v4578 = vpow.pop %v4577
        %v4579 = vmul.f32 %v4569, 1.442695
        %v4580 = vpow.pop %v4579
        %v4581 = vmul.f32 %v4570, 1.442695
        %v4582 = vpow.pop %v4581
        %v4583 = vmul.f32 %v4571, 1.442695
        %v4584 = vpow.pop %v4583
        %v4585 = vmul.f32 %v4572, 1.442695
        %v4586 = vpow.pop %v4585
        %v4587 = vmul.f32 %v4573, 1.442695
        %v4588 = vpow.pop %v4587
        %v4589 = vmul.f32 %v4574, 1.442695
        %v4590 = vpow.pop %v4589
        %v4591 = vadd.f32 %v4576, 1.0
        %v4592 = vadd.f32 %v4578, 1.0
        %v4593 = vadd.f32 %v4580, 1.0
        %v4594 = vadd.f32 %v4582, 1.0
        %v4595 = vadd.f32 %v4584, 1.0
        %v4596 = vadd.f32 %v4586, 1.0
        %v4597 = vadd.f32 %v4588, 1.0
        %v4598 = vadd.f32 %v4590, 1.0
        %v4599 = vrcp.pop %v4591
        %v4600 = vmul.f32 1.0, %v4599
        %v4601 = vrcp.pop %v4592
        %v4602 = vmul.f32 1.0, %v4601
        %v4603 = vrcp.pop %v4593
        %v4604 = vmul.f32 1.0, %v4603
        %v4605 = vrcp.pop %v4594
        %v4606 = vmul.f32 1.0, %v4605
        %v4607 = vrcp.pop %v4595
        %v4608 = vmul.f32 1.0, %v4607
        %v4609 = vrcp.pop %v4596
        %v4610 = vmul.f32 1.0, %v4609
        %v4611 = vrcp.pop %v4597
        %v4612 = vmul.f32 1.0, %v4611
        %v4613 = vrcp.pop %v4598
        %v4614 = vmul.f32 1.0, %v4613
        %v4615 = vmul.f32 %v4174, %v4600
        %v4616 = vmul.f32 %v4175, %v4602
        %v4617 = vmul.f32 %v4176, %v4604
        %v4618 = vmul.f32 %v4177, %v4606
        %v4619 = vmul.f32 %v4178, %v4608
        %v4620 = vmul.f32 %v4179, %v4610
        %v4621 = vmul.f32 %v4180, %v4612
        %v4622 = vmul.f32 %v4181, %v4614
        %v4623 = vadd.f32 %v4615, %v4174
        %v4624 = vadd.f32 %v4616, %v4175
        %v4625 = vadd.f32 %v4617, %v4176
        %v4626 = vadd.f32 %v4618, %v4177
        %v4627 = vadd.f32 %v4619, %v4178
        %v4628 = vadd.f32 %v4620, %v4179
        %v4629 = vadd.f32 %v4621, %v4180
        %v4630 = vadd.f32 %v4622, %v4181
        %4631 = vst [vmem:[#allocation2] sm:$0xff] %v4623
        %4632 = vst [vmem:[#allocation2 + $0x8] sm:$0xff] %v4624
        %4633 = vst [vmem:[#allocation2 + $0x10] sm:$0xff] %v4625
        %4634 = vst [vmem:[#allocation2 + $0x18] sm:$0xff] %v4626
        %4635 = vst [vmem:[#allocation2 + $0x20] sm:$0xff] %v4627
        %4636 = vst [vmem:[#allocation2 + $0x28] sm:$0xff] %v4628
        %4637 = vst [vmem:[#allocation2 + $0x30] sm:$0xff] %v4629
        %4638 = vst [vmem:[#allocation2 + $0x38] sm:$0xff] %v4630
        %p4639 = scmp.eq.s32.totalorder %s36, 1
        // Predicated region
        $region129: #{transformer_encoder_forward.1} parent=107 // pred_check
          %p4640 = pneg %p4639
        $region130: #{transformer_encoder_forward.1} parent=107 // pred_check_branch
          %4642 = sbr.rel (%p4640) target = $region132
        $region131: #{transformer_encoder_forward.1} parent=107 // pred_region
          %v4643 = vld [vmem:[%s20] sm:$0x3]
          %v4644 = vld [vmem:[%s21] sm:$0x3]
          %v4645 = vadd.f32 %v4623, %v4624
          %4646 = vadd.xlane.f32.xlu0 %v4645
          %v4647 = vpop.xlane.xlu0 %4646
          %v4648 = vadd.f32 %v4625, %v4626
          %4649 = vadd.xlane.f32.xlu0 %v4648
          %v4650 = vpop.xlane.xlu0 %4649
          %v4651 = vadd.f32 %v4627, %v4628
          %4652 = vadd.xlane.f32.xlu0 %v4651
          %v4653 = vpop.xlane.xlu0 %4652
          %v4654 = vadd.f32 %v4629, %v4630
          %4655 = vadd.xlane.f32.xlu0 %v4654
          %v4656 = vpop.xlane.xlu0 %4655
          %v4657 = vmul.f32 %v4647, 0.004464286
          %v4658 = vmul.f32 %v4650, 0.004464286
          %v4659 = vmul.f32 %v4653, 0.004464286
          %v4660 = vmul.f32 %v4656, 0.004464286
          %v4661 = vsub.f32 %v4623, %v4657
          %v4662 = vsub.f32 %v4624, %v4657
          %v4663 = vsub.f32 %v4625, %v4658
          %v4664 = vsub.f32 %v4626, %v4658
          %v4665 = vsub.f32 %v4627, %v4659
          %v4666 = vsub.f32 %v4628, %v4659
          %v4667 = vsub.f32 %v4629, %v4660
          %v4668 = vsub.f32 %v4630, %v4660
          %v4669 = vmul.f32 %v4661, %v752
          %v4670 = vmul.f32 %v4662, %v753
          %v4671 = vmul.f32 %v4663, %v752
          %v4672 = vmul.f32 %v4664, %v753
          %v4673 = vmul.f32 %v4665, %v752
          %v4674 = vmul.f32 %v4666, %v753
          %v4675 = vmul.f32 %v4667, %v752
          %v4676 = vmul.f32 %v4668, %v753
          %v4677 = vmul.f32 %v4669, %v4669
          %v4678 = vmul.f32 %v4670, %v4670
          %v4679 = vmul.f32 %v4671, %v4671
          %v4680 = vmul.f32 %v4672, %v4672
          %v4681 = vmul.f32 %v4673, %v4673
          %v4682 = vmul.f32 %v4674, %v4674
          %v4683 = vmul.f32 %v4675, %v4675
          %v4684 = vmul.f32 %v4676, %v4676
          %v4685 = vadd.f32 %v4677, %v4678
          %4686 = vadd.xlane.f32.xlu0 %v4685
          %v4687 = vpop.xlane.xlu0 %4686
          %v4688 = vadd.f32 %v4679, %v4680
          %4689 = vadd.xlane.f32.xlu0 %v4688
          %v4690 = vpop.xlane.xlu0 %4689
          %v4691 = vadd.f32 %v4681, %v4682
          %4692 = vadd.xlane.f32.xlu0 %v4691
          %v4693 = vpop.xlane.xlu0 %4692
          %v4694 = vadd.f32 %v4683, %v4684
          %4695 = vadd.xlane.f32.xlu0 %v4694
          %v4696 = vpop.xlane.xlu0 %4695
          %v4697 = vmul.f32 %v4687, 0.004464286
          %v4698 = vmul.f32 %v4690, 0.004464286
          %v4699 = vmul.f32 %v4693, 0.004464286
          %v4700 = vmul.f32 %v4696, 0.004464286
          %v4701 = vadd.f32 %v4697, 1e-05
          %v4702 = vadd.f32 %v4698, 1e-05
          %v4703 = vadd.f32 %v4699, 1e-05
          %v4704 = vadd.f32 %v4700, 1e-05
          %v4705 = vrsqrt.pop %v4701
          %v4706 = vrsqrt.pop %v4702
          %v4707 = vrsqrt.pop %v4703
          %v4708 = vrsqrt.pop %v4704
          %v4709 = vmul.f32 %v4669, %v4705
          %v4710 = vmul.f32 %v4670, %v4705
          %v4711 = vmul.f32 %v4671, %v4706
          %v4712 = vmul.f32 %v4672, %v4706
          %v4713 = vmul.f32 %v4673, %v4707
          %v4714 = vmul.f32 %v4674, %v4707
          %v4715 = vmul.f32 %v4675, %v4708
          %v4716 = vmul.f32 %v4676, %v4708
          %v4718 = vlaneseq
          %v4719 = vshrl.u32 %v4718, 7
          %v4720 = vsub.s32 0, %v4719
          %v4721 = vrot.slane %v4643, %v4720
          %v4722 = vlaneseq
          %v4723 = vshrl.u32 %v4722, 7
          %v4724 = vsub.s32 1, %v4723
          %v4725 = vrot.slane %v4643, %v4724
          %v4728 = vmul.f32 %v4709, %v4721
          %v4729 = vmul.f32 %v4710, %v4725
          %v4730 = vmul.f32 %v4711, %v4721
          %v4731 = vmul.f32 %v4712, %v4725
          %v4732 = vmul.f32 %v4713, %v4721
          %v4733 = vmul.f32 %v4714, %v4725
          %v4734 = vmul.f32 %v4715, %v4721
          %v4735 = vmul.f32 %v4716, %v4725
          %v4737 = vlaneseq
          %v4738 = vshrl.u32 %v4737, 7
          %v4739 = vsub.s32 0, %v4738
          %v4740 = vrot.slane %v4644, %v4739
          %v4741 = vlaneseq
          %v4742 = vshrl.u32 %v4741, 7
          %v4743 = vsub.s32 1, %v4742
          %v4744 = vrot.slane %v4644, %v4743
          %v4747 = vadd.f32 %v4728, %v4740
          %v4748 = vadd.f32 %v4729, %v4744
          %v4749 = vadd.f32 %v4730, %v4740
          %v4750 = vadd.f32 %v4731, %v4744
          %v4751 = vadd.f32 %v4732, %v4740
          %v4752 = vadd.f32 %v4733, %v4744
          %v4753 = vadd.f32 %v4734, %v4740
          %v4754 = vadd.f32 %v4735, %v4744
          %4755 = vst [vmem:[%s22] sm:$0xff] %v4747
          %4756 = vst [vmem:[%s22 + $0x8] sm:$0xff] %v4748
          %4757 = vst [vmem:[%s22 + $0x10] sm:$0xff] %v4749
          %4758 = vst [vmem:[%s22 + $0x18] sm:$0xff] %v4750
          %4759 = vst [vmem:[%s22 + $0x20] sm:$0xff] %v4751
          %4760 = vst [vmem:[%s22 + $0x28] sm:$0xff] %v4752
          %4761 = vst [vmem:[%s22 + $0x30] sm:$0xff] %v4753
          %4762 = vst [vmem:[%s22 + $0x38] sm:$0xff] %v4754
        $region132: #{transformer_encoder_forward.1} parent=107 // pred_fallthru
          _
        // Predicated region
        $region133: #{transformer_encoder_forward.1} parent=107 // pred_check
          %p4763 = pneg %p511
        $region134: #{transformer_encoder_forward.1} parent=107 // pred_check_branch
          %4765 = sbr.rel (%p4763) target = $region136
        $region135: #{transformer_encoder_forward.1} parent=107 // pred_region
          _
        $region136: #{transformer_encoder_forward.1} parent=107 // pred_fallthru
          _
        // Predicated region
        $region137: #{transformer_encoder_forward.1} parent=107 // pred_check
          %p4766 = pneg %p511
        $region138: #{transformer_encoder_forward.1} parent=107 // pred_check_branch
          %4768 = sbr.rel (%p4766) target = $region140
        $region139: #{transformer_encoder_forward.1} parent=107 // pred_region
          _
        $region140: #{transformer_encoder_forward.1} parent=107 // pred_fallthru
          _
      $region108: #{transformer_encoder_forward.1} parent=5 // pred_fallthru
        _
      %p4769 = scmp.le.s32.totalorder 2, %s31
      // Predicated region
      $region141: #{transformer_encoder_forward.1} parent=5 // pred_check
        %p4770 = pneg %p4769
      $region142: #{transformer_encoder_forward.1} parent=5 // pred_check_branch
        %4772 = sbr.rel (%p4770) target = $region144
      $region143: #{transformer_encoder_forward.1} parent=5 // pred_region
        %s4773 = ssub.s32 %s31, 2
      $region144: #{transformer_encoder_forward.1} parent=5 // pred_fallthru
        _
    $region6: #{transformer_encoder_forward.1} parent=1 // loop_footer
      %s35 = sadd.s32 1, %s31
    $region7: #{transformer_encoder_forward.1} parent=1 // loop_footer_branch
      %30 = sbr.rel target = $region3
    $region8: #{transformer_encoder_forward.1} parent=1 // loop_exit
      _
    %4774 = vsyncpa [#allocation5], 1
    %s4775 = scalar_lea.sflag [#allocation5], 1
    %4776 = vsyncpa %s4775, 1
    %4777 = vsyncpa [#allocation7], 1
    %4778 = vsyncpa [#allocation10], 1

</llo_original>
